<compile_context>
chip_gen: v5e
topology: v5e:2x2
jax: 0.10.0
libtpu: 0.0.40
codegen_flags: <defaults>
</compile_context>

<pallas_src>
import jax
import jax.numpy as jnp
import numpy as np
from jax.experimental import pallas as pl
from jax.experimental.pallas import tpu as pltpu

HIDDEN = 32       # hidden_channels
VOCAB = 16        # output_channels
MAX_LENGTH = 10   # max_length


def _attn_decoder_fused_kernel(
    # inputs (tokens in SMEM; everything else VMEM-resident for the whole loop)
    tok_ref,
    hid0_ref, enc_ref, emb_ref,
    attn_w_ref, attn_b_ref,
    comb_w_ref, comb_b_ref,
    gru_w_ref, gru_b_ref,
    out_w_ref, out_b_ref,
    # outputs (written once; row-wise inside the loop)
    logp_ref, newh_ref, attnw_ref,
):
    H = hid0_ref.shape[1]
    V = emb_ref.shape[0]
    T = logp_ref.shape[0]
    GP = gru_b_ref.shape[1] // 2     # 128-lane-aligned gate-block width

    def step(t, hid):
        # --- embedding gather: dynamic row slice from the resident table ----
        tok = jnp.minimum(jnp.maximum(tok_ref[t], 0), V - 1)      # scalar clamp
        emb = emb_ref[pl.ds(tok, 1), :]                           # (1, H)
        # TODO(synk): nn.Dropout is identity here (inference semantics);
        # training parity would need pltpu.prng_seed / prng_random_bits masking.

        # --- attn(cat(embedded, hidden)) -> softmax over max_length ---------
        cat_eh = jnp.concatenate([emb, hid], axis=1)              # (1, 2H)
        logits = (jnp.dot(cat_eh, attn_w_ref[...],
                          preferred_element_type=jnp.float32)
                  + attn_b_ref[...])                              # (1, L)
        m = jnp.max(logits, axis=1, keepdims=True)
        e = jnp.exp(logits - m)
        attn_w = e * pl.reciprocal(jnp.sum(e, axis=1, keepdims=True),
                                   approx=False)                  # exact softmax
        attnw_ref[pl.ds(t, 1), :] = attn_w

        # --- bmm(attn_weights, encoder_outputs) ------------------------------
        applied = jnp.dot(attn_w, enc_ref[...],
                          preferred_element_type=jnp.float32)     # (1, H)

        # --- relu(attn_combine(cat(embedded, attn_applied))) -----------------
        cat_ea = jnp.concatenate([emb, applied], axis=1)          # (1, 2H)
        x = jnp.maximum(
            jnp.dot(cat_ea, comb_w_ref[...],
                    preferred_element_type=jnp.float32) + comb_b_ref[...], 0.0)

        # --- single GRU cell: one block-diagonal matmul, lane-aligned gates --
        cat_xh = jnp.concatenate([x, hid], axis=1)                # (1, 2H)
        gates = (jnp.dot(cat_xh, gru_w_ref[...],
                         preferred_element_type=jnp.float32)
                 + gru_b_ref[...])                                # (1, 2*GP)
        gi = gates[:, 0:3 * H]            # lanes 0..3H-1 of group 0
        gh = gates[:, GP:GP + 3 * H]      # lanes 0..3H-1 of group 1 (aligned)
        rz = jax.nn.sigmoid(gi[:, 0:2 * H] + gh[:, 0:2 * H])      # fused r|z
        r = rz[:, 0:H]
        z = rz[:, H:2 * H]
        n = jnp.tanh(gi[:, 2 * H:3 * H] + r * gh[:, 2 * H:3 * H])
        newh = (1.0 - z) * n + z * hid                            # (1, H)

        # --- log_softmax(out(newh), dim=1) -----------------------------------
        o = (jnp.dot(newh, out_w_ref[...],
                     preferred_element_type=jnp.float32) + out_b_ref[...])
        mo = jnp.max(o, axis=1, keepdims=True)
        lse = jnp.log(jnp.sum(jnp.exp(o - mo), axis=1, keepdims=True))
        logp_ref[pl.ds(t, 1), :] = (o - mo) - lse
        return newh

    # Hidden state carried in vregs across the fully-unrolled loop.
    h_final = jax.lax.fori_loop(0, T, step, hid0_ref[...], unroll=True)
    newh_ref[...] = h_final


def init_params(key, hidden=HIDDEN, vocab=VOCAB, max_length=MAX_LENGTH):
    """Deterministic parameters with the same shapes as the nn.Module."""
    ks = jax.random.split(key, 12)
    u = lambda k, shape, bound: jax.random.uniform(
        k, shape, jnp.float32, minval=-bound, maxval=bound)
    b_attn = 1.0 / jnp.sqrt(2.0 * hidden)
    b_gru = 1.0 / jnp.sqrt(float(hidden))
    return {
        "embedding": jax.random.normal(ks[0], (vocab, hidden), jnp.float32),
        # nn.Linear(2H, L)
        "attn_w": u(ks[1], (max_length, 2 * hidden), b_attn),
        "attn_b": u(ks[2], (max_length,), b_attn),
        # nn.Linear(2H, H)
        "comb_w": u(ks[3], (hidden, 2 * hidden), b_attn),
        "comb_b": u(ks[4], (hidden,), b_attn),
        # nn.GRU(H, H)
        "gru_wih": u(ks[5], (3 * hidden, hidden), b_gru),
        "gru_whh": u(ks[6], (3 * hidden, hidden), b_gru),
        "gru_bih": u(ks[7], (3 * hidden,), b_gru),
        "gru_bhh": u(ks[8], (3 * hidden,), b_gru),
        # nn.Linear(H, V)
        "out_w": u(ks[9], (vocab, hidden), b_gru),
        "out_b": u(ks[10], (vocab,), b_gru),
    }


def pack_params(params):
    """One-time repack of PyTorch-shaped params into kernel-ready operands."""
    H = params["embedding"].shape[1]
    L = params["attn_w"].shape[0]
    V = params["out_w"].shape[0]
    # 128-lane-aligned gate blocks: [ W_ih^T | 0 ] rows 0..H-1,
    #                               [ 0 | W_hh^T ] rows H..2H-1.
    gpad = ((3 * H + 127) // 128) * 128
    gru_w = jnp.zeros((2 * H, 2 * gpad), jnp.float32)
    gru_w = gru_w.at[:H, :3 * H].set(params["gru_wih"].T)
    gru_w = gru_w.at[H:, gpad:gpad + 3 * H].set(params["gru_whh"].T)
    gru_b = jnp.zeros((1, 2 * gpad), jnp.float32)
    gru_b = gru_b.at[0, :3 * H].set(params["gru_bih"])
    gru_b = gru_b.at[0, gpad:gpad + 3 * H].set(params["gru_bhh"])
    return {
        "emb": params["embedding"],                                # (V, H)
        "attn_w": params["attn_w"].T,                              # (2H, L)
        "attn_b": params["attn_b"].reshape(1, L),
        "comb_w": params["comb_w"].T,                              # (2H, H)
        "comb_b": params["comb_b"].reshape(1, H),
        "gru_w": gru_w,                                            # (2H, 2*gpad)
        "gru_b": gru_b,                                            # (1, 2*gpad)
        "out_w": params["out_w"].T,                                # (H, V)
        "out_b": params["out_b"].reshape(1, V),
    }


def _attn_decoder_decode(packed, tokens, hidden0, encoder_outputs):
    """Fused T-step teacher-forced decode: ONE pallas_call, no grid."""
    V, H = packed["emb"].shape
    L = encoder_outputs.shape[0]
    T = tokens.shape[0]
    hid0 = hidden0.reshape(1, H)
    tokens = tokens.astype(jnp.int32)

    smem = pl.BlockSpec(memory_space=pltpu.MemorySpace.SMEM)
    vmem = pl.BlockSpec(memory_space=pltpu.MemorySpace.VMEM)

    logp, newh, attn = pl.pallas_call(
        _attn_decoder_fused_kernel,
        out_shape=(
            jax.ShapeDtypeStruct((T, V), jnp.float32),   # log-probs per step
            jax.ShapeDtypeStruct((1, H), jnp.float32),   # final hidden
            jax.ShapeDtypeStruct((T, L), jnp.float32),   # attn weights per step
        ),
        in_specs=[smem] + [vmem] * 11,
        out_specs=(vmem, vmem, vmem),
    )(tokens, hid0, encoder_outputs, packed["emb"],
      packed["attn_w"], packed["attn_b"],
      packed["comb_w"], packed["comb_b"],
      packed["gru_w"], packed["gru_b"],
      packed["out_w"], packed["out_b"])

    return logp, newh.reshape(1, 1, H), attn


attn_decoder_decode = jax.jit(_attn_decoder_decode)


def attn_decoder_forward(packed, token, hidden, encoder_outputs):
    """Single-step call with the original module signature."""
    tokens = jnp.asarray(token, jnp.int32).reshape(-1)[:1]
    logp, newh, attn = attn_decoder_decode(packed, tokens, hidden, encoder_outputs)
    return logp, newh, attn   # (1,V), (1,1,H), (1,L)


def reference_decode(params, tokens, hidden0, encoder_outputs):
    """Pure-JAX reference matching the PyTorch module step-by-step."""
    H = hidden0.shape[-1]
    h = hidden0.reshape(1, H)
    logps, attns = [], []
    for i in range(int(tokens.shape[0])):
        tok = tokens[i]
        emb = params["embedding"][tok].reshape(1, H)
        cat_eh = jnp.concatenate([emb, h], axis=1)
        attn_w = jax.nn.softmax(cat_eh @ params["attn_w"].T + params["attn_b"], axis=1)
        applied = attn_w @ encoder_outputs
        cat_ea = jnp.concatenate([emb, applied], axis=1)
        x = jax.nn.relu(cat_ea @ params["comb_w"].T + params["comb_b"])
        gi = x @ params["gru_wih"].T + params["gru_bih"]
        gh = h @ params["gru_whh"].T + params["gru_bhh"]
        r = jax.nn.sigmoid(gi[:, :H] + gh[:, :H])
        z = jax.nn.sigmoid(gi[:, H:2 * H] + gh[:, H:2 * H])
        n = jnp.tanh(gi[:, 2 * H:] + r * gh[:, 2 * H:])
        h = (1.0 - z) * n + z * h
        logps.append(jax.nn.log_softmax(h @ params["out_w"].T + params["out_b"], axis=1)[0])
        attns.append(attn_w[0])
    return jnp.stack(logps), h.reshape(1, 1, H), jnp.stack(attns)


if __name__ == "__main__":
    key = jax.random.PRNGKey(0)
    k_param, k_hid, k_enc, k_tok = jax.random.split(key, 4)

    params = init_params(k_param)
    packed = pack_params(params)

    T = 8
    tokens = jax.random.randint(k_tok, (T,), 0, VOCAB, dtype=jnp.int32)
    hidden0 = jax.random.normal(k_hid, (1, 1, HIDDEN), jnp.float32)
    encoder_outputs = jax.random.normal(k_enc, (MAX_LENGTH, HIDDEN), jnp.float32)

    # Fused multi-step decode (single pallas_call, single kernel invocation).
    logp, h_final, attn_w = attn_decoder_decode(packed, tokens, hidden0, encoder_outputs)
    jax.block_until_ready((logp, h_final, attn_w))

    assert logp.shape == (T, VOCAB)
    assert h_final.shape == (1, 1, HIDDEN)
    assert attn_w.shape == (T, MAX_LENGTH)

    # Correctness vs. pure-JAX reference of the PyTorch forward.
    ref_logp, ref_h, ref_attn = reference_decode(params, tokens, hidden0, encoder_outputs)
    assert np.allclose(np.asarray(logp), np.asarray(ref_logp), rtol=2e-2, atol=2e-2)
    assert np.allclose(np.asarray(h_final), np.asarray(ref_h), rtol=2e-2, atol=2e-2)
    assert np.allclose(np.asarray(attn_w), np.asarray(ref_attn), rtol=2e-2, atol=2e-2)

    # Single-step call with the original module signature.
    token = jnp.array([[3]], dtype=jnp.int32)
    lp1, h1, aw1 = attn_decoder_forward(packed, token, hidden0, encoder_outputs)
    jax.block_until_ready((lp1, h1, aw1))
    assert lp1.shape == (1, VOCAB)
    assert h1.shape == (1, 1, HIDDEN)
    assert aw1.shape == (1, MAX_LENGTH)

    print("KERNEL_OK")
</pallas_src>

<mosaic_0001>
module attributes {stable_mosaic.version = 11 : i64} {
  func.func @_attn_decoder_fused_kernel(%arg0: memref<8xi32, #tpu.memory_space<smem>>, %arg1: memref<1x32xf32, #tpu.memory_space<vmem>>, %arg2: memref<10x32xf32, #tpu.memory_space<vmem>>, %arg3: memref<16x32xf32, #tpu.memory_space<vmem>>, %arg4: memref<64x10xf32, #tpu.memory_space<vmem>>, %arg5: memref<1x10xf32, #tpu.memory_space<vmem>>, %arg6: memref<64x32xf32, #tpu.memory_space<vmem>>, %arg7: memref<1x32xf32, #tpu.memory_space<vmem>>, %arg8: memref<64x256xf32, #tpu.memory_space<vmem>>, %arg9: memref<1x256xf32, #tpu.memory_space<vmem>>, %arg10: memref<32x16xf32, #tpu.memory_space<vmem>>, %arg11: memref<1x16xf32, #tpu.memory_space<vmem>>, %arg12: memref<8x16xf32, #tpu.memory_space<vmem>>, %arg13: memref<1x32xf32, #tpu.memory_space<vmem>>, %arg14: memref<8x10xf32, #tpu.memory_space<vmem>>) attributes {dimension_semantics = [], scalar_prefetch = 0 : i64, scratch_operands = 0 : i64, tpu.core_type = #tpu.core_type<tc>} {
    %c0 = arith.constant 0 : index
    %c0_0 = arith.constant 0 : index
    %0 = vector.load %arg1[%c0, %c0_0] : memref<1x32xf32, #tpu.memory_space<vmem>>, vector<1x32xf32>
    %c0_i32 = arith.constant 0 : i32
    %1 = arith.index_cast %c0_i32 : i32 to index
    %2 = memref.load %arg0[%1] : memref<8xi32, #tpu.memory_space<smem>>
    %c0_i32_1 = arith.constant 0 : i32
    %3 = arith.maxsi %2, %c0_i32_1 : i32
    %c15_i32 = arith.constant 15 : i32
    %4 = arith.minsi %3, %c15_i32 : i32
    %5 = arith.index_cast %4 : i32 to index
    %c0_2 = arith.constant 0 : index
    %6 = vector.load %arg3[%5, %c0_2] : memref<16x32xf32, #tpu.memory_space<vmem>>, vector<1x32xf32>
    %7 = tpu.concatenate %6, %0 in 1 : vector<1x32xf32>, vector<1x32xf32> -> vector<1x64xf32>
    %c0_3 = arith.constant 0 : index
    %c0_4 = arith.constant 0 : index
    %8 = vector.load %arg4[%c0_3, %c0_4] : memref<64x10xf32, #tpu.memory_space<vmem>>, vector<64x10xf32>
    %cst = arith.constant dense<0.000000e+00> : vector<1x10xf32>
    %9 = tpu.matmul %7, %8, %cst {dimension_numbers = #tpu.dot_dimension_numbers<[1], [0], [0], [1], [0, 0, 1, 1], [], []>} : vector<1x64xf32>, vector<64x10xf32>, vector<1x10xf32> -> vector<1x10xf32>
    %c0_5 = arith.constant 0 : index
    %c0_6 = arith.constant 0 : index
    %10 = vector.load %arg5[%c0_5, %c0_6] : memref<1x10xf32, #tpu.memory_space<vmem>>, vector<1x10xf32>
    %11 = arith.addf %9, %10 : vector<1x10xf32>
    %cst_7 = arith.constant dense<0xFF800000> : vector<1xf32>
    %12 = vector.multi_reduction <maximumf>, %11, %cst_7 [1] : vector<1x10xf32> to vector<1xf32>
    %13 = vector.shape_cast %12 : vector<1xf32> to vector<1x1xf32>
    %14 = vector.broadcast %13 : vector<1x1xf32> to vector<1x10xf32>
    %15 = arith.subf %11, %14 : vector<1x10xf32>
    %16 = math.exp %15 : vector<1x10xf32>
    %cst_8 = arith.constant dense<0.000000e+00> : vector<1xf32>
    %17 = vector.multi_reduction <add>, %16, %cst_8 [1] : vector<1x10xf32> to vector<1xf32>
    %18 = vector.shape_cast %17 : vector<1xf32> to vector<1x1xf32>
    %19 = tpu.reciprocal %18 : vector<1x1xf32> -> vector<1x1xf32>
    %20 = vector.broadcast %19 : vector<1x1xf32> to vector<1x10xf32>
    %21 = arith.mulf %16, %20 : vector<1x10xf32>
    %22 = arith.index_cast %c0_i32 : i32 to index
    %c0_9 = arith.constant 0 : index
    %23 = vector.load %arg14[%22, %c0_9] : memref<8x10xf32, #tpu.memory_space<vmem>>, vector<1x10xf32>
    tpu.vector_store %arg14[%22, %c0_9], %21 {strides = array<i32>} : memref<8x10xf32, #tpu.memory_space<vmem>>, vector<1x10xf32>,
    %c0_10 = arith.constant 0 : index
    %c0_11 = arith.constant 0 : index
    %24 = vector.load %arg2[%c0_10, %c0_11] : memref<10x32xf32, #tpu.memory_space<vmem>>, vector<10x32xf32>
    %cst_12 = arith.constant dense<0.000000e+00> : vector<1x32xf32>
    %25 = tpu.matmul %21, %24, %cst_12 {dimension_numbers = #tpu.dot_dimension_numbers<[1], [0], [0], [1], [0, 0, 1, 1], [], []>} : vector<1x10xf32>, vector<10x32xf32>, vector<1x32xf32> -> vector<1x32xf32>
    %26 = tpu.concatenate %6, %25 in 1 : vector<1x32xf32>, vector<1x32xf32> -> vector<1x64xf32>
    %c0_13 = arith.constant 0 : index
    %c0_14 = arith.constant 0 : index
    %27 = vector.load %arg6[%c0_13, %c0_14] : memref<64x32xf32, #tpu.memory_space<vmem>>, vector<64x32xf32>
    %cst_15 = arith.constant dense<0.000000e+00> : vector<1x32xf32>
    %28 = tpu.matmul %26, %27, %cst_15 {dimension_numbers = #tpu.dot_dimension_numbers<[1], [0], [0], [1], [0, 0, 1, 1], [], []>} : vector<1x64xf32>, vector<64x32xf32>, vector<1x32xf32> -> vector<1x32xf32>
    %c0_16 = arith.constant 0 : index
    %c0_17 = arith.constant 0 : index
    %29 = vector.load %arg7[%c0_16, %c0_17] : memref<1x32xf32, #tpu.memory_space<vmem>>, vector<1x32xf32>
    %30 = arith.addf %28, %29 : vector<1x32xf32>
    %cst_18 = arith.constant 0.000000e+00 : f32
    %31 = vector.broadcast %cst_18 : f32 to vector<1x32xf32>
    %32 = arith.maximumf %30, %31 : vector<1x32xf32>
    %33 = tpu.concatenate %32, %0 in 1 : vector<1x32xf32>, vector<1x32xf32> -> vector<1x64xf32>
    %c0_19 = arith.constant 0 : index
    %c0_20 = arith.constant 0 : index
    %34 = vector.load %arg8[%c0_19, %c0_20] : memref<64x256xf32, #tpu.memory_space<vmem>>, vector<64x256xf32>
    %cst_21 = arith.constant dense<0.000000e+00> : vector<1x256xf32>
    %35 = tpu.matmul %33, %34, %cst_21 {dimension_numbers = #tpu.dot_dimension_numbers<[1], [0], [0], [1], [0, 0, 1, 1], [], []>} : vector<1x64xf32>, vector<64x256xf32>, vector<1x256xf32> -> vector<1x256xf32>
    %c0_22 = arith.constant 0 : index
    %c0_23 = arith.constant 0 : index
    %36 = vector.load %arg9[%c0_22, %c0_23] : memref<1x256xf32, #tpu.memory_space<vmem>>, vector<1x256xf32>
    %37 = arith.addf %35, %36 : vector<1x256xf32>
    %38 = vector.extract_strided_slice %37 {offsets = [0, 0], sizes = [1, 96], strides = [1, 1]} : vector<1x256xf32> to vector<1x96xf32>
    %39 = vector.extract_strided_slice %37 {offsets = [0, 128], sizes = [1, 96], strides = [1, 1]} : vector<1x256xf32> to vector<1x96xf32>
    %40 = vector.extract_strided_slice %38 {offsets = [0, 0], sizes = [1, 64], strides = [1, 1]} : vector<1x96xf32> to vector<1x64xf32>
    %41 = vector.extract_strided_slice %39 {offsets = [0, 0], sizes = [1, 64], strides = [1, 1]} : vector<1x96xf32> to vector<1x64xf32>
    %42 = arith.addf %40, %41 : vector<1x64xf32>
    %43 = arith.negf %42 : vector<1x64xf32>
    %44 = math.exp %43 : vector<1x64xf32>
    %cst_24 = arith.constant 1.000000e+00 : f32
    %45 = vector.broadcast %cst_24 : f32 to vector<1x64xf32>
    %46 = arith.addf %45, %44 : vector<1x64xf32>
    %47 = arith.divf %45, %46 : vector<1x64xf32>
    %48 = vector.extract_strided_slice %47 {offsets = [0, 0], sizes = [1, 32], strides = [1, 1]} : vector<1x64xf32> to vector<1x32xf32>
    %49 = vector.extract_strided_slice %47 {offsets = [0, 32], sizes = [1, 32], strides = [1, 1]} : vector<1x64xf32> to vector<1x32xf32>
    %50 = vector.extract_strided_slice %38 {offsets = [0, 64], sizes = [1, 32], strides = [1, 1]} : vector<1x96xf32> to vector<1x32xf32>
    %51 = vector.extract_strided_slice %39 {offsets = [0, 64], sizes = [1, 32], strides = [1, 1]} : vector<1x96xf32> to vector<1x32xf32>
    %52 = arith.mulf %48, %51 : vector<1x32xf32>
    %53 = arith.addf %50, %52 : vector<1x32xf32>
    %54 = math.tanh %53 : vector<1x32xf32>
    %cst_25 = arith.constant 1.000000e+00 : f32
    %55 = vector.broadcast %cst_25 : f32 to vector<1x32xf32>
    %56 = arith.subf %55, %49 : vector<1x32xf32>
    %57 = arith.mulf %56, %54 : vector<1x32xf32>
    %58 = arith.mulf %49, %0 : vector<1x32xf32>
    %59 = arith.addf %57, %58 : vector<1x32xf32>
    %c0_26 = arith.constant 0 : index
    %c0_27 = arith.constant 0 : index
    %60 = vector.load %arg10[%c0_26, %c0_27] : memref<32x16xf32, #tpu.memory_space<vmem>>, vector<32x16xf32>
    %cst_28 = arith.constant dense<0.000000e+00> : vector<1x16xf32>
    %61 = tpu.matmul %59, %60, %cst_28 {dimension_numbers = #tpu.dot_dimension_numbers<[1], [0], [0], [1], [0, 0, 1, 1], [], []>} : vector<1x32xf32>, vector<32x16xf32>, vector<1x16xf32> -> vector<1x16xf32>
    %c0_29 = arith.constant 0 : index
    %c0_30 = arith.constant 0 : index
    %62 = vector.load %arg11[%c0_29, %c0_30] : memref<1x16xf32, #tpu.memory_space<vmem>>, vector<1x16xf32>
    %63 = arith.addf %61, %62 : vector<1x16xf32>
    %cst_31 = arith.constant dense<0xFF800000> : vector<1xf32>
    %64 = vector.multi_reduction <maximumf>, %63, %cst_31 [1] : vector<1x16xf32> to vector<1xf32>
    %65 = vector.shape_cast %64 : vector<1xf32> to vector<1x1xf32>
    %66 = vector.broadcast %65 : vector<1x1xf32> to vector<1x16xf32>
    %67 = arith.subf %63, %66 : vector<1x16xf32>
    %68 = math.exp %67 : vector<1x16xf32>
    %cst_32 = arith.constant dense<0.000000e+00> : vector<1xf32>
    %69 = vector.multi_reduction <add>, %68, %cst_32 [1] : vector<1x16xf32> to vector<1xf32>
    %70 = vector.shape_cast %69 : vector<1xf32> to vector<1x1xf32>
    %71 = math.log %70 : vector<1x1xf32>
    %72 = vector.broadcast %65 : vector<1x1xf32> to vector<1x16xf32>
    %73 = arith.subf %63, %72 : vector<1x16xf32>
    %74 = vector.broadcast %71 : vector<1x1xf32> to vector<1x16xf32>
    %75 = arith.subf %73, %74 : vector<1x16xf32>
    %76 = arith.index_cast %c0_i32 : i32 to index
    %c0_33 = arith.constant 0 : index
    %77 = vector.load %arg12[%76, %c0_33] : memref<8x16xf32, #tpu.memory_space<vmem>>, vector<1x16xf32>
    tpu.vector_store %arg12[%76, %c0_33], %75 {strides = array<i32>} : memref<8x16xf32, #tpu.memory_space<vmem>>, vector<1x16xf32>,
    %c1_i32 = arith.constant 1 : i32
    %78 = arith.index_cast %c1_i32 : i32 to index
    %79 = memref.load %arg0[%78] : memref<8xi32, #tpu.memory_space<smem>>
    %c0_i32_34 = arith.constant 0 : i32
    %80 = arith.maxsi %79, %c0_i32_34 : i32
    %c15_i32_35 = arith.constant 15 : i32
    %81 = arith.minsi %80, %c15_i32_35 : i32
    %82 = arith.index_cast %81 : i32 to index
    %c0_36 = arith.constant 0 : index
    %83 = vector.load %arg3[%82, %c0_36] : memref<16x32xf32, #tpu.memory_space<vmem>>, vector<1x32xf32>
    %84 = tpu.concatenate %83, %59 in 1 : vector<1x32xf32>, vector<1x32xf32> -> vector<1x64xf32>
    %c0_37 = arith.constant 0 : index
    %c0_38 = arith.constant 0 : index
    %85 = vector.load %arg4[%c0_37, %c0_38] : memref<64x10xf32, #tpu.memory_space<vmem>>, vector<64x10xf32>
    %cst_39 = arith.constant dense<0.000000e+00> : vector<1x10xf32>
    %86 = tpu.matmul %84, %85, %cst_39 {dimension_numbers = #tpu.dot_dimension_numbers<[1], [0], [0], [1], [0, 0, 1, 1], [], []>} : vector<1x64xf32>, vector<64x10xf32>, vector<1x10xf32> -> vector<1x10xf32>
    %c0_40 = arith.constant 0 : index
    %c0_41 = arith.constant 0 : index
    %87 = vector.load %arg5[%c0_40, %c0_41] : memref<1x10xf32, #tpu.memory_space<vmem>>, vector<1x10xf32>
    %88 = arith.addf %86, %87 : vector<1x10xf32>
    %cst_42 = arith.constant dense<0xFF800000> : vector<1xf32>
    %89 = vector.multi_reduction <maximumf>, %88, %cst_42 [1] : vector<1x10xf32> to vector<1xf32>
    %90 = vector.shape_cast %89 : vector<1xf32> to vector<1x1xf32>
    %91 = vector.broadcast %90 : vector<1x1xf32> to vector<1x10xf32>
    %92 = arith.subf %88, %91 : vector<1x10xf32>
    %93 = math.exp %92 : vector<1x10xf32>
    %cst_43 = arith.constant dense<0.000000e+00> : vector<1xf32>
    %94 = vector.multi_reduction <add>, %93, %cst_43 [1] : vector<1x10xf32> to vector<1xf32>
    %95 = vector.shape_cast %94 : vector<1xf32> to vector<1x1xf32>
    %96 = tpu.reciprocal %95 : vector<1x1xf32> -> vector<1x1xf32>
    %97 = vector.broadcast %96 : vector<1x1xf32> to vector<1x10xf32>
    %98 = arith.mulf %93, %97 : vector<1x10xf32>
    %99 = arith.index_cast %c1_i32 : i32 to index
    %c0_44 = arith.constant 0 : index
    %100 = vector.load %arg14[%99, %c0_44] : memref<8x10xf32, #tpu.memory_space<vmem>>, vector<1x10xf32>
    tpu.vector_store %arg14[%99, %c0_44], %98 {strides = array<i32>} : memref<8x10xf32, #tpu.memory_space<vmem>>, vector<1x10xf32>,
    %c0_45 = arith.constant 0 : index
    %c0_46 = arith.constant 0 : index
    %101 = vector.load %arg2[%c0_45, %c0_46] : memref<10x32xf32, #tpu.memory_space<vmem>>, vector<10x32xf32>
    %cst_47 = arith.constant dense<0.000000e+00> : vector<1x32xf32>
    %102 = tpu.matmul %98, %101, %cst_47 {dimension_numbers = #tpu.dot_dimension_numbers<[1], [0], [0], [1], [0, 0, 1, 1], [], []>} : vector<1x10xf32>, vector<10x32xf32>, vector<1x32xf32> -> vector<1x32xf32>
    %103 = tpu.concatenate %83, %102 in 1 : vector<1x32xf32>, vector<1x32xf32> -> vector<1x64xf32>
    %c0_48 = arith.constant 0 : index
    %c0_49 = arith.constant 0 : index
    %104 = vector.load %arg6[%c0_48, %c0_49] : memref<64x32xf32, #tpu.memory_space<vmem>>, vector<64x32xf32>
    %cst_50 = arith.constant dense<0.000000e+00> : vector<1x32xf32>
    %105 = tpu.matmul %103, %104, %cst_50 {dimension_numbers = #tpu.dot_dimension_numbers<[1], [0], [0], [1], [0, 0, 1, 1], [], []>} : vector<1x64xf32>, vector<64x32xf32>, vector<1x32xf32> -> vector<1x32xf32>
    %c0_51 = arith.constant 0 : index
    %c0_52 = arith.constant 0 : index
    %106 = vector.load %arg7[%c0_51, %c0_52] : memref<1x32xf32, #tpu.memory_space<vmem>>, vector<1x32xf32>
    %107 = arith.addf %105, %106 : vector<1x32xf32>
    %cst_53 = arith.constant 0.000000e+00 : f32
    %108 = vector.broadcast %cst_53 : f32 to vector<1x32xf32>
    %109 = arith.maximumf %107, %108 : vector<1x32xf32>
    %110 = tpu.concatenate %109, %59 in 1 : vector<1x32xf32>, vector<1x32xf32> -> vector<1x64xf32>
    %c0_54 = arith.constant 0 : index
    %c0_55 = arith.constant 0 : index
    %111 = vector.load %arg8[%c0_54, %c0_55] : memref<64x256xf32, #tpu.memory_space<vmem>>, vector<64x256xf32>
    %cst_56 = arith.constant dense<0.000000e+00> : vector<1x256xf32>
    %112 = tpu.matmul %110, %111, %cst_56 {dimension_numbers = #tpu.dot_dimension_numbers<[1], [0], [0], [1], [0, 0, 1, 1], [], []>} : vector<1x64xf32>, vector<64x256xf32>, vector<1x256xf32> -> vector<1x256xf32>
    %c0_57 = arith.constant 0 : index
    %c0_58 = arith.constant 0 : index
    %113 = vector.load %arg9[%c0_57, %c0_58] : memref<1x256xf32, #tpu.memory_space<vmem>>, vector<1x256xf32>
    %114 = arith.addf %112, %113 : vector<1x256xf32>
    %115 = vector.extract_strided_slice %114 {offsets = [0, 0], sizes = [1, 96], strides = [1, 1]} : vector<1x256xf32> to vector<1x96xf32>
    %116 = vector.extract_strided_slice %114 {offsets = [0, 128], sizes = [1, 96], strides = [1, 1]} : vector<1x256xf32> to vector<1x96xf32>
    %117 = vector.extract_strided_slice %115 {offsets = [0, 0], sizes = [1, 64], strides = [1, 1]} : vector<1x96xf32> to vector<1x64xf32>
    %118 = vector.extract_strided_slice %116 {offsets = [0, 0], sizes = [1, 64], strides = [1, 1]} : vector<1x96xf32> to vector<1x64xf32>
    %119 = arith.addf %117, %118 : vector<1x64xf32>
    %120 = arith.negf %119 : vector<1x64xf32>
    %121 = math.exp %120 : vector<1x64xf32>
    %cst_59 = arith.constant 1.000000e+00 : f32
    %122 = vector.broadcast %cst_59 : f32 to vector<1x64xf32>
    %123 = arith.addf %122, %121 : vector<1x64xf32>
    %124 = arith.divf %122, %123 : vector<1x64xf32>
    %125 = vector.extract_strided_slice %124 {offsets = [0, 0], sizes = [1, 32], strides = [1, 1]} : vector<1x64xf32> to vector<1x32xf32>
    %126 = vector.extract_strided_slice %124 {offsets = [0, 32], sizes = [1, 32], strides = [1, 1]} : vector<1x64xf32> to vector<1x32xf32>
    %127 = vector.extract_strided_slice %115 {offsets = [0, 64], sizes = [1, 32], strides = [1, 1]} : vector<1x96xf32> to vector<1x32xf32>
    %128 = vector.extract_strided_slice %116 {offsets = [0, 64], sizes = [1, 32], strides = [1, 1]} : vector<1x96xf32> to vector<1x32xf32>
    %129 = arith.mulf %125, %128 : vector<1x32xf32>
    %130 = arith.addf %127, %129 : vector<1x32xf32>
    %131 = math.tanh %130 : vector<1x32xf32>
    %cst_60 = arith.constant 1.000000e+00 : f32
    %132 = vector.broadcast %cst_60 : f32 to vector<1x32xf32>
    %133 = arith.subf %132, %126 : vector<1x32xf32>
    %134 = arith.mulf %133, %131 : vector<1x32xf32>
    %135 = arith.mulf %126, %59 : vector<1x32xf32>
    %136 = arith.addf %134, %135 : vector<1x32xf32>
    %c0_61 = arith.constant 0 : index
    %c0_62 = arith.constant 0 : index
    %137 = vector.load %arg10[%c0_61, %c0_62] : memref<32x16xf32, #tpu.memory_space<vmem>>, vector<32x16xf32>
    %cst_63 = arith.constant dense<0.000000e+00> : vector<1x16xf32>
    %138 = tpu.matmul %136, %137, %cst_63 {dimension_numbers = #tpu.dot_dimension_numbers<[1], [0], [0], [1], [0, 0, 1, 1], [], []>} : vector<1x32xf32>, vector<32x16xf32>, vector<1x16xf32> -> vector<1x16xf32>
    %c0_64 = arith.constant 0 : index
    %c0_65 = arith.constant 0 : index
    %139 = vector.load %arg11[%c0_64, %c0_65] : memref<1x16xf32, #tpu.memory_space<vmem>>, vector<1x16xf32>
    %140 = arith.addf %138, %139 : vector<1x16xf32>
    %cst_66 = arith.constant dense<0xFF800000> : vector<1xf32>
    %141 = vector.multi_reduction <maximumf>, %140, %cst_66 [1] : vector<1x16xf32> to vector<1xf32>
    %142 = vector.shape_cast %141 : vector<1xf32> to vector<1x1xf32>
    %143 = vector.broadcast %142 : vector<1x1xf32> to vector<1x16xf32>
    %144 = arith.subf %140, %143 : vector<1x16xf32>
    %145 = math.exp %144 : vector<1x16xf32>
    %cst_67 = arith.constant dense<0.000000e+00> : vector<1xf32>
    %146 = vector.multi_reduction <add>, %145, %cst_67 [1] : vector<1x16xf32> to vector<1xf32>
    %147 = vector.shape_cast %146 : vector<1xf32> to vector<1x1xf32>
    %148 = math.log %147 : vector<1x1xf32>
    %149 = vector.broadcast %142 : vector<1x1xf32> to vector<1x16xf32>
    %150 = arith.subf %140, %149 : vector<1x16xf32>
    %151 = vector.broadcast %148 : vector<1x1xf32> to vector<1x16xf32>
    %152 = arith.subf %150, %151 : vector<1x16xf32>
    %153 = arith.index_cast %c1_i32 : i32 to index
    %c0_68 = arith.constant 0 : index
    %154 = vector.load %arg12[%153, %c0_68] : memref<8x16xf32, #tpu.memory_space<vmem>>, vector<1x16xf32>
    tpu.vector_store %arg12[%153, %c0_68], %152 {strides = array<i32>} : memref<8x16xf32, #tpu.memory_space<vmem>>, vector<1x16xf32>,
    %c2_i32 = arith.constant 2 : i32
    %155 = arith.index_cast %c2_i32 : i32 to index
    %156 = memref.load %arg0[%155] : memref<8xi32, #tpu.memory_space<smem>>
    %c0_i32_69 = arith.constant 0 : i32
    %157 = arith.maxsi %156, %c0_i32_69 : i32
    %c15_i32_70 = arith.constant 15 : i32
    %158 = arith.minsi %157, %c15_i32_70 : i32
    %159 = arith.index_cast %158 : i32 to index
    %c0_71 = arith.constant 0 : index
    %160 = vector.load %arg3[%159, %c0_71] : memref<16x32xf32, #tpu.memory_space<vmem>>, vector<1x32xf32>
    %161 = tpu.concatenate %160, %136 in 1 : vector<1x32xf32>, vector<1x32xf32> -> vector<1x64xf32>
    %c0_72 = arith.constant 0 : index
    %c0_73 = arith.constant 0 : index
    %162 = vector.load %arg4[%c0_72, %c0_73] : memref<64x10xf32, #tpu.memory_space<vmem>>, vector<64x10xf32>
    %cst_74 = arith.constant dense<0.000000e+00> : vector<1x10xf32>
    %163 = tpu.matmul %161, %162, %cst_74 {dimension_numbers = #tpu.dot_dimension_numbers<[1], [0], [0], [1], [0, 0, 1, 1], [], []>} : vector<1x64xf32>, vector<64x10xf32>, vector<1x10xf32> -> vector<1x10xf32>
    %c0_75 = arith.constant 0 : index
    %c0_76 = arith.constant 0 : index
    %164 = vector.load %arg5[%c0_75, %c0_76] : memref<1x10xf32, #tpu.memory_space<vmem>>, vector<1x10xf32>
    %165 = arith.addf %163, %164 : vector<1x10xf32>
    %cst_77 = arith.constant dense<0xFF800000> : vector<1xf32>
    %166 = vector.multi_reduction <maximumf>, %165, %cst_77 [1] : vector<1x10xf32> to vector<1xf32>
    %167 = vector.shape_cast %166 : vector<1xf32> to vector<1x1xf32>
    %168 = vector.broadcast %167 : vector<1x1xf32> to vector<1x10xf32>
    %169 = arith.subf %165, %168 : vector<1x10xf32>
    %170 = math.exp %169 : vector<1x10xf32>
    %cst_78 = arith.constant dense<0.000000e+00> : vector<1xf32>
    %171 = vector.multi_reduction <add>, %170, %cst_78 [1] : vector<1x10xf32> to vector<1xf32>
    %172 = vector.shape_cast %171 : vector<1xf32> to vector<1x1xf32>
    %173 = tpu.reciprocal %172 : vector<1x1xf32> -> vector<1x1xf32>
    %174 = vector.broadcast %173 : vector<1x1xf32> to vector<1x10xf32>
    %175 = arith.mulf %170, %174 : vector<1x10xf32>
    %176 = arith.index_cast %c2_i32 : i32 to index
    %c0_79 = arith.constant 0 : index
    %177 = vector.load %arg14[%176, %c0_79] : memref<8x10xf32, #tpu.memory_space<vmem>>, vector<1x10xf32>
    tpu.vector_store %arg14[%176, %c0_79], %175 {strides = array<i32>} : memref<8x10xf32, #tpu.memory_space<vmem>>, vector<1x10xf32>,
    %c0_80 = arith.constant 0 : index
    %c0_81 = arith.constant 0 : index
    %178 = vector.load %arg2[%c0_80, %c0_81] : memref<10x32xf32, #tpu.memory_space<vmem>>, vector<10x32xf32>
    %cst_82 = arith.constant dense<0.000000e+00> : vector<1x32xf32>
    %179 = tpu.matmul %175, %178, %cst_82 {dimension_numbers = #tpu.dot_dimension_numbers<[1], [0], [0], [1], [0, 0, 1, 1], [], []>} : vector<1x10xf32>, vector<10x32xf32>, vector<1x32xf32> -> vector<1x32xf32>
    %180 = tpu.concatenate %160, %179 in 1 : vector<1x32xf32>, vector<1x32xf32> -> vector<1x64xf32>
    %c0_83 = arith.constant 0 : index
    %c0_84 = arith.constant 0 : index
    %181 = vector.load %arg6[%c0_83, %c0_84] : memref<64x32xf32, #tpu.memory_space<vmem>>, vector<64x32xf32>
    %cst_85 = arith.constant dense<0.000000e+00> : vector<1x32xf32>
    %182 = tpu.matmul %180, %181, %cst_85 {dimension_numbers = #tpu.dot_dimension_numbers<[1], [0], [0], [1], [0, 0, 1, 1], [], []>} : vector<1x64xf32>, vector<64x32xf32>, vector<1x32xf32> -> vector<1x32xf32>
    %c0_86 = arith.constant 0 : index
    %c0_87 = arith.constant 0 : index
    %183 = vector.load %arg7[%c0_86, %c0_87] : memref<1x32xf32, #tpu.memory_space<vmem>>, vector<1x32xf32>
    %184 = arith.addf %182, %183 : vector<1x32xf32>
    %cst_88 = arith.constant 0.000000e+00 : f32
    %185 = vector.broadcast %cst_88 : f32 to vector<1x32xf32>
    %186 = arith.maximumf %184, %185 : vector<1x32xf32>
    %187 = tpu.concatenate %186, %136 in 1 : vector<1x32xf32>, vector<1x32xf32> -> vector<1x64xf32>
    %c0_89 = arith.constant 0 : index
    %c0_90 = arith.constant 0 : index
    %188 = vector.load %arg8[%c0_89, %c0_90] : memref<64x256xf32, #tpu.memory_space<vmem>>, vector<64x256xf32>
    %cst_91 = arith.constant dense<0.000000e+00> : vector<1x256xf32>
    %189 = tpu.matmul %187, %188, %cst_91 {dimension_numbers = #tpu.dot_dimension_numbers<[1], [0], [0], [1], [0, 0, 1, 1], [], []>} : vector<1x64xf32>, vector<64x256xf32>, vector<1x256xf32> -> vector<1x256xf32>
    %c0_92 = arith.constant 0 : index
    %c0_93 = arith.constant 0 : index
    %190 = vector.load %arg9[%c0_92, %c0_93] : memref<1x256xf32, #tpu.memory_space<vmem>>, vector<1x256xf32>
    %191 = arith.addf %189, %190 : vector<1x256xf32>
    %192 = vector.extract_strided_slice %191 {offsets = [0, 0], sizes = [1, 96], strides = [1, 1]} : vector<1x256xf32> to vector<1x96xf32>
    %193 = vector.extract_strided_slice %191 {offsets = [0, 128], sizes = [1, 96], strides = [1, 1]} : vector<1x256xf32> to vector<1x96xf32>
    %194 = vector.extract_strided_slice %192 {offsets = [0, 0], sizes = [1, 64], strides = [1, 1]} : vector<1x96xf32> to vector<1x64xf32>
    %195 = vector.extract_strided_slice %193 {offsets = [0, 0], sizes = [1, 64], strides = [1, 1]} : vector<1x96xf32> to vector<1x64xf32>
    %196 = arith.addf %194, %195 : vector<1x64xf32>
    %197 = arith.negf %196 : vector<1x64xf32>
    %198 = math.exp %197 : vector<1x64xf32>
    %cst_94 = arith.constant 1.000000e+00 : f32
    %199 = vector.broadcast %cst_94 : f32 to vector<1x64xf32>
    %200 = arith.addf %199, %198 : vector<1x64xf32>
    %201 = arith.divf %199, %200 : vector<1x64xf32>
    %202 = vector.extract_strided_slice %201 {offsets = [0, 0], sizes = [1, 32], strides = [1, 1]} : vector<1x64xf32> to vector<1x32xf32>
    %203 = vector.extract_strided_slice %201 {offsets = [0, 32], sizes = [1, 32], strides = [1, 1]} : vector<1x64xf32> to vector<1x32xf32>
    %204 = vector.extract_strided_slice %192 {offsets = [0, 64], sizes = [1, 32], strides = [1, 1]} : vector<1x96xf32> to vector<1x32xf32>
    %205 = vector.extract_strided_slice %193 {offsets = [0, 64], sizes = [1, 32], strides = [1, 1]} : vector<1x96xf32> to vector<1x32xf32>
    %206 = arith.mulf %202, %205 : vector<1x32xf32>
    %207 = arith.addf %204, %206 : vector<1x32xf32>
    %208 = math.tanh %207 : vector<1x32xf32>
    %cst_95 = arith.constant 1.000000e+00 : f32
    %209 = vector.broadcast %cst_95 : f32 to vector<1x32xf32>
    %210 = arith.subf %209, %203 : vector<1x32xf32>
    %211 = arith.mulf %210, %208 : vector<1x32xf32>
    %212 = arith.mulf %203, %136 : vector<1x32xf32>
    %213 = arith.addf %211, %212 : vector<1x32xf32>
    %c0_96 = arith.constant 0 : index
    %c0_97 = arith.constant 0 : index
    %214 = vector.load %arg10[%c0_96, %c0_97] : memref<32x16xf32, #tpu.memory_space<vmem>>, vector<32x16xf32>
    %cst_98 = arith.constant dense<0.000000e+00> : vector<1x16xf32>
    %215 = tpu.matmul %213, %214, %cst_98 {dimension_numbers = #tpu.dot_dimension_numbers<[1], [0], [0], [1], [0, 0, 1, 1], [], []>} : vector<1x32xf32>, vector<32x16xf32>, vector<1x16xf32> -> vector<1x16xf32>
    %c0_99 = arith.constant 0 : index
    %c0_100 = arith.constant 0 : index
    %216 = vector.load %arg11[%c0_99, %c0_100] : memref<1x16xf32, #tpu.memory_space<vmem>>, vector<1x16xf32>
    %217 = arith.addf %215, %216 : vector<1x16xf32>
    %cst_101 = arith.constant dense<0xFF800000> : vector<1xf32>
    %218 = vector.multi_reduction <maximumf>, %217, %cst_101 [1] : vector<1x16xf32> to vector<1xf32>
    %219 = vector.shape_cast %218 : vector<1xf32> to vector<1x1xf32>
    %220 = vector.broadcast %219 : vector<1x1xf32> to vector<1x16xf32>
    %221 = arith.subf %217, %220 : vector<1x16xf32>
    %222 = math.exp %221 : vector<1x16xf32>
    %cst_102 = arith.constant dense<0.000000e+00> : vector<1xf32>
    %223 = vector.multi_reduction <add>, %222, %cst_102 [1] : vector<1x16xf32> to vector<1xf32>
    %224 = vector.shape_cast %223 : vector<1xf32> to vector<1x1xf32>
    %225 = math.log %224 : vector<1x1xf32>
    %226 = vector.broadcast %219 : vector<1x1xf32> to vector<1x16xf32>
    %227 = arith.subf %217, %226 : vector<1x16xf32>
    %228 = vector.broadcast %225 : vector<1x1xf32> to vector<1x16xf32>
    %229 = arith.subf %227, %228 : vector<1x16xf32>
    %230 = arith.index_cast %c2_i32 : i32 to index
    %c0_103 = arith.constant 0 : index
    %231 = vector.load %arg12[%230, %c0_103] : memref<8x16xf32, #tpu.memory_space<vmem>>, vector<1x16xf32>
    tpu.vector_store %arg12[%230, %c0_103], %229 {strides = array<i32>} : memref<8x16xf32, #tpu.memory_space<vmem>>, vector<1x16xf32>,
    %c3_i32 = arith.constant 3 : i32
    %232 = arith.index_cast %c3_i32 : i32 to index
    %233 = memref.load %arg0[%232] : memref<8xi32, #tpu.memory_space<smem>>
    %c0_i32_104 = arith.constant 0 : i32
    %234 = arith.maxsi %233, %c0_i32_104 : i32
    %c15_i32_105 = arith.constant 15 : i32
    %235 = arith.minsi %234, %c15_i32_105 : i32
    %236 = arith.index_cast %235 : i32 to index
    %c0_106 = arith.constant 0 : index
    %237 = vector.load %arg3[%236, %c0_106] : memref<16x32xf32, #tpu.memory_space<vmem>>, vector<1x32xf32>
    %238 = tpu.concatenate %237, %213 in 1 : vector<1x32xf32>, vector<1x32xf32> -> vector<1x64xf32>
    %c0_107 = arith.constant 0 : index
    %c0_108 = arith.constant 0 : index
    %239 = vector.load %arg4[%c0_107, %c0_108] : memref<64x10xf32, #tpu.memory_space<vmem>>, vector<64x10xf32>
    %cst_109 = arith.constant dense<0.000000e+00> : vector<1x10xf32>
    %240 = tpu.matmul %238, %239, %cst_109 {dimension_numbers = #tpu.dot_dimension_numbers<[1], [0], [0], [1], [0, 0, 1, 1], [], []>} : vector<1x64xf32>, vector<64x10xf32>, vector<1x10xf32> -> vector<1x10xf32>
    %c0_110 = arith.constant 0 : index
    %c0_111 = arith.constant 0 : index
    %241 = vector.load %arg5[%c0_110, %c0_111] : memref<1x10xf32, #tpu.memory_space<vmem>>, vector<1x10xf32>
    %242 = arith.addf %240, %241 : vector<1x10xf32>
    %cst_112 = arith.constant dense<0xFF800000> : vector<1xf32>
    %243 = vector.multi_reduction <maximumf>, %242, %cst_112 [1] : vector<1x10xf32> to vector<1xf32>
    %244 = vector.shape_cast %243 : vector<1xf32> to vector<1x1xf32>
    %245 = vector.broadcast %244 : vector<1x1xf32> to vector<1x10xf32>
    %246 = arith.subf %242, %245 : vector<1x10xf32>
    %247 = math.exp %246 : vector<1x10xf32>
    %cst_113 = arith.constant dense<0.000000e+00> : vector<1xf32>
    %248 = vector.multi_reduction <add>, %247, %cst_113 [1] : vector<1x10xf32> to vector<1xf32>
    %249 = vector.shape_cast %248 : vector<1xf32> to vector<1x1xf32>
    %250 = tpu.reciprocal %249 : vector<1x1xf32> -> vector<1x1xf32>
    %251 = vector.broadcast %250 : vector<1x1xf32> to vector<1x10xf32>
    %252 = arith.mulf %247, %251 : vector<1x10xf32>
    %253 = arith.index_cast %c3_i32 : i32 to index
    %c0_114 = arith.constant 0 : index
    %254 = vector.load %arg14[%253, %c0_114] : memref<8x10xf32, #tpu.memory_space<vmem>>, vector<1x10xf32>
    tpu.vector_store %arg14[%253, %c0_114], %252 {strides = array<i32>} : memref<8x10xf32, #tpu.memory_space<vmem>>, vector<1x10xf32>,
    %c0_115 = arith.constant 0 : index
    %c0_116 = arith.constant 0 : index
    %255 = vector.load %arg2[%c0_115, %c0_116] : memref<10x32xf32, #tpu.memory_space<vmem>>, vector<10x32xf32>
    %cst_117 = arith.constant dense<0.000000e+00> : vector<1x32xf32>
    %256 = tpu.matmul %252, %255, %cst_117 {dimension_numbers = #tpu.dot_dimension_numbers<[1], [0], [0], [1], [0, 0, 1, 1], [], []>} : vector<1x10xf32>, vector<10x32xf32>, vector<1x32xf32> -> vector<1x32xf32>
    %257 = tpu.concatenate %237, %256 in 1 : vector<1x32xf32>, vector<1x32xf32> -> vector<1x64xf32>
    %c0_118 = arith.constant 0 : index
    %c0_119 = arith.constant 0 : index
    %258 = vector.load %arg6[%c0_118, %c0_119] : memref<64x32xf32, #tpu.memory_space<vmem>>, vector<64x32xf32>
    %cst_120 = arith.constant dense<0.000000e+00> : vector<1x32xf32>
    %259 = tpu.matmul %257, %258, %cst_120 {dimension_numbers = #tpu.dot_dimension_numbers<[1], [0], [0], [1], [0, 0, 1, 1], [], []>} : vector<1x64xf32>, vector<64x32xf32>, vector<1x32xf32> -> vector<1x32xf32>
    %c0_121 = arith.constant 0 : index
    %c0_122 = arith.constant 0 : index
    %260 = vector.load %arg7[%c0_121, %c0_122] : memref<1x32xf32, #tpu.memory_space<vmem>>, vector<1x32xf32>
    %261 = arith.addf %259, %260 : vector<1x32xf32>
    %cst_123 = arith.constant 0.000000e+00 : f32
    %262 = vector.broadcast %cst_123 : f32 to vector<1x32xf32>
    %263 = arith.maximumf %261, %262 : vector<1x32xf32>
    %264 = tpu.concatenate %263, %213 in 1 : vector<1x32xf32>, vector<1x32xf32> -> vector<1x64xf32>
    %c0_124 = arith.constant 0 : index
    %c0_125 = arith.constant 0 : index
    %265 = vector.load %arg8[%c0_124, %c0_125] : memref<64x256xf32, #tpu.memory_space<vmem>>, vector<64x256xf32>
    %cst_126 = arith.constant dense<0.000000e+00> : vector<1x256xf32>
    %266 = tpu.matmul %264, %265, %cst_126 {dimension_numbers = #tpu.dot_dimension_numbers<[1], [0], [0], [1], [0, 0, 1, 1], [], []>} : vector<1x64xf32>, vector<64x256xf32>, vector<1x256xf32> -> vector<1x256xf32>
    %c0_127 = arith.constant 0 : index
    %c0_128 = arith.constant 0 : index
    %267 = vector.load %arg9[%c0_127, %c0_128] : memref<1x256xf32, #tpu.memory_space<vmem>>, vector<1x256xf32>
    %268 = arith.addf %266, %267 : vector<1x256xf32>
    %269 = vector.extract_strided_slice %268 {offsets = [0, 0], sizes = [1, 96], strides = [1, 1]} : vector<1x256xf32> to vector<1x96xf32>
    %270 = vector.extract_strided_slice %268 {offsets = [0, 128], sizes = [1, 96], strides = [1, 1]} : vector<1x256xf32> to vector<1x96xf32>
    %271 = vector.extract_strided_slice %269 {offsets = [0, 0], sizes = [1, 64], strides = [1, 1]} : vector<1x96xf32> to vector<1x64xf32>
    %272 = vector.extract_strided_slice %270 {offsets = [0, 0], sizes = [1, 64], strides = [1, 1]} : vector<1x96xf32> to vector<1x64xf32>
    %273 = arith.addf %271, %272 : vector<1x64xf32>
    %274 = arith.negf %273 : vector<1x64xf32>
    %275 = math.exp %274 : vector<1x64xf32>
    %cst_129 = arith.constant 1.000000e+00 : f32
    %276 = vector.broadcast %cst_129 : f32 to vector<1x64xf32>
    %277 = arith.addf %276, %275 : vector<1x64xf32>
    %278 = arith.divf %276, %277 : vector<1x64xf32>
    %279 = vector.extract_strided_slice %278 {offsets = [0, 0], sizes = [1, 32], strides = [1, 1]} : vector<1x64xf32> to vector<1x32xf32>
    %280 = vector.extract_strided_slice %278 {offsets = [0, 32], sizes = [1, 32], strides = [1, 1]} : vector<1x64xf32> to vector<1x32xf32>
    %281 = vector.extract_strided_slice %269 {offsets = [0, 64], sizes = [1, 32], strides = [1, 1]} : vector<1x96xf32> to vector<1x32xf32>
    %282 = vector.extract_strided_slice %270 {offsets = [0, 64], sizes = [1, 32], strides = [1, 1]} : vector<1x96xf32> to vector<1x32xf32>
    %283 = arith.mulf %279, %282 : vector<1x32xf32>
    %284 = arith.addf %281, %283 : vector<1x32xf32>
    %285 = math.tanh %284 : vector<1x32xf32>
    %cst_130 = arith.constant 1.000000e+00 : f32
    %286 = vector.broadcast %cst_130 : f32 to vector<1x32xf32>
    %287 = arith.subf %286, %280 : vector<1x32xf32>
    %288 = arith.mulf %287, %285 : vector<1x32xf32>
    %289 = arith.mulf %280, %213 : vector<1x32xf32>
    %290 = arith.addf %288, %289 : vector<1x32xf32>
    %c0_131 = arith.constant 0 : index
    %c0_132 = arith.constant 0 : index
    %291 = vector.load %arg10[%c0_131, %c0_132] : memref<32x16xf32, #tpu.memory_space<vmem>>, vector<32x16xf32>
    %cst_133 = arith.constant dense<0.000000e+00> : vector<1x16xf32>
    %292 = tpu.matmul %290, %291, %cst_133 {dimension_numbers = #tpu.dot_dimension_numbers<[1], [0], [0], [1], [0, 0, 1, 1], [], []>} : vector<1x32xf32>, vector<32x16xf32>, vector<1x16xf32> -> vector<1x16xf32>
    %c0_134 = arith.constant 0 : index
    %c0_135 = arith.constant 0 : index
    %293 = vector.load %arg11[%c0_134, %c0_135] : memref<1x16xf32, #tpu.memory_space<vmem>>, vector<1x16xf32>
    %294 = arith.addf %292, %293 : vector<1x16xf32>
    %cst_136 = arith.constant dense<0xFF800000> : vector<1xf32>
    %295 = vector.multi_reduction <maximumf>, %294, %cst_136 [1] : vector<1x16xf32> to vector<1xf32>
    %296 = vector.shape_cast %295 : vector<1xf32> to vector<1x1xf32>
    %297 = vector.broadcast %296 : vector<1x1xf32> to vector<1x16xf32>
    %298 = arith.subf %294, %297 : vector<1x16xf32>
    %299 = math.exp %298 : vector<1x16xf32>
    %cst_137 = arith.constant dense<0.000000e+00> : vector<1xf32>
    %300 = vector.multi_reduction <add>, %299, %cst_137 [1] : vector<1x16xf32> to vector<1xf32>
    %301 = vector.shape_cast %300 : vector<1xf32> to vector<1x1xf32>
    %302 = math.log %301 : vector<1x1xf32>
    %303 = vector.broadcast %296 : vector<1x1xf32> to vector<1x16xf32>
    %304 = arith.subf %294, %303 : vector<1x16xf32>
    %305 = vector.broadcast %302 : vector<1x1xf32> to vector<1x16xf32>
    %306 = arith.subf %304, %305 : vector<1x16xf32>
    %307 = arith.index_cast %c3_i32 : i32 to index
    %c0_138 = arith.constant 0 : index
    %308 = vector.load %arg12[%307, %c0_138] : memref<8x16xf32, #tpu.memory_space<vmem>>, vector<1x16xf32>
    tpu.vector_store %arg12[%307, %c0_138], %306 {strides = array<i32>} : memref<8x16xf32, #tpu.memory_space<vmem>>, vector<1x16xf32>,
    %c4_i32 = arith.constant 4 : i32
    %309 = arith.index_cast %c4_i32 : i32 to index
    %310 = memref.load %arg0[%309] : memref<8xi32, #tpu.memory_space<smem>>
    %c0_i32_139 = arith.constant 0 : i32
    %311 = arith.maxsi %310, %c0_i32_139 : i32
    %c15_i32_140 = arith.constant 15 : i32
    %312 = arith.minsi %311, %c15_i32_140 : i32
    %313 = arith.index_cast %312 : i32 to index
    %c0_141 = arith.constant 0 : index
    %314 = vector.load %arg3[%313, %c0_141] : memref<16x32xf32, #tpu.memory_space<vmem>>, vector<1x32xf32>
    %315 = tpu.concatenate %314, %290 in 1 : vector<1x32xf32>, vector<1x32xf32> -> vector<1x64xf32>
    %c0_142 = arith.constant 0 : index
    %c0_143 = arith.constant 0 : index
    %316 = vector.load %arg4[%c0_142, %c0_143] : memref<64x10xf32, #tpu.memory_space<vmem>>, vector<64x10xf32>
    %cst_144 = arith.constant dense<0.000000e+00> : vector<1x10xf32>
    %317 = tpu.matmul %315, %316, %cst_144 {dimension_numbers = #tpu.dot_dimension_numbers<[1], [0], [0], [1], [0, 0, 1, 1], [], []>} : vector<1x64xf32>, vector<64x10xf32>, vector<1x10xf32> -> vector<1x10xf32>
    %c0_145 = arith.constant 0 : index
    %c0_146 = arith.constant 0 : index
    %318 = vector.load %arg5[%c0_145, %c0_146] : memref<1x10xf32, #tpu.memory_space<vmem>>, vector<1x10xf32>
    %319 = arith.addf %317, %318 : vector<1x10xf32>
    %cst_147 = arith.constant dense<0xFF800000> : vector<1xf32>
    %320 = vector.multi_reduction <maximumf>, %319, %cst_147 [1] : vector<1x10xf32> to vector<1xf32>
    %321 = vector.shape_cast %320 : vector<1xf32> to vector<1x1xf32>
    %322 = vector.broadcast %321 : vector<1x1xf32> to vector<1x10xf32>
    %323 = arith.subf %319, %322 : vector<1x10xf32>
    %324 = math.exp %323 : vector<1x10xf32>
    %cst_148 = arith.constant dense<0.000000e+00> : vector<1xf32>
    %325 = vector.multi_reduction <add>, %324, %cst_148 [1] : vector<1x10xf32> to vector<1xf32>
    %326 = vector.shape_cast %325 : vector<1xf32> to vector<1x1xf32>
    %327 = tpu.reciprocal %326 : vector<1x1xf32> -> vector<1x1xf32>
    %328 = vector.broadcast %327 : vector<1x1xf32> to vector<1x10xf32>
    %329 = arith.mulf %324, %328 : vector<1x10xf32>
    %330 = arith.index_cast %c4_i32 : i32 to index
    %c0_149 = arith.constant 0 : index
    %331 = vector.load %arg14[%330, %c0_149] : memref<8x10xf32, #tpu.memory_space<vmem>>, vector<1x10xf32>
    tpu.vector_store %arg14[%330, %c0_149], %329 {strides = array<i32>} : memref<8x10xf32, #tpu.memory_space<vmem>>, vector<1x10xf32>,
    %c0_150 = arith.constant 0 : index
    %c0_151 = arith.constant 0 : index
    %332 = vector.load %arg2[%c0_150, %c0_151] : memref<10x32xf32, #tpu.memory_space<vmem>>, vector<10x32xf32>
    %cst_152 = arith.constant dense<0.000000e+00> : vector<1x32xf32>
    %333 = tpu.matmul %329, %332, %cst_152 {dimension_numbers = #tpu.dot_dimension_numbers<[1], [0], [0], [1], [0, 0, 1, 1], [], []>} : vector<1x10xf32>, vector<10x32xf32>, vector<1x32xf32> -> vector<1x32xf32>
    %334 = tpu.concatenate %314, %333 in 1 : vector<1x32xf32>, vector<1x32xf32> -> vector<1x64xf32>
    %c0_153 = arith.constant 0 : index
    %c0_154 = arith.constant 0 : index
    %335 = vector.load %arg6[%c0_153, %c0_154] : memref<64x32xf32, #tpu.memory_space<vmem>>, vector<64x32xf32>
    %cst_155 = arith.constant dense<0.000000e+00> : vector<1x32xf32>
    %336 = tpu.matmul %334, %335, %cst_155 {dimension_numbers = #tpu.dot_dimension_numbers<[1], [0], [0], [1], [0, 0, 1, 1], [], []>} : vector<1x64xf32>, vector<64x32xf32>, vector<1x32xf32> -> vector<1x32xf32>
    %c0_156 = arith.constant 0 : index
    %c0_157 = arith.constant 0 : index
    %337 = vector.load %arg7[%c0_156, %c0_157] : memref<1x32xf32, #tpu.memory_space<vmem>>, vector<1x32xf32>
    %338 = arith.addf %336, %337 : vector<1x32xf32>
    %cst_158 = arith.constant 0.000000e+00 : f32
    %339 = vector.broadcast %cst_158 : f32 to vector<1x32xf32>
    %340 = arith.maximumf %338, %339 : vector<1x32xf32>
    %341 = tpu.concatenate %340, %290 in 1 : vector<1x32xf32>, vector<1x32xf32> -> vector<1x64xf32>
    %c0_159 = arith.constant 0 : index
    %c0_160 = arith.constant 0 : index
    %342 = vector.load %arg8[%c0_159, %c0_160] : memref<64x256xf32, #tpu.memory_space<vmem>>, vector<64x256xf32>
    %cst_161 = arith.constant dense<0.000000e+00> : vector<1x256xf32>
    %343 = tpu.matmul %341, %342, %cst_161 {dimension_numbers = #tpu.dot_dimension_numbers<[1], [0], [0], [1], [0, 0, 1, 1], [], []>} : vector<1x64xf32>, vector<64x256xf32>, vector<1x256xf32> -> vector<1x256xf32>
    %c0_162 = arith.constant 0 : index
    %c0_163 = arith.constant 0 : index
    %344 = vector.load %arg9[%c0_162, %c0_163] : memref<1x256xf32, #tpu.memory_space<vmem>>, vector<1x256xf32>
    %345 = arith.addf %343, %344 : vector<1x256xf32>
    %346 = vector.extract_strided_slice %345 {offsets = [0, 0], sizes = [1, 96], strides = [1, 1]} : vector<1x256xf32> to vector<1x96xf32>
    %347 = vector.extract_strided_slice %345 {offsets = [0, 128], sizes = [1, 96], strides = [1, 1]} : vector<1x256xf32> to vector<1x96xf32>
    %348 = vector.extract_strided_slice %346 {offsets = [0, 0], sizes = [1, 64], strides = [1, 1]} : vector<1x96xf32> to vector<1x64xf32>
    %349 = vector.extract_strided_slice %347 {offsets = [0, 0], sizes = [1, 64], strides = [1, 1]} : vector<1x96xf32> to vector<1x64xf32>
    %350 = arith.addf %348, %349 : vector<1x64xf32>
    %351 = arith.negf %350 : vector<1x64xf32>
    %352 = math.exp %351 : vector<1x64xf32>
    %cst_164 = arith.constant 1.000000e+00 : f32
    %353 = vector.broadcast %cst_164 : f32 to vector<1x64xf32>
    %354 = arith.addf %353, %352 : vector<1x64xf32>
    %355 = arith.divf %353, %354 : vector<1x64xf32>
    %356 = vector.extract_strided_slice %355 {offsets = [0, 0], sizes = [1, 32], strides = [1, 1]} : vector<1x64xf32> to vector<1x32xf32>
    %357 = vector.extract_strided_slice %355 {offsets = [0, 32], sizes = [1, 32], strides = [1, 1]} : vector<1x64xf32> to vector<1x32xf32>
    %358 = vector.extract_strided_slice %346 {offsets = [0, 64], sizes = [1, 32], strides = [1, 1]} : vector<1x96xf32> to vector<1x32xf32>
    %359 = vector.extract_strided_slice %347 {offsets = [0, 64], sizes = [1, 32], strides = [1, 1]} : vector<1x96xf32> to vector<1x32xf32>
    %360 = arith.mulf %356, %359 : vector<1x32xf32>
    %361 = arith.addf %358, %360 : vector<1x32xf32>
    %362 = math.tanh %361 : vector<1x32xf32>
    %cst_165 = arith.constant 1.000000e+00 : f32
    %363 = vector.broadcast %cst_165 : f32 to vector<1x32xf32>
    %364 = arith.subf %363, %357 : vector<1x32xf32>
    %365 = arith.mulf %364, %362 : vector<1x32xf32>
    %366 = arith.mulf %357, %290 : vector<1x32xf32>
    %367 = arith.addf %365, %366 : vector<1x32xf32>
    %c0_166 = arith.constant 0 : index
    %c0_167 = arith.constant 0 : index
    %368 = vector.load %arg10[%c0_166, %c0_167] : memref<32x16xf32, #tpu.memory_space<vmem>>, vector<32x16xf32>
    %cst_168 = arith.constant dense<0.000000e+00> : vector<1x16xf32>
    %369 = tpu.matmul %367, %368, %cst_168 {dimension_numbers = #tpu.dot_dimension_numbers<[1], [0], [0], [1], [0, 0, 1, 1], [], []>} : vector<1x32xf32>, vector<32x16xf32>, vector<1x16xf32> -> vector<1x16xf32>
    %c0_169 = arith.constant 0 : index
    %c0_170 = arith.constant 0 : index
    %370 = vector.load %arg11[%c0_169, %c0_170] : memref<1x16xf32, #tpu.memory_space<vmem>>, vector<1x16xf32>
    %371 = arith.addf %369, %370 : vector<1x16xf32>
    %cst_171 = arith.constant dense<0xFF800000> : vector<1xf32>
    %372 = vector.multi_reduction <maximumf>, %371, %cst_171 [1] : vector<1x16xf32> to vector<1xf32>
    %373 = vector.shape_cast %372 : vector<1xf32> to vector<1x1xf32>
    %374 = vector.broadcast %373 : vector<1x1xf32> to vector<1x16xf32>
    %375 = arith.subf %371, %374 : vector<1x16xf32>
    %376 = math.exp %375 : vector<1x16xf32>
    %cst_172 = arith.constant dense<0.000000e+00> : vector<1xf32>
    %377 = vector.multi_reduction <add>, %376, %cst_172 [1] : vector<1x16xf32> to vector<1xf32>
    %378 = vector.shape_cast %377 : vector<1xf32> to vector<1x1xf32>
    %379 = math.log %378 : vector<1x1xf32>
    %380 = vector.broadcast %373 : vector<1x1xf32> to vector<1x16xf32>
    %381 = arith.subf %371, %380 : vector<1x16xf32>
    %382 = vector.broadcast %379 : vector<1x1xf32> to vector<1x16xf32>
    %383 = arith.subf %381, %382 : vector<1x16xf32>
    %384 = arith.index_cast %c4_i32 : i32 to index
    %c0_173 = arith.constant 0 : index
    %385 = vector.load %arg12[%384, %c0_173] : memref<8x16xf32, #tpu.memory_space<vmem>>, vector<1x16xf32>
    tpu.vector_store %arg12[%384, %c0_173], %383 {strides = array<i32>} : memref<8x16xf32, #tpu.memory_space<vmem>>, vector<1x16xf32>,
    %c5_i32 = arith.constant 5 : i32
    %386 = arith.index_cast %c5_i32 : i32 to index
    %387 = memref.load %arg0[%386] : memref<8xi32, #tpu.memory_space<smem>>
    %c0_i32_174 = arith.constant 0 : i32
    %388 = arith.maxsi %387, %c0_i32_174 : i32
    %c15_i32_175 = arith.constant 15 : i32
    %389 = arith.minsi %388, %c15_i32_175 : i32
    %390 = arith.index_cast %389 : i32 to index
    %c0_176 = arith.constant 0 : index
    %391 = vector.load %arg3[%390, %c0_176] : memref<16x32xf32, #tpu.memory_space<vmem>>, vector<1x32xf32>
    %392 = tpu.concatenate %391, %367 in 1 : vector<1x32xf32>, vector<1x32xf32> -> vector<1x64xf32>
    %c0_177 = arith.constant 0 : index
    %c0_178 = arith.constant 0 : index
    %393 = vector.load %arg4[%c0_177, %c0_178] : memref<64x10xf32, #tpu.memory_space<vmem>>, vector<64x10xf32>
    %cst_179 = arith.constant dense<0.000000e+00> : vector<1x10xf32>
    %394 = tpu.matmul %392, %393, %cst_179 {dimension_numbers = #tpu.dot_dimension_numbers<[1], [0], [0], [1], [0, 0, 1, 1], [], []>} : vector<1x64xf32>, vector<64x10xf32>, vector<1x10xf32> -> vector<1x10xf32>
    %c0_180 = arith.constant 0 : index
    %c0_181 = arith.constant 0 : index
    %395 = vector.load %arg5[%c0_180, %c0_181] : memref<1x10xf32, #tpu.memory_space<vmem>>, vector<1x10xf32>
    %396 = arith.addf %394, %395 : vector<1x10xf32>
    %cst_182 = arith.constant dense<0xFF800000> : vector<1xf32>
    %397 = vector.multi_reduction <maximumf>, %396, %cst_182 [1] : vector<1x10xf32> to vector<1xf32>
    %398 = vector.shape_cast %397 : vector<1xf32> to vector<1x1xf32>
    %399 = vector.broadcast %398 : vector<1x1xf32> to vector<1x10xf32>
    %400 = arith.subf %396, %399 : vector<1x10xf32>
    %401 = math.exp %400 : vector<1x10xf32>
    %cst_183 = arith.constant dense<0.000000e+00> : vector<1xf32>
    %402 = vector.multi_reduction <add>, %401, %cst_183 [1] : vector<1x10xf32> to vector<1xf32>
    %403 = vector.shape_cast %402 : vector<1xf32> to vector<1x1xf32>
    %404 = tpu.reciprocal %403 : vector<1x1xf32> -> vector<1x1xf32>
    %405 = vector.broadcast %404 : vector<1x1xf32> to vector<1x10xf32>
    %406 = arith.mulf %401, %405 : vector<1x10xf32>
    %407 = arith.index_cast %c5_i32 : i32 to index
    %c0_184 = arith.constant 0 : index
    %408 = vector.load %arg14[%407, %c0_184] : memref<8x10xf32, #tpu.memory_space<vmem>>, vector<1x10xf32>
    tpu.vector_store %arg14[%407, %c0_184], %406 {strides = array<i32>} : memref<8x10xf32, #tpu.memory_space<vmem>>, vector<1x10xf32>,
    %c0_185 = arith.constant 0 : index
    %c0_186 = arith.constant 0 : index
    %409 = vector.load %arg2[%c0_185, %c0_186] : memref<10x32xf32, #tpu.memory_space<vmem>>, vector<10x32xf32>
    %cst_187 = arith.constant dense<0.000000e+00> : vector<1x32xf32>
    %410 = tpu.matmul %406, %409, %cst_187 {dimension_numbers = #tpu.dot_dimension_numbers<[1], [0], [0], [1], [0, 0, 1, 1], [], []>} : vector<1x10xf32>, vector<10x32xf32>, vector<1x32xf32> -> vector<1x32xf32>
    %411 = tpu.concatenate %391, %410 in 1 : vector<1x32xf32>, vector<1x32xf32> -> vector<1x64xf32>
    %c0_188 = arith.constant 0 : index
    %c0_189 = arith.constant 0 : index
    %412 = vector.load %arg6[%c0_188, %c0_189] : memref<64x32xf32, #tpu.memory_space<vmem>>, vector<64x32xf32>
    %cst_190 = arith.constant dense<0.000000e+00> : vector<1x32xf32>
    %413 = tpu.matmul %411, %412, %cst_190 {dimension_numbers = #tpu.dot_dimension_numbers<[1], [0], [0], [1], [0, 0, 1, 1], [], []>} : vector<1x64xf32>, vector<64x32xf32>, vector<1x32xf32> -> vector<1x32xf32>
    %c0_191 = arith.constant 0 : index
    %c0_192 = arith.constant 0 : index
    %414 = vector.load %arg7[%c0_191, %c0_192] : memref<1x32xf32, #tpu.memory_space<vmem>>, vector<1x32xf32>
    %415 = arith.addf %413, %414 : vector<1x32xf32>
    %cst_193 = arith.constant 0.000000e+00 : f32
    %416 = vector.broadcast %cst_193 : f32 to vector<1x32xf32>
    %417 = arith.maximumf %415, %416 : vector<1x32xf32>
    %418 = tpu.concatenate %417, %367 in 1 : vector<1x32xf32>, vector<1x32xf32> -> vector<1x64xf32>
    %c0_194 = arith.constant 0 : index
    %c0_195 = arith.constant 0 : index
    %419 = vector.load %arg8[%c0_194, %c0_195] : memref<64x256xf32, #tpu.memory_space<vmem>>, vector<64x256xf32>
    %cst_196 = arith.constant dense<0.000000e+00> : vector<1x256xf32>
    %420 = tpu.matmul %418, %419, %cst_196 {dimension_numbers = #tpu.dot_dimension_numbers<[1], [0], [0], [1], [0, 0, 1, 1], [], []>} : vector<1x64xf32>, vector<64x256xf32>, vector<1x256xf32> -> vector<1x256xf32>
    %c0_197 = arith.constant 0 : index
    %c0_198 = arith.constant 0 : index
    %421 = vector.load %arg9[%c0_197, %c0_198] : memref<1x256xf32, #tpu.memory_space<vmem>>, vector<1x256xf32>
    %422 = arith.addf %420, %421 : vector<1x256xf32>
    %423 = vector.extract_strided_slice %422 {offsets = [0, 0], sizes = [1, 96], strides = [1, 1]} : vector<1x256xf32> to vector<1x96xf32>
    %424 = vector.extract_strided_slice %422 {offsets = [0, 128], sizes = [1, 96], strides = [1, 1]} : vector<1x256xf32> to vector<1x96xf32>
    %425 = vector.extract_strided_slice %423 {offsets = [0, 0], sizes = [1, 64], strides = [1, 1]} : vector<1x96xf32> to vector<1x64xf32>
    %426 = vector.extract_strided_slice %424 {offsets = [0, 0], sizes = [1, 64], strides = [1, 1]} : vector<1x96xf32> to vector<1x64xf32>
    %427 = arith.addf %425, %426 : vector<1x64xf32>
    %428 = arith.negf %427 : vector<1x64xf32>
    %429 = math.exp %428 : vector<1x64xf32>
    %cst_199 = arith.constant 1.000000e+00 : f32
    %430 = vector.broadcast %cst_199 : f32 to vector<1x64xf32>
    %431 = arith.addf %430, %429 : vector<1x64xf32>
    %432 = arith.divf %430, %431 : vector<1x64xf32>
    %433 = vector.extract_strided_slice %432 {offsets = [0, 0], sizes = [1, 32], strides = [1, 1]} : vector<1x64xf32> to vector<1x32xf32>
    %434 = vector.extract_strided_slice %432 {offsets = [0, 32], sizes = [1, 32], strides = [1, 1]} : vector<1x64xf32> to vector<1x32xf32>
    %435 = vector.extract_strided_slice %423 {offsets = [0, 64], sizes = [1, 32], strides = [1, 1]} : vector<1x96xf32> to vector<1x32xf32>
    %436 = vector.extract_strided_slice %424 {offsets = [0, 64], sizes = [1, 32], strides = [1, 1]} : vector<1x96xf32> to vector<1x32xf32>
    %437 = arith.mulf %433, %436 : vector<1x32xf32>
    %438 = arith.addf %435, %437 : vector<1x32xf32>
    %439 = math.tanh %438 : vector<1x32xf32>
    %cst_200 = arith.constant 1.000000e+00 : f32
    %440 = vector.broadcast %cst_200 : f32 to vector<1x32xf32>
    %441 = arith.subf %440, %434 : vector<1x32xf32>
    %442 = arith.mulf %441, %439 : vector<1x32xf32>
    %443 = arith.mulf %434, %367 : vector<1x32xf32>
    %444 = arith.addf %442, %443 : vector<1x32xf32>
    %c0_201 = arith.constant 0 : index
    %c0_202 = arith.constant 0 : index
    %445 = vector.load %arg10[%c0_201, %c0_202] : memref<32x16xf32, #tpu.memory_space<vmem>>, vector<32x16xf32>
    %cst_203 = arith.constant dense<0.000000e+00> : vector<1x16xf32>
    %446 = tpu.matmul %444, %445, %cst_203 {dimension_numbers = #tpu.dot_dimension_numbers<[1], [0], [0], [1], [0, 0, 1, 1], [], []>} : vector<1x32xf32>, vector<32x16xf32>, vector<1x16xf32> -> vector<1x16xf32>
    %c0_204 = arith.constant 0 : index
    %c0_205 = arith.constant 0 : index
    %447 = vector.load %arg11[%c0_204, %c0_205] : memref<1x16xf32, #tpu.memory_space<vmem>>, vector<1x16xf32>
    %448 = arith.addf %446, %447 : vector<1x16xf32>
    %cst_206 = arith.constant dense<0xFF800000> : vector<1xf32>
    %449 = vector.multi_reduction <maximumf>, %448, %cst_206 [1] : vector<1x16xf32> to vector<1xf32>
    %450 = vector.shape_cast %449 : vector<1xf32> to vector<1x1xf32>
    %451 = vector.broadcast %450 : vector<1x1xf32> to vector<1x16xf32>
    %452 = arith.subf %448, %451 : vector<1x16xf32>
    %453 = math.exp %452 : vector<1x16xf32>
    %cst_207 = arith.constant dense<0.000000e+00> : vector<1xf32>
    %454 = vector.multi_reduction <add>, %453, %cst_207 [1] : vector<1x16xf32> to vector<1xf32>
    %455 = vector.shape_cast %454 : vector<1xf32> to vector<1x1xf32>
    %456 = math.log %455 : vector<1x1xf32>
    %457 = vector.broadcast %450 : vector<1x1xf32> to vector<1x16xf32>
    %458 = arith.subf %448, %457 : vector<1x16xf32>
    %459 = vector.broadcast %456 : vector<1x1xf32> to vector<1x16xf32>
    %460 = arith.subf %458, %459 : vector<1x16xf32>
    %461 = arith.index_cast %c5_i32 : i32 to index
    %c0_208 = arith.constant 0 : index
    %462 = vector.load %arg12[%461, %c0_208] : memref<8x16xf32, #tpu.memory_space<vmem>>, vector<1x16xf32>
    tpu.vector_store %arg12[%461, %c0_208], %460 {strides = array<i32>} : memref<8x16xf32, #tpu.memory_space<vmem>>, vector<1x16xf32>,
    %c6_i32 = arith.constant 6 : i32
    %463 = arith.index_cast %c6_i32 : i32 to index
    %464 = memref.load %arg0[%463] : memref<8xi32, #tpu.memory_space<smem>>
    %c0_i32_209 = arith.constant 0 : i32
    %465 = arith.maxsi %464, %c0_i32_209 : i32
    %c15_i32_210 = arith.constant 15 : i32
    %466 = arith.minsi %465, %c15_i32_210 : i32
    %467 = arith.index_cast %466 : i32 to index
    %c0_211 = arith.constant 0 : index
    %468 = vector.load %arg3[%467, %c0_211] : memref<16x32xf32, #tpu.memory_space<vmem>>, vector<1x32xf32>
    %469 = tpu.concatenate %468, %444 in 1 : vector<1x32xf32>, vector<1x32xf32> -> vector<1x64xf32>
    %c0_212 = arith.constant 0 : index
    %c0_213 = arith.constant 0 : index
    %470 = vector.load %arg4[%c0_212, %c0_213] : memref<64x10xf32, #tpu.memory_space<vmem>>, vector<64x10xf32>
    %cst_214 = arith.constant dense<0.000000e+00> : vector<1x10xf32>
    %471 = tpu.matmul %469, %470, %cst_214 {dimension_numbers = #tpu.dot_dimension_numbers<[1], [0], [0], [1], [0, 0, 1, 1], [], []>} : vector<1x64xf32>, vector<64x10xf32>, vector<1x10xf32> -> vector<1x10xf32>
    %c0_215 = arith.constant 0 : index
    %c0_216 = arith.constant 0 : index
    %472 = vector.load %arg5[%c0_215, %c0_216] : memref<1x10xf32, #tpu.memory_space<vmem>>, vector<1x10xf32>
    %473 = arith.addf %471, %472 : vector<1x10xf32>
    %cst_217 = arith.constant dense<0xFF800000> : vector<1xf32>
    %474 = vector.multi_reduction <maximumf>, %473, %cst_217 [1] : vector<1x10xf32> to vector<1xf32>
    %475 = vector.shape_cast %474 : vector<1xf32> to vector<1x1xf32>
    %476 = vector.broadcast %475 : vector<1x1xf32> to vector<1x10xf32>
    %477 = arith.subf %473, %476 : vector<1x10xf32>
    %478 = math.exp %477 : vector<1x10xf32>
    %cst_218 = arith.constant dense<0.000000e+00> : vector<1xf32>
    %479 = vector.multi_reduction <add>, %478, %cst_218 [1] : vector<1x10xf32> to vector<1xf32>
    %480 = vector.shape_cast %479 : vector<1xf32> to vector<1x1xf32>
    %481 = tpu.reciprocal %480 : vector<1x1xf32> -> vector<1x1xf32>
    %482 = vector.broadcast %481 : vector<1x1xf32> to vector<1x10xf32>
    %483 = arith.mulf %478, %482 : vector<1x10xf32>
    %484 = arith.index_cast %c6_i32 : i32 to index
    %c0_219 = arith.constant 0 : index
    %485 = vector.load %arg14[%484, %c0_219] : memref<8x10xf32, #tpu.memory_space<vmem>>, vector<1x10xf32>
    tpu.vector_store %arg14[%484, %c0_219], %483 {strides = array<i32>} : memref<8x10xf32, #tpu.memory_space<vmem>>, vector<1x10xf32>,
    %c0_220 = arith.constant 0 : index
    %c0_221 = arith.constant 0 : index
    %486 = vector.load %arg2[%c0_220, %c0_221] : memref<10x32xf32, #tpu.memory_space<vmem>>, vector<10x32xf32>
    %cst_222 = arith.constant dense<0.000000e+00> : vector<1x32xf32>
    %487 = tpu.matmul %483, %486, %cst_222 {dimension_numbers = #tpu.dot_dimension_numbers<[1], [0], [0], [1], [0, 0, 1, 1], [], []>} : vector<1x10xf32>, vector<10x32xf32>, vector<1x32xf32> -> vector<1x32xf32>
    %488 = tpu.concatenate %468, %487 in 1 : vector<1x32xf32>, vector<1x32xf32> -> vector<1x64xf32>
    %c0_223 = arith.constant 0 : index
    %c0_224 = arith.constant 0 : index
    %489 = vector.load %arg6[%c0_223, %c0_224] : memref<64x32xf32, #tpu.memory_space<vmem>>, vector<64x32xf32>
    %cst_225 = arith.constant dense<0.000000e+00> : vector<1x32xf32>
    %490 = tpu.matmul %488, %489, %cst_225 {dimension_numbers = #tpu.dot_dimension_numbers<[1], [0], [0], [1], [0, 0, 1, 1], [], []>} : vector<1x64xf32>, vector<64x32xf32>, vector<1x32xf32> -> vector<1x32xf32>
    %c0_226 = arith.constant 0 : index
    %c0_227 = arith.constant 0 : index
    %491 = vector.load %arg7[%c0_226, %c0_227] : memref<1x32xf32, #tpu.memory_space<vmem>>, vector<1x32xf32>
    %492 = arith.addf %490, %491 : vector<1x32xf32>
    %cst_228 = arith.constant 0.000000e+00 : f32
    %493 = vector.broadcast %cst_228 : f32 to vector<1x32xf32>
    %494 = arith.maximumf %492, %493 : vector<1x32xf32>
    %495 = tpu.concatenate %494, %444 in 1 : vector<1x32xf32>, vector<1x32xf32> -> vector<1x64xf32>
    %c0_229 = arith.constant 0 : index
    %c0_230 = arith.constant 0 : index
    %496 = vector.load %arg8[%c0_229, %c0_230] : memref<64x256xf32, #tpu.memory_space<vmem>>, vector<64x256xf32>
    %cst_231 = arith.constant dense<0.000000e+00> : vector<1x256xf32>
    %497 = tpu.matmul %495, %496, %cst_231 {dimension_numbers = #tpu.dot_dimension_numbers<[1], [0], [0], [1], [0, 0, 1, 1], [], []>} : vector<1x64xf32>, vector<64x256xf32>, vector<1x256xf32> -> vector<1x256xf32>
    %c0_232 = arith.constant 0 : index
    %c0_233 = arith.constant 0 : index
    %498 = vector.load %arg9[%c0_232, %c0_233] : memref<1x256xf32, #tpu.memory_space<vmem>>, vector<1x256xf32>
    %499 = arith.addf %497, %498 : vector<1x256xf32>
    %500 = vector.extract_strided_slice %499 {offsets = [0, 0], sizes = [1, 96], strides = [1, 1]} : vector<1x256xf32> to vector<1x96xf32>
    %501 = vector.extract_strided_slice %499 {offsets = [0, 128], sizes = [1, 96], strides = [1, 1]} : vector<1x256xf32> to vector<1x96xf32>
    %502 = vector.extract_strided_slice %500 {offsets = [0, 0], sizes = [1, 64], strides = [1, 1]} : vector<1x96xf32> to vector<1x64xf32>
    %503 = vector.extract_strided_slice %501 {offsets = [0, 0], sizes = [1, 64], strides = [1, 1]} : vector<1x96xf32> to vector<1x64xf32>
    %504 = arith.addf %502, %503 : vector<1x64xf32>
    %505 = arith.negf %504 : vector<1x64xf32>
    %506 = math.exp %505 : vector<1x64xf32>
    %cst_234 = arith.constant 1.000000e+00 : f32
    %507 = vector.broadcast %cst_234 : f32 to vector<1x64xf32>
    %508 = arith.addf %507, %506 : vector<1x64xf32>
    %509 = arith.divf %507, %508 : vector<1x64xf32>
    %510 = vector.extract_strided_slice %509 {offsets = [0, 0], sizes = [1, 32], strides = [1, 1]} : vector<1x64xf32> to vector<1x32xf32>
    %511 = vector.extract_strided_slice %509 {offsets = [0, 32], sizes = [1, 32], strides = [1, 1]} : vector<1x64xf32> to vector<1x32xf32>
    %512 = vector.extract_strided_slice %500 {offsets = [0, 64], sizes = [1, 32], strides = [1, 1]} : vector<1x96xf32> to vector<1x32xf32>
    %513 = vector.extract_strided_slice %501 {offsets = [0, 64], sizes = [1, 32], strides = [1, 1]} : vector<1x96xf32> to vector<1x32xf32>
    %514 = arith.mulf %510, %513 : vector<1x32xf32>
    %515 = arith.addf %512, %514 : vector<1x32xf32>
    %516 = math.tanh %515 : vector<1x32xf32>
    %cst_235 = arith.constant 1.000000e+00 : f32
    %517 = vector.broadcast %cst_235 : f32 to vector<1x32xf32>
    %518 = arith.subf %517, %511 : vector<1x32xf32>
    %519 = arith.mulf %518, %516 : vector<1x32xf32>
    %520 = arith.mulf %511, %444 : vector<1x32xf32>
    %521 = arith.addf %519, %520 : vector<1x32xf32>
    %c0_236 = arith.constant 0 : index
    %c0_237 = arith.constant 0 : index
    %522 = vector.load %arg10[%c0_236, %c0_237] : memref<32x16xf32, #tpu.memory_space<vmem>>, vector<32x16xf32>
    %cst_238 = arith.constant dense<0.000000e+00> : vector<1x16xf32>
    %523 = tpu.matmul %521, %522, %cst_238 {dimension_numbers = #tpu.dot_dimension_numbers<[1], [0], [0], [1], [0, 0, 1, 1], [], []>} : vector<1x32xf32>, vector<32x16xf32>, vector<1x16xf32> -> vector<1x16xf32>
    %c0_239 = arith.constant 0 : index
    %c0_240 = arith.constant 0 : index
    %524 = vector.load %arg11[%c0_239, %c0_240] : memref<1x16xf32, #tpu.memory_space<vmem>>, vector<1x16xf32>
    %525 = arith.addf %523, %524 : vector<1x16xf32>
    %cst_241 = arith.constant dense<0xFF800000> : vector<1xf32>
    %526 = vector.multi_reduction <maximumf>, %525, %cst_241 [1] : vector<1x16xf32> to vector<1xf32>
    %527 = vector.shape_cast %526 : vector<1xf32> to vector<1x1xf32>
    %528 = vector.broadcast %527 : vector<1x1xf32> to vector<1x16xf32>
    %529 = arith.subf %525, %528 : vector<1x16xf32>
    %530 = math.exp %529 : vector<1x16xf32>
    %cst_242 = arith.constant dense<0.000000e+00> : vector<1xf32>
    %531 = vector.multi_reduction <add>, %530, %cst_242 [1] : vector<1x16xf32> to vector<1xf32>
    %532 = vector.shape_cast %531 : vector<1xf32> to vector<1x1xf32>
    %533 = math.log %532 : vector<1x1xf32>
    %534 = vector.broadcast %527 : vector<1x1xf32> to vector<1x16xf32>
    %535 = arith.subf %525, %534 : vector<1x16xf32>
    %536 = vector.broadcast %533 : vector<1x1xf32> to vector<1x16xf32>
    %537 = arith.subf %535, %536 : vector<1x16xf32>
    %538 = arith.index_cast %c6_i32 : i32 to index
    %c0_243 = arith.constant 0 : index
    %539 = vector.load %arg12[%538, %c0_243] : memref<8x16xf32, #tpu.memory_space<vmem>>, vector<1x16xf32>
    tpu.vector_store %arg12[%538, %c0_243], %537 {strides = array<i32>} : memref<8x16xf32, #tpu.memory_space<vmem>>, vector<1x16xf32>,
    %c7_i32 = arith.constant 7 : i32
    %540 = arith.index_cast %c7_i32 : i32 to index
    %541 = memref.load %arg0[%540] : memref<8xi32, #tpu.memory_space<smem>>
    %c0_i32_244 = arith.constant 0 : i32
    %542 = arith.maxsi %541, %c0_i32_244 : i32
    %c15_i32_245 = arith.constant 15 : i32
    %543 = arith.minsi %542, %c15_i32_245 : i32
    %544 = arith.index_cast %543 : i32 to index
    %c0_246 = arith.constant 0 : index
    %545 = vector.load %arg3[%544, %c0_246] : memref<16x32xf32, #tpu.memory_space<vmem>>, vector<1x32xf32>
    %546 = tpu.concatenate %545, %521 in 1 : vector<1x32xf32>, vector<1x32xf32> -> vector<1x64xf32>
    %c0_247 = arith.constant 0 : index
    %c0_248 = arith.constant 0 : index
    %547 = vector.load %arg4[%c0_247, %c0_248] : memref<64x10xf32, #tpu.memory_space<vmem>>, vector<64x10xf32>
    %cst_249 = arith.constant dense<0.000000e+00> : vector<1x10xf32>
    %548 = tpu.matmul %546, %547, %cst_249 {dimension_numbers = #tpu.dot_dimension_numbers<[1], [0], [0], [1], [0, 0, 1, 1], [], []>} : vector<1x64xf32>, vector<64x10xf32>, vector<1x10xf32> -> vector<1x10xf32>
    %c0_250 = arith.constant 0 : index
    %c0_251 = arith.constant 0 : index
    %549 = vector.load %arg5[%c0_250, %c0_251] : memref<1x10xf32, #tpu.memory_space<vmem>>, vector<1x10xf32>
    %550 = arith.addf %548, %549 : vector<1x10xf32>
    %cst_252 = arith.constant dense<0xFF800000> : vector<1xf32>
    %551 = vector.multi_reduction <maximumf>, %550, %cst_252 [1] : vector<1x10xf32> to vector<1xf32>
    %552 = vector.shape_cast %551 : vector<1xf32> to vector<1x1xf32>
    %553 = vector.broadcast %552 : vector<1x1xf32> to vector<1x10xf32>
    %554 = arith.subf %550, %553 : vector<1x10xf32>
    %555 = math.exp %554 : vector<1x10xf32>
    %cst_253 = arith.constant dense<0.000000e+00> : vector<1xf32>
    %556 = vector.multi_reduction <add>, %555, %cst_253 [1] : vector<1x10xf32> to vector<1xf32>
    %557 = vector.shape_cast %556 : vector<1xf32> to vector<1x1xf32>
    %558 = tpu.reciprocal %557 : vector<1x1xf32> -> vector<1x1xf32>
    %559 = vector.broadcast %558 : vector<1x1xf32> to vector<1x10xf32>
    %560 = arith.mulf %555, %559 : vector<1x10xf32>
    %561 = arith.index_cast %c7_i32 : i32 to index
    %c0_254 = arith.constant 0 : index
    %562 = vector.load %arg14[%561, %c0_254] : memref<8x10xf32, #tpu.memory_space<vmem>>, vector<1x10xf32>
    tpu.vector_store %arg14[%561, %c0_254], %560 {strides = array<i32>} : memref<8x10xf32, #tpu.memory_space<vmem>>, vector<1x10xf32>,
    %c0_255 = arith.constant 0 : index
    %c0_256 = arith.constant 0 : index
    %563 = vector.load %arg2[%c0_255, %c0_256] : memref<10x32xf32, #tpu.memory_space<vmem>>, vector<10x32xf32>
    %cst_257 = arith.constant dense<0.000000e+00> : vector<1x32xf32>
    %564 = tpu.matmul %560, %563, %cst_257 {dimension_numbers = #tpu.dot_dimension_numbers<[1], [0], [0], [1], [0, 0, 1, 1], [], []>} : vector<1x10xf32>, vector<10x32xf32>, vector<1x32xf32> -> vector<1x32xf32>
    %565 = tpu.concatenate %545, %564 in 1 : vector<1x32xf32>, vector<1x32xf32> -> vector<1x64xf32>
    %c0_258 = arith.constant 0 : index
    %c0_259 = arith.constant 0 : index
    %566 = vector.load %arg6[%c0_258, %c0_259] : memref<64x32xf32, #tpu.memory_space<vmem>>, vector<64x32xf32>
    %cst_260 = arith.constant dense<0.000000e+00> : vector<1x32xf32>
    %567 = tpu.matmul %565, %566, %cst_260 {dimension_numbers = #tpu.dot_dimension_numbers<[1], [0], [0], [1], [0, 0, 1, 1], [], []>} : vector<1x64xf32>, vector<64x32xf32>, vector<1x32xf32> -> vector<1x32xf32>
    %c0_261 = arith.constant 0 : index
    %c0_262 = arith.constant 0 : index
    %568 = vector.load %arg7[%c0_261, %c0_262] : memref<1x32xf32, #tpu.memory_space<vmem>>, vector<1x32xf32>
    %569 = arith.addf %567, %568 : vector<1x32xf32>
    %cst_263 = arith.constant 0.000000e+00 : f32
    %570 = vector.broadcast %cst_263 : f32 to vector<1x32xf32>
    %571 = arith.maximumf %569, %570 : vector<1x32xf32>
    %572 = tpu.concatenate %571, %521 in 1 : vector<1x32xf32>, vector<1x32xf32> -> vector<1x64xf32>
    %c0_264 = arith.constant 0 : index
    %c0_265 = arith.constant 0 : index
    %573 = vector.load %arg8[%c0_264, %c0_265] : memref<64x256xf32, #tpu.memory_space<vmem>>, vector<64x256xf32>
    %cst_266 = arith.constant dense<0.000000e+00> : vector<1x256xf32>
    %574 = tpu.matmul %572, %573, %cst_266 {dimension_numbers = #tpu.dot_dimension_numbers<[1], [0], [0], [1], [0, 0, 1, 1], [], []>} : vector<1x64xf32>, vector<64x256xf32>, vector<1x256xf32> -> vector<1x256xf32>
    %c0_267 = arith.constant 0 : index
    %c0_268 = arith.constant 0 : index
    %575 = vector.load %arg9[%c0_267, %c0_268] : memref<1x256xf32, #tpu.memory_space<vmem>>, vector<1x256xf32>
    %576 = arith.addf %574, %575 : vector<1x256xf32>
    %577 = vector.extract_strided_slice %576 {offsets = [0, 0], sizes = [1, 96], strides = [1, 1]} : vector<1x256xf32> to vector<1x96xf32>
    %578 = vector.extract_strided_slice %576 {offsets = [0, 128], sizes = [1, 96], strides = [1, 1]} : vector<1x256xf32> to vector<1x96xf32>
    %579 = vector.extract_strided_slice %577 {offsets = [0, 0], sizes = [1, 64], strides = [1, 1]} : vector<1x96xf32> to vector<1x64xf32>
    %580 = vector.extract_strided_slice %578 {offsets = [0, 0], sizes = [1, 64], strides = [1, 1]} : vector<1x96xf32> to vector<1x64xf32>
    %581 = arith.addf %579, %580 : vector<1x64xf32>
    %582 = arith.negf %581 : vector<1x64xf32>
    %583 = math.exp %582 : vector<1x64xf32>
    %cst_269 = arith.constant 1.000000e+00 : f32
    %584 = vector.broadcast %cst_269 : f32 to vector<1x64xf32>
    %585 = arith.addf %584, %583 : vector<1x64xf32>
    %586 = arith.divf %584, %585 : vector<1x64xf32>
    %587 = vector.extract_strided_slice %586 {offsets = [0, 0], sizes = [1, 32], strides = [1, 1]} : vector<1x64xf32> to vector<1x32xf32>
    %588 = vector.extract_strided_slice %586 {offsets = [0, 32], sizes = [1, 32], strides = [1, 1]} : vector<1x64xf32> to vector<1x32xf32>
    %589 = vector.extract_strided_slice %577 {offsets = [0, 64], sizes = [1, 32], strides = [1, 1]} : vector<1x96xf32> to vector<1x32xf32>
    %590 = vector.extract_strided_slice %578 {offsets = [0, 64], sizes = [1, 32], strides = [1, 1]} : vector<1x96xf32> to vector<1x32xf32>
    %591 = arith.mulf %587, %590 : vector<1x32xf32>
    %592 = arith.addf %589, %591 : vector<1x32xf32>
    %593 = math.tanh %592 : vector<1x32xf32>
    %cst_270 = arith.constant 1.000000e+00 : f32
    %594 = vector.broadcast %cst_270 : f32 to vector<1x32xf32>
    %595 = arith.subf %594, %588 : vector<1x32xf32>
    %596 = arith.mulf %595, %593 : vector<1x32xf32>
    %597 = arith.mulf %588, %521 : vector<1x32xf32>
    %598 = arith.addf %596, %597 : vector<1x32xf32>
    %c0_271 = arith.constant 0 : index
    %c0_272 = arith.constant 0 : index
    %599 = vector.load %arg10[%c0_271, %c0_272] : memref<32x16xf32, #tpu.memory_space<vmem>>, vector<32x16xf32>
    %cst_273 = arith.constant dense<0.000000e+00> : vector<1x16xf32>
    %600 = tpu.matmul %598, %599, %cst_273 {dimension_numbers = #tpu.dot_dimension_numbers<[1], [0], [0], [1], [0, 0, 1, 1], [], []>} : vector<1x32xf32>, vector<32x16xf32>, vector<1x16xf32> -> vector<1x16xf32>
    %c0_274 = arith.constant 0 : index
    %c0_275 = arith.constant 0 : index
    %601 = vector.load %arg11[%c0_274, %c0_275] : memref<1x16xf32, #tpu.memory_space<vmem>>, vector<1x16xf32>
    %602 = arith.addf %600, %601 : vector<1x16xf32>
    %cst_276 = arith.constant dense<0xFF800000> : vector<1xf32>
    %603 = vector.multi_reduction <maximumf>, %602, %cst_276 [1] : vector<1x16xf32> to vector<1xf32>
    %604 = vector.shape_cast %603 : vector<1xf32> to vector<1x1xf32>
    %605 = vector.broadcast %604 : vector<1x1xf32> to vector<1x16xf32>
    %606 = arith.subf %602, %605 : vector<1x16xf32>
    %607 = math.exp %606 : vector<1x16xf32>
    %cst_277 = arith.constant dense<0.000000e+00> : vector<1xf32>
    %608 = vector.multi_reduction <add>, %607, %cst_277 [1] : vector<1x16xf32> to vector<1xf32>
    %609 = vector.shape_cast %608 : vector<1xf32> to vector<1x1xf32>
    %610 = math.log %609 : vector<1x1xf32>
    %611 = vector.broadcast %604 : vector<1x1xf32> to vector<1x16xf32>
    %612 = arith.subf %602, %611 : vector<1x16xf32>
    %613 = vector.broadcast %610 : vector<1x1xf32> to vector<1x16xf32>
    %614 = arith.subf %612, %613 : vector<1x16xf32>
    %615 = arith.index_cast %c7_i32 : i32 to index
    %c0_278 = arith.constant 0 : index
    %616 = vector.load %arg12[%615, %c0_278] : memref<8x16xf32, #tpu.memory_space<vmem>>, vector<1x16xf32>
    tpu.vector_store %arg12[%615, %c0_278], %614 {strides = array<i32>} : memref<8x16xf32, #tpu.memory_space<vmem>>, vector<1x16xf32>,
    %c8_i32 = arith.constant 8 : i32
    %c0_279 = arith.constant 0 : index
    %c0_280 = arith.constant 0 : index
    %617 = vector.load %arg13[%c0_279, %c0_280] : memref<1x32xf32, #tpu.memory_space<vmem>>, vector<1x32xf32>
    tpu.vector_store %arg13[%c0_279, %c0_280], %598 {strides = array<i32>} : memref<1x32xf32, #tpu.memory_space<vmem>>, vector<1x32xf32>,
    return
  }
}

</mosaic_0001>

<llo_original>
// kernel: _attn_decoder_decode.1
$region0: #{_attn_decoder_decode.1}
  #allocation0 [shape = 'u32[]', space=smem, size = 0x4, offset = 0x4, fixed_abs, tag = 'smem constant byte address 0x4 - core index']
  #allocation1 [shape = 'u32[72,128]{1,0:T(1,128)}', space=vmem, size = 0x9000, scoped, tag = 'internal scratch']
  %s0 = inlined_call_operand.vmem [shape: s32[8], index: 0, kind: input, shape index: {}]
  %s1 = inlined_call_operand.vmem [shape: f32[1,32], index: 1, kind: input, shape index: {}]
  %s2 = inlined_call_operand.vmem [shape: f32[10,32], index: 2, kind: input, shape index: {}]
  %s3 = inlined_call_operand.vmem [shape: f32[16,32], index: 3, kind: input, shape index: {}]
  %s4 = inlined_call_operand.vmem [shape: f32[64,10], index: 4, kind: input, shape index: {}]
  %s5 = inlined_call_operand.vmem [shape: f32[1,10], index: 5, kind: input, shape index: {}]
  %s6 = inlined_call_operand.vmem [shape: f32[64,32], index: 6, kind: input, shape index: {}]
  %s7 = inlined_call_operand.vmem [shape: f32[1,32], index: 7, kind: input, shape index: {}]
  %s8 = inlined_call_operand.vmem [shape: f32[64,256], index: 8, kind: input, shape index: {}]
  %s9 = inlined_call_operand.vmem [shape: f32[1,256], index: 9, kind: input, shape index: {}]
  %s10 = inlined_call_operand.vmem [shape: f32[32,16], index: 10, kind: input, shape index: {}]
  %s11 = inlined_call_operand.vmem [shape: f32[1,16], index: 11, kind: input, shape index: {}]
  %s12 = inlined_call_operand.hbm [shape: f32[8,16], index: 12, kind: output, shape index: {0}]
  %s13 = inlined_call_operand.hbm [shape: f32[1,32], index: 13, kind: output, shape index: {1}]
  %s14 = inlined_call_operand.hbm [shape: f32[8,10], index: 14, kind: output, shape index: {2}]
  %15 = xla_tuple %s12, %s13, %s14
  %s16 = sld [smem:[#allocation0]]
  $region78: #{_attn_decoder_decode.1} parent=0
    _
  %s18 = ssub.s32 1, %s16
  %s19 = scalar_select 0, %s18, %s16
  $region1: #{_attn_decoder_decode.1} parent=0
    #allocation2 [shape = 'u8[512]{0}', space=smem, size = 0x200, scoped, tag = 'input window, operand 0, single buffered']
    #allocation3 [shape = 's32[1]{0}', space=sflag, size = 0x4, scoped, tag = 'scoped memory for _attn_decoder_decode.1']
    #allocation4 [shape = 's32[1]{0}', space=sflag, size = 0x4, scoped, tag = 'scoped memory for _attn_decoder_decode.1']
    #allocation5 [shape = 'u8[4096]{0}', space=vmem, size = 0x1000, scoped, tag = 'output window, operand 0, single buffered']
    #allocation6 [shape = 'u8[512]{0}', space=vmem, size = 0x400, scoped, tag = 'output window, operand 1, single buffered']
    #allocation7 [shape = 's32[1]{0}', space=sflag, size = 0x4, scoped, tag = 'scoped memory for _attn_decoder_decode.1']
    #allocation8 [shape = 'u8[4096]{0}', space=vmem, size = 0x1000, scoped, tag = 'output window, operand 2, single buffered']
    %20 = vsyncpa [#allocation4], 0
    %21 = vsyncpa [#allocation3], 0
    %22 = vsyncpa [#allocation7], 0
    // Predicated region
    $region2: #{_attn_decoder_decode.1} parent=1 // pred_check
      _
    $region3: #{_attn_decoder_decode.1} parent=1 // pred_check_branch
      %24 = sbr.rel (0) target = $region5
    $region4: #{_attn_decoder_decode.1} parent=1 // pred_region
      %26 = vsyncadd [#allocation4], 0
      %s28 = sshll.u32 %s0, 4
      %s29 = int_to_ptr.vmem [resolvable:$true] %s28
      %31 = dma.vmem_to_smem %s29, 16, [#allocation2], [#allocation4]
    $region5: #{_attn_decoder_decode.1} parent=1 // pred_fallthru
      _
    // Predicated region
    $region6: #{_attn_decoder_decode.1} parent=1 // pred_check
      _
    $region7: #{_attn_decoder_decode.1} parent=1 // pred_check_branch
      %33 = sbr.rel (0) target = $region9
    $region8: #{_attn_decoder_decode.1} parent=1 // pred_region
      _
    $region9: #{_attn_decoder_decode.1} parent=1 // pred_fallthru
      _
    // Predicated region
    $region10: #{_attn_decoder_decode.1} parent=1 // pred_check
      _
    $region11: #{_attn_decoder_decode.1} parent=1 // pred_check_branch
      %35 = sbr.rel (0) target = $region13
    $region12: #{_attn_decoder_decode.1} parent=1 // pred_region
      _
    $region13: #{_attn_decoder_decode.1} parent=1 // pred_fallthru
      _
    // Predicated region
    $region14: #{_attn_decoder_decode.1} parent=1 // pred_check
      _
    $region15: #{_attn_decoder_decode.1} parent=1 // pred_check_branch
      %37 = sbr.rel (0) target = $region17
    $region16: #{_attn_decoder_decode.1} parent=1 // pred_region
      _
    $region17: #{_attn_decoder_decode.1} parent=1 // pred_fallthru
      _
    // Predicated region
    $region18: #{_attn_decoder_decode.1} parent=1 // pred_check
      _
    $region19: #{_attn_decoder_decode.1} parent=1 // pred_check_branch
      %39 = sbr.rel (0) target = $region21
    $region20: #{_attn_decoder_decode.1} parent=1 // pred_region
      _
    $region21: #{_attn_decoder_decode.1} parent=1 // pred_fallthru
      _
    // Predicated region
    $region22: #{_attn_decoder_decode.1} parent=1 // pred_check
      _
    $region23: #{_attn_decoder_decode.1} parent=1 // pred_check_branch
      %41 = sbr.rel (0) target = $region25
    $region24: #{_attn_decoder_decode.1} parent=1 // pred_region
      _
    $region25: #{_attn_decoder_decode.1} parent=1 // pred_fallthru
      _
    // Predicated region
    $region26: #{_attn_decoder_decode.1} parent=1 // pred_check
      _
    $region27: #{_attn_decoder_decode.1} parent=1 // pred_check_branch
      %43 = sbr.rel (0) target = $region29
    $region28: #{_attn_decoder_decode.1} parent=1 // pred_region
      _
    $region29: #{_attn_decoder_decode.1} parent=1 // pred_fallthru
      _
    // Predicated region
    $region30: #{_attn_decoder_decode.1} parent=1 // pred_check
      _
    $region31: #{_attn_decoder_decode.1} parent=1 // pred_check_branch
      %45 = sbr.rel (0) target = $region33
    $region32: #{_attn_decoder_decode.1} parent=1 // pred_region
      _
    $region33: #{_attn_decoder_decode.1} parent=1 // pred_fallthru
      _
    // Predicated region
    $region34: #{_attn_decoder_decode.1} parent=1 // pred_check
      _
    $region35: #{_attn_decoder_decode.1} parent=1 // pred_check_branch
      %47 = sbr.rel (0) target = $region37
    $region36: #{_attn_decoder_decode.1} parent=1 // pred_region
      _
    $region37: #{_attn_decoder_decode.1} parent=1 // pred_fallthru
      _
    // Predicated region
    $region38: #{_attn_decoder_decode.1} parent=1 // pred_check
      _
    $region39: #{_attn_decoder_decode.1} parent=1 // pred_check_branch
      %49 = sbr.rel (0) target = $region41
    $region40: #{_attn_decoder_decode.1} parent=1 // pred_region
      _
    $region41: #{_attn_decoder_decode.1} parent=1 // pred_fallthru
      _
    // Predicated region
    $region42: #{_attn_decoder_decode.1} parent=1 // pred_check
      _
    $region43: #{_attn_decoder_decode.1} parent=1 // pred_check_branch
      %51 = sbr.rel (0) target = $region45
    $region44: #{_attn_decoder_decode.1} parent=1 // pred_region
      _
    $region45: #{_attn_decoder_decode.1} parent=1 // pred_fallthru
      _
    // Predicated region
    $region46: #{_attn_decoder_decode.1} parent=1 // pred_check
      _
    $region47: #{_attn_decoder_decode.1} parent=1 // pred_check_branch
      %53 = sbr.rel (0) target = $region49
    $region48: #{_attn_decoder_decode.1} parent=1 // pred_region
      _
    $region49: #{_attn_decoder_decode.1} parent=1 // pred_fallthru
      _
    // Predicated region
    $region50: #{_attn_decoder_decode.1} parent=1 // pred_check
      _
    $region51: #{_attn_decoder_decode.1} parent=1 // pred_check_branch
      %55 = sbr.rel (0) target = $region53
    $region52: #{_attn_decoder_decode.1} parent=1 // pred_region
      %57 = dma.done [#allocation4], 16
    $region53: #{_attn_decoder_decode.1} parent=1 // pred_fallthru
      _
    %58 = sfence
    %v59 = vld [vmem:[%s1] sm:$0x1]
    %s60 = sld [smem:[#allocation2]]
    %p61 = scmp.gt.s32.totalorder %s60, 0
    %s62 = scalar_select %p61, %s60, 0
    %p63 = scmp.lt.s32.totalorder %s62, 15
    %s64 = scalar_select %p63, %s62, 15
    %s65 = scalar_lea.vmem %s3, %s64
    %v66 = vld [vmem:[%s65] sm:$0x1]
    %v68 = vperm.slane %v59, 0
    %69 = vrot.lane.b32.xlu0 %v68, 32
    %v70 = vpop.permute.xlu0 %69
    %vm72 = vcmask 261120
    %v73 = vsel %vm72, %v66, %v70
    %v74 = vld [vmem:[%s4] sm:$0xff]
    %v75 = vld [vmem:[%s4 + $0x8] sm:$0xff]
    %v76 = vld [vmem:[%s4 + $0x10] sm:$0xff]
    %v77 = vld [vmem:[%s4 + $0x18] sm:$0xff]
    %v78 = vld [vmem:[%s4 + $0x20] sm:$0xff]
    %v79 = vld [vmem:[%s4 + $0x28] sm:$0xff]
    %v80 = vld [vmem:[%s4 + $0x30] sm:$0xff]
    %v81 = vld [vmem:[%s4 + $0x38] sm:$0xff]
    %v82 = vld [vmem:[%s5] sm:$0x1]
    %vm83 = vcmask 523264
    %v85 = vsel %vm83, %v73, 0
    %87 = vmatpush.msra.mxu0 0.0
    %88 = vmatpush.msra.mxu0 0.0
    %89 = vmatpush.msra.mxu0 0.0
    %90 = vmatpush.msra.mxu0 0.0
    %91 = vmatpush.msra.mxu0 0.0
    %92 = vmatpush.msra.mxu0 0.0
    %93 = vmatpush.msra.mxu0 0.0
    %94 = vmatpush.msra.mxu0 0.0
    %95 = vmatpush.msra.mxu0 %v81
    %96 = vmatpush.msra.mxu0 %v80
    %97 = vmatpush.msra.mxu0 %v79
    %98 = vmatpush.msra.mxu0 %v78
    %99 = vmatpush.msra.mxu0 %v77
    %100 = vmatpush.msra.mxu0 %v76
    %101 = vmatpush.msra.mxu0 %v75
    %102 = vmatpush.msra.mxu0 %v74
    %103 = vmatmul.f32.gmra.mxu0 %v85
    %v104 = vpop.f32.mrf.mxu0
    %v105 = vadd.f32 %v82, %v104
    %106 = vdwg.mxu0
    %vm107 = vcmask 73728
    %v108 = vsel %vm107, %v105, -inf
    %109 = vmax.xlane.f32.xlu0 %v108
    %v110 = vpop.xlane.xlu0 %109
    %v111 = vsub.f32 %v105, %v110
    %v112 = vmul.f32 %v111, 1.442695
    %v113 = vpow.pop %v112
    %v114 = vsel %vm107, %v113, 0.0
    %115 = vadd.xlane.f32.xlu0 %v114
    %v116 = vpop.xlane.xlu0 %115
    %v117 = vrcp.pop %v116
    %v118 = vmul.f32 %v116, %v117
    %v119 = vsub.f32 1.0, %v118
    %v120 = vmul.f32 %v117, %v119
    %v121 = vadd.f32 %v117, %v120
    %vm122 = vweird.f32 %v116
    %vm123 = vweird.f32 %v117
    %vm124 = vmor %vm122, %vm123
    %v125 = vsel %vm124, %v117, %v121
    %v126 = vand.u32 2147483647, %v116
    %vm127 = vcmp.eq.f32.partialorder %v126, 8.507059e+37
    %v128 = vand.u32 %v116, 2147483648
    %v129 = vor.u32 1.1754944e-38, %v128
    %v130 = vsel %vm127, %v129, %v125
    %v131 = vmul.f32 %v113, %v130
    %132 = vst.msk [vmem:[#allocation8] sm:$0x1] %vm107, %v131
    %v133 = vld [vmem:[%s2] sm:$0xff]
    %v134 = vld [vmem:[%s2 + $0x8] sm:$0x3]
    %vm135 = vcmask 80896
    %v137 = vsel %vm135, %v131, 0
    %vm139 = vcmask 1041408
    %v141 = vsel %vm139, %v134, 0
    %143 = vmatpush.msra.mxu0 0.0
    %144 = vmatpush.msra.mxu0 0.0
    %145 = vmatpush.msra.mxu0 0.0
    %146 = vmatpush.msra.mxu0 0.0
    %147 = vmatpush.msra.mxu0 0.0
    %148 = vmatpush.msra.mxu0 0.0
    %149 = vmatpush.msra.mxu0 0.0
    %150 = vmatpush.msra.mxu0 0.0
    %151 = vmatpush.msra.mxu0 0.0
    %152 = vmatpush.msra.mxu0 0.0
    %153 = vmatpush.msra.mxu0 0.0
    %154 = vmatpush.msra.mxu0 0.0
    %155 = vmatpush.msra.mxu0 0.0
    %156 = vmatpush.msra.mxu0 0.0
    %157 = vmatpush.msra.mxu0 %v141
    %158 = vmatpush.msra.mxu0 %v133
    %159 = vmatmul.f32.gmra.mxu0 %v137
    %v160 = vpop.f32.mrf.mxu0
    %v161 = vadd.f32 0.0, %v160
    %162 = vdwg.mxu0
    %164 = vrot.lane.b32.xlu0 %v161, 32
    %v165 = vpop.permute.xlu0 %164
    %v167 = vsel %vm72, %v66, %v165
    %v168 = vld [vmem:[%s6] sm:$0xff]
    %v169 = vld [vmem:[%s6 + $0x8] sm:$0xff]
    %v170 = vld [vmem:[%s6 + $0x10] sm:$0xff]
    %v171 = vld [vmem:[%s6 + $0x18] sm:$0xff]
    %v172 = vld [vmem:[%s6 + $0x20] sm:$0xff]
    %v173 = vld [vmem:[%s6 + $0x28] sm:$0xff]
    %v174 = vld [vmem:[%s6 + $0x30] sm:$0xff]
    %v175 = vld [vmem:[%s6 + $0x38] sm:$0xff]
    %v176 = vld [vmem:[%s7] sm:$0x1]
    %v178 = vsel %vm83, %v167, 0
    %180 = vmatpush.msra.mxu0 0.0
    %181 = vmatpush.msra.mxu0 0.0
    %182 = vmatpush.msra.mxu0 0.0
    %183 = vmatpush.msra.mxu0 0.0
    %184 = vmatpush.msra.mxu0 0.0
    %185 = vmatpush.msra.mxu0 0.0
    %186 = vmatpush.msra.mxu0 0.0
    %187 = vmatpush.msra.mxu0 0.0
    %188 = vmatpush.msra.mxu0 %v175
    %189 = vmatpush.msra.mxu0 %v174
    %190 = vmatpush.msra.mxu0 %v173
    %191 = vmatpush.msra.mxu0 %v172
    %192 = vmatpush.msra.mxu0 %v171
    %193 = vmatpush.msra.mxu0 %v170
    %194 = vmatpush.msra.mxu0 %v169
    %195 = vmatpush.msra.mxu0 %v168
    %196 = vmatmul.f32.gmra.mxu0 %v178
    %v197 = vpop.f32.mrf.mxu0
    %v198 = vadd.f32 %v176, %v197
    %199 = vdwg.mxu0
    %v200 = vmax.f32 %v198, 0.0
    %v201 = vsel %vm72, %v200, %v70
    %v202 = vld [vmem:[%s8] sm:$0xff]
    %v203 = vld [vmem:[%s8 + $0x8] sm:$0xff]
    %v204 = vld [vmem:[%s8 + $0x10] sm:$0xff]
    %v205 = vld [vmem:[%s8 + $0x18] sm:$0xff]
    %v206 = vld [vmem:[%s8 + $0x20] sm:$0xff]
    %v207 = vld [vmem:[%s8 + $0x28] sm:$0xff]
    %v208 = vld [vmem:[%s8 + $0x30] sm:$0xff]
    %v209 = vld [vmem:[%s8 + $0x38] sm:$0xff]
    %v210 = vld [vmem:[%s8 + $0x40] sm:$0xff]
    %v211 = vld [vmem:[%s8 + $0x48] sm:$0xff]
    %v212 = vld [vmem:[%s8 + $0x50] sm:$0xff]
    %v213 = vld [vmem:[%s8 + $0x58] sm:$0xff]
    %v214 = vld [vmem:[%s8 + $0x60] sm:$0xff]
    %v215 = vld [vmem:[%s8 + $0x68] sm:$0xff]
    %v216 = vld [vmem:[%s8 + $0x70] sm:$0xff]
    %v217 = vld [vmem:[%s8 + $0x78] sm:$0xff]
    %v218 = vld [vmem:[%s9] sm:$0x3]
    %v220 = vperm.slane %v218, 0
    %v221 = vperm.slane %v218, 1
    %v225 = vsel %vm83, %v201, 0
    %227 = vmatpush.msra.mxu0 0.0
    %228 = vmatpush.msra.mxu0 0.0
    %229 = vmatpush.msra.mxu0 0.0
    %230 = vmatpush.msra.mxu0 0.0
    %231 = vmatpush.msra.mxu0 0.0
    %232 = vmatpush.msra.mxu0 0.0
    %233 = vmatpush.msra.mxu0 0.0
    %234 = vmatpush.msra.mxu0 0.0
    %235 = vmatpush.msra.mxu0 %v216
    %236 = vmatpush.msra.mxu0 %v214
    %237 = vmatpush.msra.mxu0 %v212
    %238 = vmatpush.msra.mxu0 %v210
    %239 = vmatpush.msra.mxu0 %v208
    %240 = vmatpush.msra.mxu0 %v206
    %241 = vmatpush.msra.mxu0 %v204
    %242 = vmatpush.msra.mxu0 %v202
    %243 = vmatmul.f32.gmra.mxu0 %v225
    %v244 = vpop.f32.mrf.mxu0
    %v245 = vadd.f32 %v220, %v244
    %246 = vdwg.mxu0
    %247 = vmatpush.msra.mxu0 0.0
    %248 = vmatpush.msra.mxu0 0.0
    %249 = vmatpush.msra.mxu0 0.0
    %250 = vmatpush.msra.mxu0 0.0
    %251 = vmatpush.msra.mxu0 0.0
    %252 = vmatpush.msra.mxu0 0.0
    %253 = vmatpush.msra.mxu0 0.0
    %254 = vmatpush.msra.mxu0 0.0
    %255 = vmatpush.msra.mxu0 %v217
    %256 = vmatpush.msra.mxu0 %v215
    %257 = vmatpush.msra.mxu0 %v213
    %258 = vmatpush.msra.mxu0 %v211
    %259 = vmatpush.msra.mxu0 %v209
    %260 = vmatpush.msra.mxu0 %v207
    %261 = vmatpush.msra.mxu0 %v205
    %262 = vmatpush.msra.mxu0 %v203
    %263 = vmatmul.f32.gmra.mxu0 %v225
    %v264 = vpop.f32.mrf.mxu0
    %v265 = vadd.f32 %v221, %v264
    %266 = vdwg.mxu0
    %v267 = vadd.f32 %v245, %v265
    %v268 = vxor.u32 %v267, 2147483648
    %v269 = vmul.f32 %v268, 1.442695
    %v270 = vpow.pop %v269
    %v271 = vadd.f32 %v270, 1.0
    %v272 = vrcp.pop %v271
    %v273 = vmul.f32 %v271, %v272
    %v274 = vsub.f32 1.0, %v273
    %v275 = vmul.f32 %v272, %v274
    %v276 = vadd.f32 %v272, %v275
    %vm277 = vweird.f32 %v271
    %vm278 = vweird.f32 %v272
    %vm279 = vmor %vm277, %vm278
    %v280 = vsel %vm279, %v272, %v276
    %v281 = vand.u32 2147483647, %v271
    %vm282 = vcmp.eq.f32.partialorder %v281, 8.507059e+37
    %v283 = vand.u32 %v271, 2147483648
    %v284 = vor.u32 1.1754944e-38, %v283
    %v285 = vsel %vm282, %v284, %v280
    %v286 = vmul.f32 1.0, %v285
    %288 = vrot.lane.b32.xlu0 %v265, 64
    %v289 = vpop.permute.xlu0 %288
    %v291 = vmul.f32 %v286, %v289
    %293 = vrot.lane.b32.xlu0 %v291, 64
    %v294 = vpop.permute.xlu0 %293
    %v296 = vadd.f32 %v245, %v294
    %v297 = vtanh.pop %v296
    %v298 = vsub.f32 1.0, %v286
    %300 = vrot.lane.b32.xlu0 %v297, 96
    %v301 = vpop.permute.xlu0 %300
    %v303 = vmul.f32 %v298, %v301
    %v304 = vmul.f32 %v286, %v70
    %v305 = vadd.f32 %v303, %v304
    %v306 = vld [vmem:[%s10] sm:$0xff]
    %v307 = vld [vmem:[%s10 + $0x8] sm:$0xff]
    %v308 = vld [vmem:[%s10 + $0x10] sm:$0xff]
    %v309 = vld [vmem:[%s10 + $0x18] sm:$0xff]
    %v310 = vld [vmem:[%s11] sm:$0x1]
    %312 = vrot.lane.b32.xlu0 %v305, 96
    %v313 = vpop.permute.xlu0 %312
    %v314 = vsel %vm72, %v313, 0
    %316 = vmatpush.msra.mxu0 0.0
    %317 = vmatpush.msra.mxu0 0.0
    %318 = vmatpush.msra.mxu0 0.0
    %319 = vmatpush.msra.mxu0 0.0
    %320 = vmatpush.msra.mxu0 0.0
    %321 = vmatpush.msra.mxu0 0.0
    %322 = vmatpush.msra.mxu0 0.0
    %323 = vmatpush.msra.mxu0 0.0
    %324 = vmatpush.msra.mxu0 0.0
    %325 = vmatpush.msra.mxu0 0.0
    %326 = vmatpush.msra.mxu0 0.0
    %327 = vmatpush.msra.mxu0 0.0
    %328 = vmatpush.msra.mxu0 %v309
    %329 = vmatpush.msra.mxu0 %v308
    %330 = vmatpush.msra.mxu0 %v307
    %331 = vmatpush.msra.mxu0 %v306
    %332 = vmatmul.f32.gmra.mxu0 %v314
    %v333 = vpop.f32.mrf.mxu0
    %v334 = vadd.f32 %v310, %v333
    %335 = vdwg.mxu0
    %vm336 = vcmask 122880
    %v337 = vsel %vm336, %v334, -inf
    %338 = vmax.xlane.f32.xlu0 %v337
    %v339 = vpop.xlane.xlu0 %338
    %v340 = vsub.f32 %v334, %v339
    %v341 = vmul.f32 %v340, 1.442695
    %v342 = vpow.pop %v341
    %v343 = vsel %vm336, %v342, 0.0
    %344 = vadd.xlane.f32.xlu0 %v343
    %v345 = vpop.xlane.xlu0 %344
    %v346 = vlog2.pop %v345
    %v347 = vmul.f32 %v346, 0.6931472
    %v348 = vsub.f32 %v340, %v347
    %349 = vst.msk [vmem:[#allocation5] sm:$0x1] %vm336, %v348
    %s350 = sld [smem:[#allocation2 + $0x1]]
    %p351 = scmp.gt.s32.totalorder %s350, 0
    %s352 = scalar_select %p351, %s350, 0
    %p353 = scmp.lt.s32.totalorder %s352, 15
    %s354 = scalar_select %p353, %s352, 15
    %s355 = scalar_lea.vmem %s3, %s354
    %v356 = vld [vmem:[%s355] sm:$0x1]
    %v357 = vsel %vm72, %v356, %v305
    %v358 = vld [vmem:[%s4] sm:$0xff]
    %v359 = vld [vmem:[%s4 + $0x8] sm:$0xff]
    %v360 = vld [vmem:[%s4 + $0x10] sm:$0xff]
    %v361 = vld [vmem:[%s4 + $0x18] sm:$0xff]
    %v362 = vld [vmem:[%s4 + $0x20] sm:$0xff]
    %v363 = vld [vmem:[%s4 + $0x28] sm:$0xff]
    %v364 = vld [vmem:[%s4 + $0x30] sm:$0xff]
    %v365 = vld [vmem:[%s4 + $0x38] sm:$0xff]
    %v366 = vld [vmem:[%s5] sm:$0x1]
    %v368 = vsel %vm83, %v357, 0
    %370 = vmatpush.msra.mxu0 0.0
    %371 = vmatpush.msra.mxu0 0.0
    %372 = vmatpush.msra.mxu0 0.0
    %373 = vmatpush.msra.mxu0 0.0
    %374 = vmatpush.msra.mxu0 0.0
    %375 = vmatpush.msra.mxu0 0.0
    %376 = vmatpush.msra.mxu0 0.0
    %377 = vmatpush.msra.mxu0 0.0
    %378 = vmatpush.msra.mxu0 %v365
    %379 = vmatpush.msra.mxu0 %v364
    %380 = vmatpush.msra.mxu0 %v363
    %381 = vmatpush.msra.mxu0 %v362
    %382 = vmatpush.msra.mxu0 %v361
    %383 = vmatpush.msra.mxu0 %v360
    %384 = vmatpush.msra.mxu0 %v359
    %385 = vmatpush.msra.mxu0 %v358
    %386 = vmatmul.f32.gmra.mxu0 %v368
    %v387 = vpop.f32.mrf.mxu0
    %v388 = vadd.f32 %v366, %v387
    %389 = vdwg.mxu0
    %v390 = vsel %vm107, %v388, -inf
    %391 = vmax.xlane.f32.xlu0 %v390
    %v392 = vpop.xlane.xlu0 %391
    %v393 = vsub.f32 %v388, %v392
    %v394 = vmul.f32 %v393, 1.442695
    %v395 = vpow.pop %v394
    %v396 = vsel %vm107, %v395, 0.0
    %397 = vadd.xlane.f32.xlu0 %v396
    %v398 = vpop.xlane.xlu0 %397
    %v399 = vrcp.pop %v398
    %v400 = vmul.f32 %v398, %v399
    %v401 = vsub.f32 1.0, %v400
    %v402 = vmul.f32 %v399, %v401
    %v403 = vadd.f32 %v399, %v402
    %vm404 = vweird.f32 %v398
    %vm405 = vweird.f32 %v399
    %vm406 = vmor %vm404, %vm405
    %v407 = vsel %vm406, %v399, %v403
    %v408 = vand.u32 2147483647, %v398
    %vm409 = vcmp.eq.f32.partialorder %v408, 8.507059e+37
    %v410 = vand.u32 %v398, 2147483648
    %v411 = vor.u32 1.1754944e-38, %v410
    %v412 = vsel %vm409, %v411, %v407
    %v413 = vmul.f32 %v395, %v412
    %414 = vst.msk [vmem:[#allocation8 + $0x1] sm:$0x1] %vm107, %v413
    %v415 = vld [vmem:[%s2] sm:$0xff]
    %v416 = vld [vmem:[%s2 + $0x8] sm:$0x3]
    %v418 = vsel %vm135, %v413, 0
    %v421 = vsel %vm139, %v416, 0
    %423 = vmatpush.msra.mxu0 0.0
    %424 = vmatpush.msra.mxu0 0.0
    %425 = vmatpush.msra.mxu0 0.0
    %426 = vmatpush.msra.mxu0 0.0
    %427 = vmatpush.msra.mxu0 0.0
    %428 = vmatpush.msra.mxu0 0.0
    %429 = vmatpush.msra.mxu0 0.0
    %430 = vmatpush.msra.mxu0 0.0
    %431 = vmatpush.msra.mxu0 0.0
    %432 = vmatpush.msra.mxu0 0.0
    %433 = vmatpush.msra.mxu0 0.0
    %434 = vmatpush.msra.mxu0 0.0
    %435 = vmatpush.msra.mxu0 0.0
    %436 = vmatpush.msra.mxu0 0.0
    %437 = vmatpush.msra.mxu0 %v421
    %438 = vmatpush.msra.mxu0 %v415
    %439 = vmatmul.f32.gmra.mxu0 %v418
    %v440 = vpop.f32.mrf.mxu0
    %v441 = vadd.f32 0.0, %v440
    %442 = vdwg.mxu0
    %444 = vrot.lane.b32.xlu0 %v441, 32
    %v445 = vpop.permute.xlu0 %444
    %v447 = vsel %vm72, %v356, %v445
    %v448 = vld [vmem:[%s6] sm:$0xff]
    %v449 = vld [vmem:[%s6 + $0x8] sm:$0xff]
    %v450 = vld [vmem:[%s6 + $0x10] sm:$0xff]
    %v451 = vld [vmem:[%s6 + $0x18] sm:$0xff]
    %v452 = vld [vmem:[%s6 + $0x20] sm:$0xff]
    %v453 = vld [vmem:[%s6 + $0x28] sm:$0xff]
    %v454 = vld [vmem:[%s6 + $0x30] sm:$0xff]
    %v455 = vld [vmem:[%s6 + $0x38] sm:$0xff]
    %v456 = vld [vmem:[%s7] sm:$0x1]
    %v458 = vsel %vm83, %v447, 0
    %460 = vmatpush.msra.mxu0 0.0
    %461 = vmatpush.msra.mxu0 0.0
    %462 = vmatpush.msra.mxu0 0.0
    %463 = vmatpush.msra.mxu0 0.0
    %464 = vmatpush.msra.mxu0 0.0
    %465 = vmatpush.msra.mxu0 0.0
    %466 = vmatpush.msra.mxu0 0.0
    %467 = vmatpush.msra.mxu0 0.0
    %468 = vmatpush.msra.mxu0 %v455
    %469 = vmatpush.msra.mxu0 %v454
    %470 = vmatpush.msra.mxu0 %v453
    %471 = vmatpush.msra.mxu0 %v452
    %472 = vmatpush.msra.mxu0 %v451
    %473 = vmatpush.msra.mxu0 %v450
    %474 = vmatpush.msra.mxu0 %v449
    %475 = vmatpush.msra.mxu0 %v448
    %476 = vmatmul.f32.gmra.mxu0 %v458
    %v477 = vpop.f32.mrf.mxu0
    %v478 = vadd.f32 %v456, %v477
    %479 = vdwg.mxu0
    %v480 = vmax.f32 %v478, 0.0
    %v481 = vsel %vm72, %v480, %v305
    %v482 = vld [vmem:[%s8] sm:$0xff]
    %v483 = vld [vmem:[%s8 + $0x8] sm:$0xff]
    %v484 = vld [vmem:[%s8 + $0x10] sm:$0xff]
    %v485 = vld [vmem:[%s8 + $0x18] sm:$0xff]
    %v486 = vld [vmem:[%s8 + $0x20] sm:$0xff]
    %v487 = vld [vmem:[%s8 + $0x28] sm:$0xff]
    %v488 = vld [vmem:[%s8 + $0x30] sm:$0xff]
    %v489 = vld [vmem:[%s8 + $0x38] sm:$0xff]
    %v490 = vld [vmem:[%s8 + $0x40] sm:$0xff]
    %v491 = vld [vmem:[%s8 + $0x48] sm:$0xff]
    %v492 = vld [vmem:[%s8 + $0x50] sm:$0xff]
    %v493 = vld [vmem:[%s8 + $0x58] sm:$0xff]
    %v494 = vld [vmem:[%s8 + $0x60] sm:$0xff]
    %v495 = vld [vmem:[%s8 + $0x68] sm:$0xff]
    %v496 = vld [vmem:[%s8 + $0x70] sm:$0xff]
    %v497 = vld [vmem:[%s8 + $0x78] sm:$0xff]
    %v498 = vld [vmem:[%s9] sm:$0x3]
    %v500 = vperm.slane %v498, 0
    %v501 = vperm.slane %v498, 1
    %v505 = vsel %vm83, %v481, 0
    %507 = vmatpush.msra.mxu0 0.0
    %508 = vmatpush.msra.mxu0 0.0
    %509 = vmatpush.msra.mxu0 0.0
    %510 = vmatpush.msra.mxu0 0.0
    %511 = vmatpush.msra.mxu0 0.0
    %512 = vmatpush.msra.mxu0 0.0
    %513 = vmatpush.msra.mxu0 0.0
    %514 = vmatpush.msra.mxu0 0.0
    %515 = vmatpush.msra.mxu0 %v496
    %516 = vmatpush.msra.mxu0 %v494
    %517 = vmatpush.msra.mxu0 %v492
    %518 = vmatpush.msra.mxu0 %v490
    %519 = vmatpush.msra.mxu0 %v488
    %520 = vmatpush.msra.mxu0 %v486
    %521 = vmatpush.msra.mxu0 %v484
    %522 = vmatpush.msra.mxu0 %v482
    %523 = vmatmul.f32.gmra.mxu0 %v505
    %v524 = vpop.f32.mrf.mxu0
    %v525 = vadd.f32 %v500, %v524
    %526 = vdwg.mxu0
    %527 = vmatpush.msra.mxu0 0.0
    %528 = vmatpush.msra.mxu0 0.0
    %529 = vmatpush.msra.mxu0 0.0
    %530 = vmatpush.msra.mxu0 0.0
    %531 = vmatpush.msra.mxu0 0.0
    %532 = vmatpush.msra.mxu0 0.0
    %533 = vmatpush.msra.mxu0 0.0
    %534 = vmatpush.msra.mxu0 0.0
    %535 = vmatpush.msra.mxu0 %v497
    %536 = vmatpush.msra.mxu0 %v495
    %537 = vmatpush.msra.mxu0 %v493
    %538 = vmatpush.msra.mxu0 %v491
    %539 = vmatpush.msra.mxu0 %v489
    %540 = vmatpush.msra.mxu0 %v487
    %541 = vmatpush.msra.mxu0 %v485
    %542 = vmatpush.msra.mxu0 %v483
    %543 = vmatmul.f32.gmra.mxu0 %v505
    %v544 = vpop.f32.mrf.mxu0
    %v545 = vadd.f32 %v501, %v544
    %546 = vdwg.mxu0
    %v547 = vadd.f32 %v525, %v545
    %v548 = vxor.u32 %v547, 2147483648
    %v549 = vmul.f32 %v548, 1.442695
    %v550 = vpow.pop %v549
    %v551 = vadd.f32 %v550, 1.0
    %v552 = vrcp.pop %v551
    %v553 = vmul.f32 %v551, %v552
    %v554 = vsub.f32 1.0, %v553
    %v555 = vmul.f32 %v552, %v554
    %v556 = vadd.f32 %v552, %v555
    %vm557 = vweird.f32 %v551
    %vm558 = vweird.f32 %v552
    %vm559 = vmor %vm557, %vm558
    %v560 = vsel %vm559, %v552, %v556
    %v561 = vand.u32 2147483647, %v551
    %vm562 = vcmp.eq.f32.partialorder %v561, 8.507059e+37
    %v563 = vand.u32 %v551, 2147483648
    %v564 = vor.u32 1.1754944e-38, %v563
    %v565 = vsel %vm562, %v564, %v560
    %v566 = vmul.f32 1.0, %v565
    %568 = vrot.lane.b32.xlu0 %v545, 64
    %v569 = vpop.permute.xlu0 %568
    %v571 = vmul.f32 %v566, %v569
    %573 = vrot.lane.b32.xlu0 %v571, 64
    %v574 = vpop.permute.xlu0 %573
    %v576 = vadd.f32 %v525, %v574
    %v577 = vtanh.pop %v576
    %v578 = vsub.f32 1.0, %v566
    %580 = vrot.lane.b32.xlu0 %v577, 96
    %v581 = vpop.permute.xlu0 %580
    %v583 = vmul.f32 %v578, %v581
    %v584 = vmul.f32 %v566, %v305
    %v585 = vadd.f32 %v583, %v584
    %v586 = vld [vmem:[%s10] sm:$0xff]
    %v587 = vld [vmem:[%s10 + $0x8] sm:$0xff]
    %v588 = vld [vmem:[%s10 + $0x10] sm:$0xff]
    %v589 = vld [vmem:[%s10 + $0x18] sm:$0xff]
    %v590 = vld [vmem:[%s11] sm:$0x1]
    %592 = vrot.lane.b32.xlu0 %v585, 96
    %v593 = vpop.permute.xlu0 %592
    %v594 = vsel %vm72, %v593, 0
    %596 = vmatpush.msra.mxu0 0.0
    %597 = vmatpush.msra.mxu0 0.0
    %598 = vmatpush.msra.mxu0 0.0
    %599 = vmatpush.msra.mxu0 0.0
    %600 = vmatpush.msra.mxu0 0.0
    %601 = vmatpush.msra.mxu0 0.0
    %602 = vmatpush.msra.mxu0 0.0
    %603 = vmatpush.msra.mxu0 0.0
    %604 = vmatpush.msra.mxu0 0.0
    %605 = vmatpush.msra.mxu0 0.0
    %606 = vmatpush.msra.mxu0 0.0
    %607 = vmatpush.msra.mxu0 0.0
    %608 = vmatpush.msra.mxu0 %v589
    %609 = vmatpush.msra.mxu0 %v588
    %610 = vmatpush.msra.mxu0 %v587
    %611 = vmatpush.msra.mxu0 %v586
    %612 = vmatmul.f32.gmra.mxu0 %v594
    %v613 = vpop.f32.mrf.mxu0
    %v614 = vadd.f32 %v590, %v613
    %615 = vdwg.mxu0
    %v616 = vsel %vm336, %v614, -inf
    %617 = vmax.xlane.f32.xlu0 %v616
    %v618 = vpop.xlane.xlu0 %617
    %v619 = vsub.f32 %v614, %v618
    %v620 = vmul.f32 %v619, 1.442695
    %v621 = vpow.pop %v620
    %v622 = vsel %vm336, %v621, 0.0
    %623 = vadd.xlane.f32.xlu0 %v622
    %v624 = vpop.xlane.xlu0 %623
    %v625 = vlog2.pop %v624
    %v626 = vmul.f32 %v625, 0.6931472
    %v627 = vsub.f32 %v619, %v626
    %628 = vst.msk [vmem:[#allocation5 + $0x1] sm:$0x1] %vm336, %v627
    %s629 = sld [smem:[#allocation2 + $0x2]]
    %p630 = scmp.gt.s32.totalorder %s629, 0
    %s631 = scalar_select %p630, %s629, 0
    %p632 = scmp.lt.s32.totalorder %s631, 15
    %s633 = scalar_select %p632, %s631, 15
    %s634 = scalar_lea.vmem %s3, %s633
    %v635 = vld [vmem:[%s634] sm:$0x1]
    %v636 = vsel %vm72, %v635, %v585
    %v637 = vld [vmem:[%s4] sm:$0xff]
    %v638 = vld [vmem:[%s4 + $0x8] sm:$0xff]
    %v639 = vld [vmem:[%s4 + $0x10] sm:$0xff]
    %v640 = vld [vmem:[%s4 + $0x18] sm:$0xff]
    %v641 = vld [vmem:[%s4 + $0x20] sm:$0xff]
    %v642 = vld [vmem:[%s4 + $0x28] sm:$0xff]
    %v643 = vld [vmem:[%s4 + $0x30] sm:$0xff]
    %v644 = vld [vmem:[%s4 + $0x38] sm:$0xff]
    %v645 = vld [vmem:[%s5] sm:$0x1]
    %v647 = vsel %vm83, %v636, 0
    %649 = vmatpush.msra.mxu0 0.0
    %650 = vmatpush.msra.mxu0 0.0
    %651 = vmatpush.msra.mxu0 0.0
    %652 = vmatpush.msra.mxu0 0.0
    %653 = vmatpush.msra.mxu0 0.0
    %654 = vmatpush.msra.mxu0 0.0
    %655 = vmatpush.msra.mxu0 0.0
    %656 = vmatpush.msra.mxu0 0.0
    %657 = vmatpush.msra.mxu0 %v644
    %658 = vmatpush.msra.mxu0 %v643
    %659 = vmatpush.msra.mxu0 %v642
    %660 = vmatpush.msra.mxu0 %v641
    %661 = vmatpush.msra.mxu0 %v640
    %662 = vmatpush.msra.mxu0 %v639
    %663 = vmatpush.msra.mxu0 %v638
    %664 = vmatpush.msra.mxu0 %v637
    %665 = vmatmul.f32.gmra.mxu0 %v647
    %v666 = vpop.f32.mrf.mxu0
    %v667 = vadd.f32 %v645, %v666
    %668 = vdwg.mxu0
    %v669 = vsel %vm107, %v667, -inf
    %670 = vmax.xlane.f32.xlu0 %v669
    %v671 = vpop.xlane.xlu0 %670
    %v672 = vsub.f32 %v667, %v671
    %v673 = vmul.f32 %v672, 1.442695
    %v674 = vpow.pop %v673
    %v675 = vsel %vm107, %v674, 0.0
    %676 = vadd.xlane.f32.xlu0 %v675
    %v677 = vpop.xlane.xlu0 %676
    %v678 = vrcp.pop %v677
    %v679 = vmul.f32 %v677, %v678
    %v680 = vsub.f32 1.0, %v679
    %v681 = vmul.f32 %v678, %v680
    %v682 = vadd.f32 %v678, %v681
    %vm683 = vweird.f32 %v677
    %vm684 = vweird.f32 %v678
    %vm685 = vmor %vm683, %vm684
    %v686 = vsel %vm685, %v678, %v682
    %v687 = vand.u32 2147483647, %v677
    %vm688 = vcmp.eq.f32.partialorder %v687, 8.507059e+37
    %v689 = vand.u32 %v677, 2147483648
    %v690 = vor.u32 1.1754944e-38, %v689
    %v691 = vsel %vm688, %v690, %v686
    %v692 = vmul.f32 %v674, %v691
    %693 = vst.msk [vmem:[#allocation8 + $0x2] sm:$0x1] %vm107, %v692
    %v694 = vld [vmem:[%s2] sm:$0xff]
    %v695 = vld [vmem:[%s2 + $0x8] sm:$0x3]
    %v697 = vsel %vm135, %v692, 0
    %v700 = vsel %vm139, %v695, 0
    %702 = vmatpush.msra.mxu0 0.0
    %703 = vmatpush.msra.mxu0 0.0
    %704 = vmatpush.msra.mxu0 0.0
    %705 = vmatpush.msra.mxu0 0.0
    %706 = vmatpush.msra.mxu0 0.0
    %707 = vmatpush.msra.mxu0 0.0
    %708 = vmatpush.msra.mxu0 0.0
    %709 = vmatpush.msra.mxu0 0.0
    %710 = vmatpush.msra.mxu0 0.0
    %711 = vmatpush.msra.mxu0 0.0
    %712 = vmatpush.msra.mxu0 0.0
    %713 = vmatpush.msra.mxu0 0.0
    %714 = vmatpush.msra.mxu0 0.0
    %715 = vmatpush.msra.mxu0 0.0
    %716 = vmatpush.msra.mxu0 %v700
    %717 = vmatpush.msra.mxu0 %v694
    %718 = vmatmul.f32.gmra.mxu0 %v697
    %v719 = vpop.f32.mrf.mxu0
    %v720 = vadd.f32 0.0, %v719
    %721 = vdwg.mxu0
    %723 = vrot.lane.b32.xlu0 %v720, 32
    %v724 = vpop.permute.xlu0 %723
    %v726 = vsel %vm72, %v635, %v724
    %v727 = vld [vmem:[%s6] sm:$0xff]
    %v728 = vld [vmem:[%s6 + $0x8] sm:$0xff]
    %v729 = vld [vmem:[%s6 + $0x10] sm:$0xff]
    %v730 = vld [vmem:[%s6 + $0x18] sm:$0xff]
    %v731 = vld [vmem:[%s6 + $0x20] sm:$0xff]
    %v732 = vld [vmem:[%s6 + $0x28] sm:$0xff]
    %v733 = vld [vmem:[%s6 + $0x30] sm:$0xff]
    %v734 = vld [vmem:[%s6 + $0x38] sm:$0xff]
    %v735 = vld [vmem:[%s7] sm:$0x1]
    %v737 = vsel %vm83, %v726, 0
    %739 = vmatpush.msra.mxu0 0.0
    %740 = vmatpush.msra.mxu0 0.0
    %741 = vmatpush.msra.mxu0 0.0
    %742 = vmatpush.msra.mxu0 0.0
    %743 = vmatpush.msra.mxu0 0.0
    %744 = vmatpush.msra.mxu0 0.0
    %745 = vmatpush.msra.mxu0 0.0
    %746 = vmatpush.msra.mxu0 0.0
    %747 = vmatpush.msra.mxu0 %v734
    %748 = vmatpush.msra.mxu0 %v733
    %749 = vmatpush.msra.mxu0 %v732
    %750 = vmatpush.msra.mxu0 %v731
    %751 = vmatpush.msra.mxu0 %v730
    %752 = vmatpush.msra.mxu0 %v729
    %753 = vmatpush.msra.mxu0 %v728
    %754 = vmatpush.msra.mxu0 %v727
    %755 = vmatmul.f32.gmra.mxu0 %v737
    %v756 = vpop.f32.mrf.mxu0
    %v757 = vadd.f32 %v735, %v756
    %758 = vdwg.mxu0
    %v759 = vmax.f32 %v757, 0.0
    %v760 = vsel %vm72, %v759, %v585
    %v761 = vld [vmem:[%s8] sm:$0xff]
    %v762 = vld [vmem:[%s8 + $0x8] sm:$0xff]
    %v763 = vld [vmem:[%s8 + $0x10] sm:$0xff]
    %v764 = vld [vmem:[%s8 + $0x18] sm:$0xff]
    %v765 = vld [vmem:[%s8 + $0x20] sm:$0xff]
    %v766 = vld [vmem:[%s8 + $0x28] sm:$0xff]
    %v767 = vld [vmem:[%s8 + $0x30] sm:$0xff]
    %v768 = vld [vmem:[%s8 + $0x38] sm:$0xff]
    %v769 = vld [vmem:[%s8 + $0x40] sm:$0xff]
    %v770 = vld [vmem:[%s8 + $0x48] sm:$0xff]
    %v771 = vld [vmem:[%s8 + $0x50] sm:$0xff]
    %v772 = vld [vmem:[%s8 + $0x58] sm:$0xff]
    %v773 = vld [vmem:[%s8 + $0x60] sm:$0xff]
    %v774 = vld [vmem:[%s8 + $0x68] sm:$0xff]
    %v775 = vld [vmem:[%s8 + $0x70] sm:$0xff]
    %v776 = vld [vmem:[%s8 + $0x78] sm:$0xff]
    %v777 = vld [vmem:[%s9] sm:$0x3]
    %v779 = vperm.slane %v777, 0
    %v780 = vperm.slane %v777, 1
    %v784 = vsel %vm83, %v760, 0
    %786 = vmatpush.msra.mxu0 0.0
    %787 = vmatpush.msra.mxu0 0.0
    %788 = vmatpush.msra.mxu0 0.0
    %789 = vmatpush.msra.mxu0 0.0
    %790 = vmatpush.msra.mxu0 0.0
    %791 = vmatpush.msra.mxu0 0.0
    %792 = vmatpush.msra.mxu0 0.0
    %793 = vmatpush.msra.mxu0 0.0
    %794 = vmatpush.msra.mxu0 %v775
    %795 = vmatpush.msra.mxu0 %v773
    %796 = vmatpush.msra.mxu0 %v771
    %797 = vmatpush.msra.mxu0 %v769
    %798 = vmatpush.msra.mxu0 %v767
    %799 = vmatpush.msra.mxu0 %v765
    %800 = vmatpush.msra.mxu0 %v763
    %801 = vmatpush.msra.mxu0 %v761
    %802 = vmatmul.f32.gmra.mxu0 %v784
    %v803 = vpop.f32.mrf.mxu0
    %v804 = vadd.f32 %v779, %v803
    %805 = vdwg.mxu0
    %806 = vmatpush.msra.mxu0 0.0
    %807 = vmatpush.msra.mxu0 0.0
    %808 = vmatpush.msra.mxu0 0.0
    %809 = vmatpush.msra.mxu0 0.0
    %810 = vmatpush.msra.mxu0 0.0
    %811 = vmatpush.msra.mxu0 0.0
    %812 = vmatpush.msra.mxu0 0.0
    %813 = vmatpush.msra.mxu0 0.0
    %814 = vmatpush.msra.mxu0 %v776
    %815 = vmatpush.msra.mxu0 %v774
    %816 = vmatpush.msra.mxu0 %v772
    %817 = vmatpush.msra.mxu0 %v770
    %818 = vmatpush.msra.mxu0 %v768
    %819 = vmatpush.msra.mxu0 %v766
    %820 = vmatpush.msra.mxu0 %v764
    %821 = vmatpush.msra.mxu0 %v762
    %822 = vmatmul.f32.gmra.mxu0 %v784
    %v823 = vpop.f32.mrf.mxu0
    %v824 = vadd.f32 %v780, %v823
    %825 = vdwg.mxu0
    %v826 = vadd.f32 %v804, %v824
    %v827 = vxor.u32 %v826, 2147483648
    %v828 = vmul.f32 %v827, 1.442695
    %v829 = vpow.pop %v828
    %v830 = vadd.f32 %v829, 1.0
    %v831 = vrcp.pop %v830
    %v832 = vmul.f32 %v830, %v831
    %v833 = vsub.f32 1.0, %v832
    %v834 = vmul.f32 %v831, %v833
    %v835 = vadd.f32 %v831, %v834
    %vm836 = vweird.f32 %v830
    %vm837 = vweird.f32 %v831
    %vm838 = vmor %vm836, %vm837
    %v839 = vsel %vm838, %v831, %v835
    %v840 = vand.u32 2147483647, %v830
    %vm841 = vcmp.eq.f32.partialorder %v840, 8.507059e+37
    %v842 = vand.u32 %v830, 2147483648
    %v843 = vor.u32 1.1754944e-38, %v842
    %v844 = vsel %vm841, %v843, %v839
    %v845 = vmul.f32 1.0, %v844
    %847 = vrot.lane.b32.xlu0 %v824, 64
    %v848 = vpop.permute.xlu0 %847
    %v850 = vmul.f32 %v845, %v848
    %852 = vrot.lane.b32.xlu0 %v850, 64
    %v853 = vpop.permute.xlu0 %852
    %v855 = vadd.f32 %v804, %v853
    %v856 = vtanh.pop %v855
    %v857 = vsub.f32 1.0, %v845
    %859 = vrot.lane.b32.xlu0 %v856, 96
    %v860 = vpop.permute.xlu0 %859
    %v862 = vmul.f32 %v857, %v860
    %v863 = vmul.f32 %v845, %v585
    %v864 = vadd.f32 %v862, %v863
    %v865 = vld [vmem:[%s10] sm:$0xff]
    %v866 = vld [vmem:[%s10 + $0x8] sm:$0xff]
    %v867 = vld [vmem:[%s10 + $0x10] sm:$0xff]
    %v868 = vld [vmem:[%s10 + $0x18] sm:$0xff]
    %v869 = vld [vmem:[%s11] sm:$0x1]
    %871 = vrot.lane.b32.xlu0 %v864, 96
    %v872 = vpop.permute.xlu0 %871
    %v873 = vsel %vm72, %v872, 0
    %875 = vmatpush.msra.mxu0 0.0
    %876 = vmatpush.msra.mxu0 0.0
    %877 = vmatpush.msra.mxu0 0.0
    %878 = vmatpush.msra.mxu0 0.0
    %879 = vmatpush.msra.mxu0 0.0
    %880 = vmatpush.msra.mxu0 0.0
    %881 = vmatpush.msra.mxu0 0.0
    %882 = vmatpush.msra.mxu0 0.0
    %883 = vmatpush.msra.mxu0 0.0
    %884 = vmatpush.msra.mxu0 0.0
    %885 = vmatpush.msra.mxu0 0.0
    %886 = vmatpush.msra.mxu0 0.0
    %887 = vmatpush.msra.mxu0 %v868
    %888 = vmatpush.msra.mxu0 %v867
    %889 = vmatpush.msra.mxu0 %v866
    %890 = vmatpush.msra.mxu0 %v865
    %891 = vmatmul.f32.gmra.mxu0 %v873
    %v892 = vpop.f32.mrf.mxu0
    %v893 = vadd.f32 %v869, %v892
    %894 = vdwg.mxu0
    %v895 = vsel %vm336, %v893, -inf
    %896 = vmax.xlane.f32.xlu0 %v895
    %v897 = vpop.xlane.xlu0 %896
    %v898 = vsub.f32 %v893, %v897
    %v899 = vmul.f32 %v898, 1.442695
    %v900 = vpow.pop %v899
    %v901 = vsel %vm336, %v900, 0.0
    %902 = vadd.xlane.f32.xlu0 %v901
    %v903 = vpop.xlane.xlu0 %902
    %v904 = vlog2.pop %v903
    %v905 = vmul.f32 %v904, 0.6931472
    %v906 = vsub.f32 %v898, %v905
    %907 = vst.msk [vmem:[#allocation5 + $0x2] sm:$0x1] %vm336, %v906
    %s908 = sld [smem:[#allocation2 + $0x3]]
    %p909 = scmp.gt.s32.totalorder %s908, 0
    %s910 = scalar_select %p909, %s908, 0
    %p911 = scmp.lt.s32.totalorder %s910, 15
    %s912 = scalar_select %p911, %s910, 15
    %s913 = scalar_lea.vmem %s3, %s912
    %v914 = vld [vmem:[%s913] sm:$0x1]
    %v915 = vsel %vm72, %v914, %v864
    %v916 = vld [vmem:[%s4] sm:$0xff]
    %v917 = vld [vmem:[%s4 + $0x8] sm:$0xff]
    %v918 = vld [vmem:[%s4 + $0x10] sm:$0xff]
    %v919 = vld [vmem:[%s4 + $0x18] sm:$0xff]
    %v920 = vld [vmem:[%s4 + $0x20] sm:$0xff]
    %v921 = vld [vmem:[%s4 + $0x28] sm:$0xff]
    %v922 = vld [vmem:[%s4 + $0x30] sm:$0xff]
    %v923 = vld [vmem:[%s4 + $0x38] sm:$0xff]
    %v924 = vld [vmem:[%s5] sm:$0x1]
    %v926 = vsel %vm83, %v915, 0
    %928 = vmatpush.msra.mxu0 0.0
    %929 = vmatpush.msra.mxu0 0.0
    %930 = vmatpush.msra.mxu0 0.0
    %931 = vmatpush.msra.mxu0 0.0
    %932 = vmatpush.msra.mxu0 0.0
    %933 = vmatpush.msra.mxu0 0.0
    %934 = vmatpush.msra.mxu0 0.0
    %935 = vmatpush.msra.mxu0 0.0
    %936 = vmatpush.msra.mxu0 %v923
    %937 = vmatpush.msra.mxu0 %v922
    %938 = vmatpush.msra.mxu0 %v921
    %939 = vmatpush.msra.mxu0 %v920
    %940 = vmatpush.msra.mxu0 %v919
    %941 = vmatpush.msra.mxu0 %v918
    %942 = vmatpush.msra.mxu0 %v917
    %943 = vmatpush.msra.mxu0 %v916
    %944 = vmatmul.f32.gmra.mxu0 %v926
    %v945 = vpop.f32.mrf.mxu0
    %v946 = vadd.f32 %v924, %v945
    %947 = vdwg.mxu0
    %v948 = vsel %vm107, %v946, -inf
    %949 = vmax.xlane.f32.xlu0 %v948
    %v950 = vpop.xlane.xlu0 %949
    %v951 = vsub.f32 %v946, %v950
    %v952 = vmul.f32 %v951, 1.442695
    %v953 = vpow.pop %v952
    %v954 = vsel %vm107, %v953, 0.0
    %955 = vadd.xlane.f32.xlu0 %v954
    %v956 = vpop.xlane.xlu0 %955
    %v957 = vrcp.pop %v956
    %v958 = vmul.f32 %v956, %v957
    %v959 = vsub.f32 1.0, %v958
    %v960 = vmul.f32 %v957, %v959
    %v961 = vadd.f32 %v957, %v960
    %vm962 = vweird.f32 %v956
    %vm963 = vweird.f32 %v957
    %vm964 = vmor %vm962, %vm963
    %v965 = vsel %vm964, %v957, %v961
    %v966 = vand.u32 2147483647, %v956
    %vm967 = vcmp.eq.f32.partialorder %v966, 8.507059e+37
    %v968 = vand.u32 %v956, 2147483648
    %v969 = vor.u32 1.1754944e-38, %v968
    %v970 = vsel %vm967, %v969, %v965
    %v971 = vmul.f32 %v953, %v970
    %972 = vst.msk [vmem:[#allocation8 + $0x3] sm:$0x1] %vm107, %v971
    %v973 = vld [vmem:[%s2] sm:$0xff]
    %v974 = vld [vmem:[%s2 + $0x8] sm:$0x3]
    %v976 = vsel %vm135, %v971, 0
    %v979 = vsel %vm139, %v974, 0
    %981 = vmatpush.msra.mxu0 0.0
    %982 = vmatpush.msra.mxu0 0.0
    %983 = vmatpush.msra.mxu0 0.0
    %984 = vmatpush.msra.mxu0 0.0
    %985 = vmatpush.msra.mxu0 0.0
    %986 = vmatpush.msra.mxu0 0.0
    %987 = vmatpush.msra.mxu0 0.0
    %988 = vmatpush.msra.mxu0 0.0
    %989 = vmatpush.msra.mxu0 0.0
    %990 = vmatpush.msra.mxu0 0.0
    %991 = vmatpush.msra.mxu0 0.0
    %992 = vmatpush.msra.mxu0 0.0
    %993 = vmatpush.msra.mxu0 0.0
    %994 = vmatpush.msra.mxu0 0.0
    %995 = vmatpush.msra.mxu0 %v979
    %996 = vmatpush.msra.mxu0 %v973
    %997 = vmatmul.f32.gmra.mxu0 %v976
    %v998 = vpop.f32.mrf.mxu0
    %v999 = vadd.f32 0.0, %v998
    %1000 = vdwg.mxu0
    %1002 = vrot.lane.b32.xlu0 %v999, 32
    %v1003 = vpop.permute.xlu0 %1002
    %v1005 = vsel %vm72, %v914, %v1003
    %v1006 = vld [vmem:[%s6] sm:$0xff]
    %v1007 = vld [vmem:[%s6 + $0x8] sm:$0xff]
    %v1008 = vld [vmem:[%s6 + $0x10] sm:$0xff]
    %v1009 = vld [vmem:[%s6 + $0x18] sm:$0xff]
    %v1010 = vld [vmem:[%s6 + $0x20] sm:$0xff]
    %v1011 = vld [vmem:[%s6 + $0x28] sm:$0xff]
    %v1012 = vld [vmem:[%s6 + $0x30] sm:$0xff]
    %v1013 = vld [vmem:[%s6 + $0x38] sm:$0xff]
    %v1014 = vld [vmem:[%s7] sm:$0x1]
    %v1016 = vsel %vm83, %v1005, 0
    %1018 = vmatpush.msra.mxu0 0.0
    %1019 = vmatpush.msra.mxu0 0.0
    %1020 = vmatpush.msra.mxu0 0.0
    %1021 = vmatpush.msra.mxu0 0.0
    %1022 = vmatpush.msra.mxu0 0.0
    %1023 = vmatpush.msra.mxu0 0.0
    %1024 = vmatpush.msra.mxu0 0.0
    %1025 = vmatpush.msra.mxu0 0.0
    %1026 = vmatpush.msra.mxu0 %v1013
    %1027 = vmatpush.msra.mxu0 %v1012
    %1028 = vmatpush.msra.mxu0 %v1011
    %1029 = vmatpush.msra.mxu0 %v1010
    %1030 = vmatpush.msra.mxu0 %v1009
    %1031 = vmatpush.msra.mxu0 %v1008
    %1032 = vmatpush.msra.mxu0 %v1007
    %1033 = vmatpush.msra.mxu0 %v1006
    %1034 = vmatmul.f32.gmra.mxu0 %v1016
    %v1035 = vpop.f32.mrf.mxu0
    %v1036 = vadd.f32 %v1014, %v1035
    %1037 = vdwg.mxu0
    %v1038 = vmax.f32 %v1036, 0.0
    %v1039 = vsel %vm72, %v1038, %v864
    %v1040 = vld [vmem:[%s8] sm:$0xff]
    %v1041 = vld [vmem:[%s8 + $0x8] sm:$0xff]
    %v1042 = vld [vmem:[%s8 + $0x10] sm:$0xff]
    %v1043 = vld [vmem:[%s8 + $0x18] sm:$0xff]
    %v1044 = vld [vmem:[%s8 + $0x20] sm:$0xff]
    %v1045 = vld [vmem:[%s8 + $0x28] sm:$0xff]
    %v1046 = vld [vmem:[%s8 + $0x30] sm:$0xff]
    %v1047 = vld [vmem:[%s8 + $0x38] sm:$0xff]
    %v1048 = vld [vmem:[%s8 + $0x40] sm:$0xff]
    %v1049 = vld [vmem:[%s8 + $0x48] sm:$0xff]
    %v1050 = vld [vmem:[%s8 + $0x50] sm:$0xff]
    %v1051 = vld [vmem:[%s8 + $0x58] sm:$0xff]
    %v1052 = vld [vmem:[%s8 + $0x60] sm:$0xff]
    %v1053 = vld [vmem:[%s8 + $0x68] sm:$0xff]
    %v1054 = vld [vmem:[%s8 + $0x70] sm:$0xff]
    %v1055 = vld [vmem:[%s8 + $0x78] sm:$0xff]
    %v1056 = vld [vmem:[%s9] sm:$0x3]
    %v1058 = vperm.slane %v1056, 0
    %v1059 = vperm.slane %v1056, 1
    %v1063 = vsel %vm83, %v1039, 0
    %1065 = vmatpush.msra.mxu0 0.0
    %1066 = vmatpush.msra.mxu0 0.0
    %1067 = vmatpush.msra.mxu0 0.0
    %1068 = vmatpush.msra.mxu0 0.0
    %1069 = vmatpush.msra.mxu0 0.0
    %1070 = vmatpush.msra.mxu0 0.0
    %1071 = vmatpush.msra.mxu0 0.0
    %1072 = vmatpush.msra.mxu0 0.0
    %1073 = vmatpush.msra.mxu0 %v1054
    %1074 = vmatpush.msra.mxu0 %v1052
    %1075 = vmatpush.msra.mxu0 %v1050
    %1076 = vmatpush.msra.mxu0 %v1048
    %1077 = vmatpush.msra.mxu0 %v1046
    %1078 = vmatpush.msra.mxu0 %v1044
    %1079 = vmatpush.msra.mxu0 %v1042
    %1080 = vmatpush.msra.mxu0 %v1040
    %1081 = vmatmul.f32.gmra.mxu0 %v1063
    %v1082 = vpop.f32.mrf.mxu0
    %v1083 = vadd.f32 %v1058, %v1082
    %1084 = vdwg.mxu0
    %1085 = vmatpush.msra.mxu0 0.0
    %1086 = vmatpush.msra.mxu0 0.0
    %1087 = vmatpush.msra.mxu0 0.0
    %1088 = vmatpush.msra.mxu0 0.0
    %1089 = vmatpush.msra.mxu0 0.0
    %1090 = vmatpush.msra.mxu0 0.0
    %1091 = vmatpush.msra.mxu0 0.0
    %1092 = vmatpush.msra.mxu0 0.0
    %1093 = vmatpush.msra.mxu0 %v1055
    %1094 = vmatpush.msra.mxu0 %v1053
    %1095 = vmatpush.msra.mxu0 %v1051
    %1096 = vmatpush.msra.mxu0 %v1049
    %1097 = vmatpush.msra.mxu0 %v1047
    %1098 = vmatpush.msra.mxu0 %v1045
    %1099 = vmatpush.msra.mxu0 %v1043
    %1100 = vmatpush.msra.mxu0 %v1041
    %1101 = vmatmul.f32.gmra.mxu0 %v1063
    %v1102 = vpop.f32.mrf.mxu0
    %v1103 = vadd.f32 %v1059, %v1102
    %1104 = vdwg.mxu0
    %v1105 = vadd.f32 %v1083, %v1103
    %v1106 = vxor.u32 %v1105, 2147483648
    %v1107 = vmul.f32 %v1106, 1.442695
    %v1108 = vpow.pop %v1107
    %v1109 = vadd.f32 %v1108, 1.0
    %v1110 = vrcp.pop %v1109
    %v1111 = vmul.f32 %v1109, %v1110
    %v1112 = vsub.f32 1.0, %v1111
    %v1113 = vmul.f32 %v1110, %v1112
    %v1114 = vadd.f32 %v1110, %v1113
    %vm1115 = vweird.f32 %v1109
    %vm1116 = vweird.f32 %v1110
    %vm1117 = vmor %vm1115, %vm1116
    %v1118 = vsel %vm1117, %v1110, %v1114
    %v1119 = vand.u32 2147483647, %v1109
    %vm1120 = vcmp.eq.f32.partialorder %v1119, 8.507059e+37
    %v1121 = vand.u32 %v1109, 2147483648
    %v1122 = vor.u32 1.1754944e-38, %v1121
    %v1123 = vsel %vm1120, %v1122, %v1118
    %v1124 = vmul.f32 1.0, %v1123
    %1126 = vrot.lane.b32.xlu0 %v1103, 64
    %v1127 = vpop.permute.xlu0 %1126
    %v1129 = vmul.f32 %v1124, %v1127
    %1131 = vrot.lane.b32.xlu0 %v1129, 64
    %v1132 = vpop.permute.xlu0 %1131
    %v1134 = vadd.f32 %v1083, %v1132
    %v1135 = vtanh.pop %v1134
    %v1136 = vsub.f32 1.0, %v1124
    %1138 = vrot.lane.b32.xlu0 %v1135, 96
    %v1139 = vpop.permute.xlu0 %1138
    %v1141 = vmul.f32 %v1136, %v1139
    %v1142 = vmul.f32 %v1124, %v864
    %v1143 = vadd.f32 %v1141, %v1142
    %v1144 = vld [vmem:[%s10] sm:$0xff]
    %v1145 = vld [vmem:[%s10 + $0x8] sm:$0xff]
    %v1146 = vld [vmem:[%s10 + $0x10] sm:$0xff]
    %v1147 = vld [vmem:[%s10 + $0x18] sm:$0xff]
    %v1148 = vld [vmem:[%s11] sm:$0x1]
    %1150 = vrot.lane.b32.xlu0 %v1143, 96
    %v1151 = vpop.permute.xlu0 %1150
    %v1152 = vsel %vm72, %v1151, 0
    %1154 = vmatpush.msra.mxu0 0.0
    %1155 = vmatpush.msra.mxu0 0.0
    %1156 = vmatpush.msra.mxu0 0.0
    %1157 = vmatpush.msra.mxu0 0.0
    %1158 = vmatpush.msra.mxu0 0.0
    %1159 = vmatpush.msra.mxu0 0.0
    %1160 = vmatpush.msra.mxu0 0.0
    %1161 = vmatpush.msra.mxu0 0.0
    %1162 = vmatpush.msra.mxu0 0.0
    %1163 = vmatpush.msra.mxu0 0.0
    %1164 = vmatpush.msra.mxu0 0.0
    %1165 = vmatpush.msra.mxu0 0.0
    %1166 = vmatpush.msra.mxu0 %v1147
    %1167 = vmatpush.msra.mxu0 %v1146
    %1168 = vmatpush.msra.mxu0 %v1145
    %1169 = vmatpush.msra.mxu0 %v1144
    %1170 = vmatmul.f32.gmra.mxu0 %v1152
    %v1171 = vpop.f32.mrf.mxu0
    %v1172 = vadd.f32 %v1148, %v1171
    %1173 = vdwg.mxu0
    %v1174 = vsel %vm336, %v1172, -inf
    %1175 = vmax.xlane.f32.xlu0 %v1174
    %v1176 = vpop.xlane.xlu0 %1175
    %v1177 = vsub.f32 %v1172, %v1176
    %v1178 = vmul.f32 %v1177, 1.442695
    %v1179 = vpow.pop %v1178
    %v1180 = vsel %vm336, %v1179, 0.0
    %1181 = vadd.xlane.f32.xlu0 %v1180
    %v1182 = vpop.xlane.xlu0 %1181
    %v1183 = vlog2.pop %v1182
    %v1184 = vmul.f32 %v1183, 0.6931472
    %v1185 = vsub.f32 %v1177, %v1184
    %1186 = vst.msk [vmem:[#allocation5 + $0x3] sm:$0x1] %vm336, %v1185
    %s1187 = sld [smem:[#allocation2 + $0x4]]
    %p1188 = scmp.gt.s32.totalorder %s1187, 0
    %s1189 = scalar_select %p1188, %s1187, 0
    %p1190 = scmp.lt.s32.totalorder %s1189, 15
    %s1191 = scalar_select %p1190, %s1189, 15
    %s1192 = scalar_lea.vmem %s3, %s1191
    %v1193 = vld [vmem:[%s1192] sm:$0x1]
    %v1194 = vsel %vm72, %v1193, %v1143
    %v1195 = vld [vmem:[%s4] sm:$0xff]
    %v1196 = vld [vmem:[%s4 + $0x8] sm:$0xff]
    %v1197 = vld [vmem:[%s4 + $0x10] sm:$0xff]
    %v1198 = vld [vmem:[%s4 + $0x18] sm:$0xff]
    %v1199 = vld [vmem:[%s4 + $0x20] sm:$0xff]
    %v1200 = vld [vmem:[%s4 + $0x28] sm:$0xff]
    %v1201 = vld [vmem:[%s4 + $0x30] sm:$0xff]
    %v1202 = vld [vmem:[%s4 + $0x38] sm:$0xff]
    %v1203 = vld [vmem:[%s5] sm:$0x1]
    %v1205 = vsel %vm83, %v1194, 0
    %1207 = vmatpush.msra.mxu0 0.0
    %1208 = vmatpush.msra.mxu0 0.0
    %1209 = vmatpush.msra.mxu0 0.0
    %1210 = vmatpush.msra.mxu0 0.0
    %1211 = vmatpush.msra.mxu0 0.0
    %1212 = vmatpush.msra.mxu0 0.0
    %1213 = vmatpush.msra.mxu0 0.0
    %1214 = vmatpush.msra.mxu0 0.0
    %1215 = vmatpush.msra.mxu0 %v1202
    %1216 = vmatpush.msra.mxu0 %v1201
    %1217 = vmatpush.msra.mxu0 %v1200
    %1218 = vmatpush.msra.mxu0 %v1199
    %1219 = vmatpush.msra.mxu0 %v1198
    %1220 = vmatpush.msra.mxu0 %v1197
    %1221 = vmatpush.msra.mxu0 %v1196
    %1222 = vmatpush.msra.mxu0 %v1195
    %1223 = vmatmul.f32.gmra.mxu0 %v1205
    %v1224 = vpop.f32.mrf.mxu0
    %v1225 = vadd.f32 %v1203, %v1224
    %1226 = vdwg.mxu0
    %v1227 = vsel %vm107, %v1225, -inf
    %1228 = vmax.xlane.f32.xlu0 %v1227
    %v1229 = vpop.xlane.xlu0 %1228
    %v1230 = vsub.f32 %v1225, %v1229
    %v1231 = vmul.f32 %v1230, 1.442695
    %v1232 = vpow.pop %v1231
    %v1233 = vsel %vm107, %v1232, 0.0
    %1234 = vadd.xlane.f32.xlu0 %v1233
    %v1235 = vpop.xlane.xlu0 %1234
    %v1236 = vrcp.pop %v1235
    %v1237 = vmul.f32 %v1235, %v1236
    %v1238 = vsub.f32 1.0, %v1237
    %v1239 = vmul.f32 %v1236, %v1238
    %v1240 = vadd.f32 %v1236, %v1239
    %vm1241 = vweird.f32 %v1235
    %vm1242 = vweird.f32 %v1236
    %vm1243 = vmor %vm1241, %vm1242
    %v1244 = vsel %vm1243, %v1236, %v1240
    %v1245 = vand.u32 2147483647, %v1235
    %vm1246 = vcmp.eq.f32.partialorder %v1245, 8.507059e+37
    %v1247 = vand.u32 %v1235, 2147483648
    %v1248 = vor.u32 1.1754944e-38, %v1247
    %v1249 = vsel %vm1246, %v1248, %v1244
    %v1250 = vmul.f32 %v1232, %v1249
    %1251 = vst.msk [vmem:[#allocation8 + $0x4] sm:$0x1] %vm107, %v1250
    %v1252 = vld [vmem:[%s2] sm:$0xff]
    %v1253 = vld [vmem:[%s2 + $0x8] sm:$0x3]
    %v1255 = vsel %vm135, %v1250, 0
    %v1258 = vsel %vm139, %v1253, 0
    %1260 = vmatpush.msra.mxu0 0.0
    %1261 = vmatpush.msra.mxu0 0.0
    %1262 = vmatpush.msra.mxu0 0.0
    %1263 = vmatpush.msra.mxu0 0.0
    %1264 = vmatpush.msra.mxu0 0.0
    %1265 = vmatpush.msra.mxu0 0.0
    %1266 = vmatpush.msra.mxu0 0.0
    %1267 = vmatpush.msra.mxu0 0.0
    %1268 = vmatpush.msra.mxu0 0.0
    %1269 = vmatpush.msra.mxu0 0.0
    %1270 = vmatpush.msra.mxu0 0.0
    %1271 = vmatpush.msra.mxu0 0.0
    %1272 = vmatpush.msra.mxu0 0.0
    %1273 = vmatpush.msra.mxu0 0.0
    %1274 = vmatpush.msra.mxu0 %v1258
    %1275 = vmatpush.msra.mxu0 %v1252
    %1276 = vmatmul.f32.gmra.mxu0 %v1255
    %v1277 = vpop.f32.mrf.mxu0
    %v1278 = vadd.f32 0.0, %v1277
    %1279 = vdwg.mxu0
    %1281 = vrot.lane.b32.xlu0 %v1278, 32
    %v1282 = vpop.permute.xlu0 %1281
    %v1284 = vsel %vm72, %v1193, %v1282
    %v1285 = vld [vmem:[%s6] sm:$0xff]
    %v1286 = vld [vmem:[%s6 + $0x8] sm:$0xff]
    %v1287 = vld [vmem:[%s6 + $0x10] sm:$0xff]
    %v1288 = vld [vmem:[%s6 + $0x18] sm:$0xff]
    %v1289 = vld [vmem:[%s6 + $0x20] sm:$0xff]
    %v1290 = vld [vmem:[%s6 + $0x28] sm:$0xff]
    %v1291 = vld [vmem:[%s6 + $0x30] sm:$0xff]
    %v1292 = vld [vmem:[%s6 + $0x38] sm:$0xff]
    %v1293 = vld [vmem:[%s7] sm:$0x1]
    %v1295 = vsel %vm83, %v1284, 0
    %1297 = vmatpush.msra.mxu0 0.0
    %1298 = vmatpush.msra.mxu0 0.0
    %1299 = vmatpush.msra.mxu0 0.0
    %1300 = vmatpush.msra.mxu0 0.0
    %1301 = vmatpush.msra.mxu0 0.0
    %1302 = vmatpush.msra.mxu0 0.0
    %1303 = vmatpush.msra.mxu0 0.0
    %1304 = vmatpush.msra.mxu0 0.0
    %1305 = vmatpush.msra.mxu0 %v1292
    %1306 = vmatpush.msra.mxu0 %v1291
    %1307 = vmatpush.msra.mxu0 %v1290
    %1308 = vmatpush.msra.mxu0 %v1289
    %1309 = vmatpush.msra.mxu0 %v1288
    %1310 = vmatpush.msra.mxu0 %v1287
    %1311 = vmatpush.msra.mxu0 %v1286
    %1312 = vmatpush.msra.mxu0 %v1285
    %1313 = vmatmul.f32.gmra.mxu0 %v1295
    %v1314 = vpop.f32.mrf.mxu0
    %v1315 = vadd.f32 %v1293, %v1314
    %1316 = vdwg.mxu0
    %v1317 = vmax.f32 %v1315, 0.0
    %v1318 = vsel %vm72, %v1317, %v1143
    %v1319 = vld [vmem:[%s8] sm:$0xff]
    %v1320 = vld [vmem:[%s8 + $0x8] sm:$0xff]
    %v1321 = vld [vmem:[%s8 + $0x10] sm:$0xff]
    %v1322 = vld [vmem:[%s8 + $0x18] sm:$0xff]
    %v1323 = vld [vmem:[%s8 + $0x20] sm:$0xff]
    %v1324 = vld [vmem:[%s8 + $0x28] sm:$0xff]
    %v1325 = vld [vmem:[%s8 + $0x30] sm:$0xff]
    %v1326 = vld [vmem:[%s8 + $0x38] sm:$0xff]
    %v1327 = vld [vmem:[%s8 + $0x40] sm:$0xff]
    %v1328 = vld [vmem:[%s8 + $0x48] sm:$0xff]
    %v1329 = vld [vmem:[%s8 + $0x50] sm:$0xff]
    %v1330 = vld [vmem:[%s8 + $0x58] sm:$0xff]
    %v1331 = vld [vmem:[%s8 + $0x60] sm:$0xff]
    %v1332 = vld [vmem:[%s8 + $0x68] sm:$0xff]
    %v1333 = vld [vmem:[%s8 + $0x70] sm:$0xff]
    %v1334 = vld [vmem:[%s8 + $0x78] sm:$0xff]
    %v1335 = vld [vmem:[%s9] sm:$0x3]
    %v1337 = vperm.slane %v1335, 0
    %v1338 = vperm.slane %v1335, 1
    %v1342 = vsel %vm83, %v1318, 0
    %1344 = vmatpush.msra.mxu0 0.0
    %1345 = vmatpush.msra.mxu0 0.0
    %1346 = vmatpush.msra.mxu0 0.0
    %1347 = vmatpush.msra.mxu0 0.0
    %1348 = vmatpush.msra.mxu0 0.0
    %1349 = vmatpush.msra.mxu0 0.0
    %1350 = vmatpush.msra.mxu0 0.0
    %1351 = vmatpush.msra.mxu0 0.0
    %1352 = vmatpush.msra.mxu0 %v1333
    %1353 = vmatpush.msra.mxu0 %v1331
    %1354 = vmatpush.msra.mxu0 %v1329
    %1355 = vmatpush.msra.mxu0 %v1327
    %1356 = vmatpush.msra.mxu0 %v1325
    %1357 = vmatpush.msra.mxu0 %v1323
    %1358 = vmatpush.msra.mxu0 %v1321
    %1359 = vmatpush.msra.mxu0 %v1319
    %1360 = vmatmul.f32.gmra.mxu0 %v1342
    %v1361 = vpop.f32.mrf.mxu0
    %v1362 = vadd.f32 %v1337, %v1361
    %1363 = vdwg.mxu0
    %1364 = vmatpush.msra.mxu0 0.0
    %1365 = vmatpush.msra.mxu0 0.0
    %1366 = vmatpush.msra.mxu0 0.0
    %1367 = vmatpush.msra.mxu0 0.0
    %1368 = vmatpush.msra.mxu0 0.0
    %1369 = vmatpush.msra.mxu0 0.0
    %1370 = vmatpush.msra.mxu0 0.0
    %1371 = vmatpush.msra.mxu0 0.0
    %1372 = vmatpush.msra.mxu0 %v1334
    %1373 = vmatpush.msra.mxu0 %v1332
    %1374 = vmatpush.msra.mxu0 %v1330
    %1375 = vmatpush.msra.mxu0 %v1328
    %1376 = vmatpush.msra.mxu0 %v1326
    %1377 = vmatpush.msra.mxu0 %v1324
    %1378 = vmatpush.msra.mxu0 %v1322
    %1379 = vmatpush.msra.mxu0 %v1320
    %1380 = vmatmul.f32.gmra.mxu0 %v1342
    %v1381 = vpop.f32.mrf.mxu0
    %v1382 = vadd.f32 %v1338, %v1381
    %1383 = vdwg.mxu0
    %v1384 = vadd.f32 %v1362, %v1382
    %v1385 = vxor.u32 %v1384, 2147483648
    %v1386 = vmul.f32 %v1385, 1.442695
    %v1387 = vpow.pop %v1386
    %v1388 = vadd.f32 %v1387, 1.0
    %v1389 = vrcp.pop %v1388
    %v1390 = vmul.f32 %v1388, %v1389
    %v1391 = vsub.f32 1.0, %v1390
    %v1392 = vmul.f32 %v1389, %v1391
    %v1393 = vadd.f32 %v1389, %v1392
    %vm1394 = vweird.f32 %v1388
    %vm1395 = vweird.f32 %v1389
    %vm1396 = vmor %vm1394, %vm1395
    %v1397 = vsel %vm1396, %v1389, %v1393
    %v1398 = vand.u32 2147483647, %v1388
    %vm1399 = vcmp.eq.f32.partialorder %v1398, 8.507059e+37
    %v1400 = vand.u32 %v1388, 2147483648
    %v1401 = vor.u32 1.1754944e-38, %v1400
    %v1402 = vsel %vm1399, %v1401, %v1397
    %v1403 = vmul.f32 1.0, %v1402
    %1405 = vrot.lane.b32.xlu0 %v1382, 64
    %v1406 = vpop.permute.xlu0 %1405
    %v1408 = vmul.f32 %v1403, %v1406
    %1410 = vrot.lane.b32.xlu0 %v1408, 64
    %v1411 = vpop.permute.xlu0 %1410
    %v1413 = vadd.f32 %v1362, %v1411
    %v1414 = vtanh.pop %v1413
    %v1415 = vsub.f32 1.0, %v1403
    %1417 = vrot.lane.b32.xlu0 %v1414, 96
    %v1418 = vpop.permute.xlu0 %1417
    %v1420 = vmul.f32 %v1415, %v1418
    %v1421 = vmul.f32 %v1403, %v1143
    %v1422 = vadd.f32 %v1420, %v1421
    %v1423 = vld [vmem:[%s10] sm:$0xff]
    %v1424 = vld [vmem:[%s10 + $0x8] sm:$0xff]
    %v1425 = vld [vmem:[%s10 + $0x10] sm:$0xff]
    %v1426 = vld [vmem:[%s10 + $0x18] sm:$0xff]
    %v1427 = vld [vmem:[%s11] sm:$0x1]
    %1429 = vrot.lane.b32.xlu0 %v1422, 96
    %v1430 = vpop.permute.xlu0 %1429
    %v1431 = vsel %vm72, %v1430, 0
    %1433 = vmatpush.msra.mxu0 0.0
    %1434 = vmatpush.msra.mxu0 0.0
    %1435 = vmatpush.msra.mxu0 0.0
    %1436 = vmatpush.msra.mxu0 0.0
    %1437 = vmatpush.msra.mxu0 0.0
    %1438 = vmatpush.msra.mxu0 0.0
    %1439 = vmatpush.msra.mxu0 0.0
    %1440 = vmatpush.msra.mxu0 0.0
    %1441 = vmatpush.msra.mxu0 0.0
    %1442 = vmatpush.msra.mxu0 0.0
    %1443 = vmatpush.msra.mxu0 0.0
    %1444 = vmatpush.msra.mxu0 0.0
    %1445 = vmatpush.msra.mxu0 %v1426
    %1446 = vmatpush.msra.mxu0 %v1425
    %1447 = vmatpush.msra.mxu0 %v1424
    %1448 = vmatpush.msra.mxu0 %v1423
    %1449 = vmatmul.f32.gmra.mxu0 %v1431
    %v1450 = vpop.f32.mrf.mxu0
    %v1451 = vadd.f32 %v1427, %v1450
    %1452 = vdwg.mxu0
    %v1453 = vsel %vm336, %v1451, -inf
    %1454 = vmax.xlane.f32.xlu0 %v1453
    %v1455 = vpop.xlane.xlu0 %1454
    %v1456 = vsub.f32 %v1451, %v1455
    %v1457 = vmul.f32 %v1456, 1.442695
    %v1458 = vpow.pop %v1457
    %v1459 = vsel %vm336, %v1458, 0.0
    %1460 = vadd.xlane.f32.xlu0 %v1459
    %v1461 = vpop.xlane.xlu0 %1460
    %v1462 = vlog2.pop %v1461
    %v1463 = vmul.f32 %v1462, 0.6931472
    %v1464 = vsub.f32 %v1456, %v1463
    %1465 = vst.msk [vmem:[#allocation5 + $0x4] sm:$0x1] %vm336, %v1464
    %s1466 = sld [smem:[#allocation2 + $0x5]]
    %p1467 = scmp.gt.s32.totalorder %s1466, 0
    %s1468 = scalar_select %p1467, %s1466, 0
    %p1469 = scmp.lt.s32.totalorder %s1468, 15
    %s1470 = scalar_select %p1469, %s1468, 15
    %s1471 = scalar_lea.vmem %s3, %s1470
    %v1472 = vld [vmem:[%s1471] sm:$0x1]
    %v1473 = vsel %vm72, %v1472, %v1422
    %v1474 = vld [vmem:[%s4] sm:$0xff]
    %v1475 = vld [vmem:[%s4 + $0x8] sm:$0xff]
    %v1476 = vld [vmem:[%s4 + $0x10] sm:$0xff]
    %v1477 = vld [vmem:[%s4 + $0x18] sm:$0xff]
    %v1478 = vld [vmem:[%s4 + $0x20] sm:$0xff]
    %v1479 = vld [vmem:[%s4 + $0x28] sm:$0xff]
    %v1480 = vld [vmem:[%s4 + $0x30] sm:$0xff]
    %v1481 = vld [vmem:[%s4 + $0x38] sm:$0xff]
    %v1482 = vld [vmem:[%s5] sm:$0x1]
    %v1484 = vsel %vm83, %v1473, 0
    %1486 = vmatpush.msra.mxu0 0.0
    %1487 = vmatpush.msra.mxu0 0.0
    %1488 = vmatpush.msra.mxu0 0.0
    %1489 = vmatpush.msra.mxu0 0.0
    %1490 = vmatpush.msra.mxu0 0.0
    %1491 = vmatpush.msra.mxu0 0.0
    %1492 = vmatpush.msra.mxu0 0.0
    %1493 = vmatpush.msra.mxu0 0.0
    %1494 = vmatpush.msra.mxu0 %v1481
    %1495 = vmatpush.msra.mxu0 %v1480
    %1496 = vmatpush.msra.mxu0 %v1479
    %1497 = vmatpush.msra.mxu0 %v1478
    %1498 = vmatpush.msra.mxu0 %v1477
    %1499 = vmatpush.msra.mxu0 %v1476
    %1500 = vmatpush.msra.mxu0 %v1475
    %1501 = vmatpush.msra.mxu0 %v1474
    %1502 = vmatmul.f32.gmra.mxu0 %v1484
    %v1503 = vpop.f32.mrf.mxu0
    %v1504 = vadd.f32 %v1482, %v1503
    %1505 = vdwg.mxu0
    %v1506 = vsel %vm107, %v1504, -inf
    %1507 = vmax.xlane.f32.xlu0 %v1506
    %v1508 = vpop.xlane.xlu0 %1507
    %v1509 = vsub.f32 %v1504, %v1508
    %v1510 = vmul.f32 %v1509, 1.442695
    %v1511 = vpow.pop %v1510
    %v1512 = vsel %vm107, %v1511, 0.0
    %1513 = vadd.xlane.f32.xlu0 %v1512
    %v1514 = vpop.xlane.xlu0 %1513
    %v1515 = vrcp.pop %v1514
    %v1516 = vmul.f32 %v1514, %v1515
    %v1517 = vsub.f32 1.0, %v1516
    %v1518 = vmul.f32 %v1515, %v1517
    %v1519 = vadd.f32 %v1515, %v1518
    %vm1520 = vweird.f32 %v1514
    %vm1521 = vweird.f32 %v1515
    %vm1522 = vmor %vm1520, %vm1521
    %v1523 = vsel %vm1522, %v1515, %v1519
    %v1524 = vand.u32 2147483647, %v1514
    %vm1525 = vcmp.eq.f32.partialorder %v1524, 8.507059e+37
    %v1526 = vand.u32 %v1514, 2147483648
    %v1527 = vor.u32 1.1754944e-38, %v1526
    %v1528 = vsel %vm1525, %v1527, %v1523
    %v1529 = vmul.f32 %v1511, %v1528
    %1530 = vst.msk [vmem:[#allocation8 + $0x5] sm:$0x1] %vm107, %v1529
    %v1531 = vld [vmem:[%s2] sm:$0xff]
    %v1532 = vld [vmem:[%s2 + $0x8] sm:$0x3]
    %v1534 = vsel %vm135, %v1529, 0
    %v1537 = vsel %vm139, %v1532, 0
    %1539 = vmatpush.msra.mxu0 0.0
    %1540 = vmatpush.msra.mxu0 0.0
    %1541 = vmatpush.msra.mxu0 0.0
    %1542 = vmatpush.msra.mxu0 0.0
    %1543 = vmatpush.msra.mxu0 0.0
    %1544 = vmatpush.msra.mxu0 0.0
    %1545 = vmatpush.msra.mxu0 0.0
    %1546 = vmatpush.msra.mxu0 0.0
    %1547 = vmatpush.msra.mxu0 0.0
    %1548 = vmatpush.msra.mxu0 0.0
    %1549 = vmatpush.msra.mxu0 0.0
    %1550 = vmatpush.msra.mxu0 0.0
    %1551 = vmatpush.msra.mxu0 0.0
    %1552 = vmatpush.msra.mxu0 0.0
    %1553 = vmatpush.msra.mxu0 %v1537
    %1554 = vmatpush.msra.mxu0 %v1531
    %1555 = vmatmul.f32.gmra.mxu0 %v1534
    %v1556 = vpop.f32.mrf.mxu0
    %v1557 = vadd.f32 0.0, %v1556
    %1558 = vdwg.mxu0
    %1560 = vrot.lane.b32.xlu0 %v1557, 32
    %v1561 = vpop.permute.xlu0 %1560
    %v1563 = vsel %vm72, %v1472, %v1561
    %v1564 = vld [vmem:[%s6] sm:$0xff]
    %v1565 = vld [vmem:[%s6 + $0x8] sm:$0xff]
    %v1566 = vld [vmem:[%s6 + $0x10] sm:$0xff]
    %v1567 = vld [vmem:[%s6 + $0x18] sm:$0xff]
    %v1568 = vld [vmem:[%s6 + $0x20] sm:$0xff]
    %v1569 = vld [vmem:[%s6 + $0x28] sm:$0xff]
    %v1570 = vld [vmem:[%s6 + $0x30] sm:$0xff]
    %v1571 = vld [vmem:[%s6 + $0x38] sm:$0xff]
    %v1572 = vld [vmem:[%s7] sm:$0x1]
    %v1574 = vsel %vm83, %v1563, 0
    %1576 = vmatpush.msra.mxu0 0.0
    %1577 = vmatpush.msra.mxu0 0.0
    %1578 = vmatpush.msra.mxu0 0.0
    %1579 = vmatpush.msra.mxu0 0.0
    %1580 = vmatpush.msra.mxu0 0.0
    %1581 = vmatpush.msra.mxu0 0.0
    %1582 = vmatpush.msra.mxu0 0.0
    %1583 = vmatpush.msra.mxu0 0.0
    %1584 = vmatpush.msra.mxu0 %v1571
    %1585 = vmatpush.msra.mxu0 %v1570
    %1586 = vmatpush.msra.mxu0 %v1569
    %1587 = vmatpush.msra.mxu0 %v1568
    %1588 = vmatpush.msra.mxu0 %v1567
    %1589 = vmatpush.msra.mxu0 %v1566
    %1590 = vmatpush.msra.mxu0 %v1565
    %1591 = vmatpush.msra.mxu0 %v1564
    %1592 = vmatmul.f32.gmra.mxu0 %v1574
    %v1593 = vpop.f32.mrf.mxu0
    %v1594 = vadd.f32 %v1572, %v1593
    %1595 = vdwg.mxu0
    %v1596 = vmax.f32 %v1594, 0.0
    %v1597 = vsel %vm72, %v1596, %v1422
    %v1598 = vld [vmem:[%s8] sm:$0xff]
    %v1599 = vld [vmem:[%s8 + $0x8] sm:$0xff]
    %v1600 = vld [vmem:[%s8 + $0x10] sm:$0xff]
    %v1601 = vld [vmem:[%s8 + $0x18] sm:$0xff]
    %v1602 = vld [vmem:[%s8 + $0x20] sm:$0xff]
    %v1603 = vld [vmem:[%s8 + $0x28] sm:$0xff]
    %v1604 = vld [vmem:[%s8 + $0x30] sm:$0xff]
    %v1605 = vld [vmem:[%s8 + $0x38] sm:$0xff]
    %v1606 = vld [vmem:[%s8 + $0x40] sm:$0xff]
    %v1607 = vld [vmem:[%s8 + $0x48] sm:$0xff]
    %v1608 = vld [vmem:[%s8 + $0x50] sm:$0xff]
    %v1609 = vld [vmem:[%s8 + $0x58] sm:$0xff]
    %v1610 = vld [vmem:[%s8 + $0x60] sm:$0xff]
    %v1611 = vld [vmem:[%s8 + $0x68] sm:$0xff]
    %v1612 = vld [vmem:[%s8 + $0x70] sm:$0xff]
    %v1613 = vld [vmem:[%s8 + $0x78] sm:$0xff]
    %v1614 = vld [vmem:[%s9] sm:$0x3]
    %v1616 = vperm.slane %v1614, 0
    %v1617 = vperm.slane %v1614, 1
    %v1621 = vsel %vm83, %v1597, 0
    %1623 = vmatpush.msra.mxu0 0.0
    %1624 = vmatpush.msra.mxu0 0.0
    %1625 = vmatpush.msra.mxu0 0.0
    %1626 = vmatpush.msra.mxu0 0.0
    %1627 = vmatpush.msra.mxu0 0.0
    %1628 = vmatpush.msra.mxu0 0.0
    %1629 = vmatpush.msra.mxu0 0.0
    %1630 = vmatpush.msra.mxu0 0.0
    %1631 = vmatpush.msra.mxu0 %v1612
    %1632 = vmatpush.msra.mxu0 %v1610
    %1633 = vmatpush.msra.mxu0 %v1608
    %1634 = vmatpush.msra.mxu0 %v1606
    %1635 = vmatpush.msra.mxu0 %v1604
    %1636 = vmatpush.msra.mxu0 %v1602
    %1637 = vmatpush.msra.mxu0 %v1600
    %1638 = vmatpush.msra.mxu0 %v1598
    %1639 = vmatmul.f32.gmra.mxu0 %v1621
    %v1640 = vpop.f32.mrf.mxu0
    %v1641 = vadd.f32 %v1616, %v1640
    %1642 = vdwg.mxu0
    %1643 = vmatpush.msra.mxu0 0.0
    %1644 = vmatpush.msra.mxu0 0.0
    %1645 = vmatpush.msra.mxu0 0.0
    %1646 = vmatpush.msra.mxu0 0.0
    %1647 = vmatpush.msra.mxu0 0.0
    %1648 = vmatpush.msra.mxu0 0.0
    %1649 = vmatpush.msra.mxu0 0.0
    %1650 = vmatpush.msra.mxu0 0.0
    %1651 = vmatpush.msra.mxu0 %v1613
    %1652 = vmatpush.msra.mxu0 %v1611
    %1653 = vmatpush.msra.mxu0 %v1609
    %1654 = vmatpush.msra.mxu0 %v1607
    %1655 = vmatpush.msra.mxu0 %v1605
    %1656 = vmatpush.msra.mxu0 %v1603
    %1657 = vmatpush.msra.mxu0 %v1601
    %1658 = vmatpush.msra.mxu0 %v1599
    %1659 = vmatmul.f32.gmra.mxu0 %v1621
    %v1660 = vpop.f32.mrf.mxu0
    %v1661 = vadd.f32 %v1617, %v1660
    %1662 = vdwg.mxu0
    %v1663 = vadd.f32 %v1641, %v1661
    %v1664 = vxor.u32 %v1663, 2147483648
    %v1665 = vmul.f32 %v1664, 1.442695
    %v1666 = vpow.pop %v1665
    %v1667 = vadd.f32 %v1666, 1.0
    %v1668 = vrcp.pop %v1667
    %v1669 = vmul.f32 %v1667, %v1668
    %v1670 = vsub.f32 1.0, %v1669
    %v1671 = vmul.f32 %v1668, %v1670
    %v1672 = vadd.f32 %v1668, %v1671
    %vm1673 = vweird.f32 %v1667
    %vm1674 = vweird.f32 %v1668
    %vm1675 = vmor %vm1673, %vm1674
    %v1676 = vsel %vm1675, %v1668, %v1672
    %v1677 = vand.u32 2147483647, %v1667
    %vm1678 = vcmp.eq.f32.partialorder %v1677, 8.507059e+37
    %v1679 = vand.u32 %v1667, 2147483648
    %v1680 = vor.u32 1.1754944e-38, %v1679
    %v1681 = vsel %vm1678, %v1680, %v1676
    %v1682 = vmul.f32 1.0, %v1681
    %1684 = vrot.lane.b32.xlu0 %v1661, 64
    %v1685 = vpop.permute.xlu0 %1684
    %v1687 = vmul.f32 %v1682, %v1685
    %1689 = vrot.lane.b32.xlu0 %v1687, 64
    %v1690 = vpop.permute.xlu0 %1689
    %v1692 = vadd.f32 %v1641, %v1690
    %v1693 = vtanh.pop %v1692
    %v1694 = vsub.f32 1.0, %v1682
    %1696 = vrot.lane.b32.xlu0 %v1693, 96
    %v1697 = vpop.permute.xlu0 %1696
    %v1699 = vmul.f32 %v1694, %v1697
    %v1700 = vmul.f32 %v1682, %v1422
    %v1701 = vadd.f32 %v1699, %v1700
    %v1702 = vld [vmem:[%s10] sm:$0xff]
    %v1703 = vld [vmem:[%s10 + $0x8] sm:$0xff]
    %v1704 = vld [vmem:[%s10 + $0x10] sm:$0xff]
    %v1705 = vld [vmem:[%s10 + $0x18] sm:$0xff]
    %v1706 = vld [vmem:[%s11] sm:$0x1]
    %1708 = vrot.lane.b32.xlu0 %v1701, 96
    %v1709 = vpop.permute.xlu0 %1708
    %v1710 = vsel %vm72, %v1709, 0
    %1712 = vmatpush.msra.mxu0 0.0
    %1713 = vmatpush.msra.mxu0 0.0
    %1714 = vmatpush.msra.mxu0 0.0
    %1715 = vmatpush.msra.mxu0 0.0
    %1716 = vmatpush.msra.mxu0 0.0
    %1717 = vmatpush.msra.mxu0 0.0
    %1718 = vmatpush.msra.mxu0 0.0
    %1719 = vmatpush.msra.mxu0 0.0
    %1720 = vmatpush.msra.mxu0 0.0
    %1721 = vmatpush.msra.mxu0 0.0
    %1722 = vmatpush.msra.mxu0 0.0
    %1723 = vmatpush.msra.mxu0 0.0
    %1724 = vmatpush.msra.mxu0 %v1705
    %1725 = vmatpush.msra.mxu0 %v1704
    %1726 = vmatpush.msra.mxu0 %v1703
    %1727 = vmatpush.msra.mxu0 %v1702
    %1728 = vmatmul.f32.gmra.mxu0 %v1710
    %v1729 = vpop.f32.mrf.mxu0
    %v1730 = vadd.f32 %v1706, %v1729
    %1731 = vdwg.mxu0
    %v1732 = vsel %vm336, %v1730, -inf
    %1733 = vmax.xlane.f32.xlu0 %v1732
    %v1734 = vpop.xlane.xlu0 %1733
    %v1735 = vsub.f32 %v1730, %v1734
    %v1736 = vmul.f32 %v1735, 1.442695
    %v1737 = vpow.pop %v1736
    %v1738 = vsel %vm336, %v1737, 0.0
    %1739 = vadd.xlane.f32.xlu0 %v1738
    %v1740 = vpop.xlane.xlu0 %1739
    %v1741 = vlog2.pop %v1740
    %v1742 = vmul.f32 %v1741, 0.6931472
    %v1743 = vsub.f32 %v1735, %v1742
    %1744 = vst.msk [vmem:[#allocation5 + $0x5] sm:$0x1] %vm336, %v1743
    %s1745 = sld [smem:[#allocation2 + $0x6]]
    %p1746 = scmp.gt.s32.totalorder %s1745, 0
    %s1747 = scalar_select %p1746, %s1745, 0
    %p1748 = scmp.lt.s32.totalorder %s1747, 15
    %s1749 = scalar_select %p1748, %s1747, 15
    %s1750 = scalar_lea.vmem %s3, %s1749
    %v1751 = vld [vmem:[%s1750] sm:$0x1]
    %v1752 = vsel %vm72, %v1751, %v1701
    %v1753 = vld [vmem:[%s4] sm:$0xff]
    %v1754 = vld [vmem:[%s4 + $0x8] sm:$0xff]
    %v1755 = vld [vmem:[%s4 + $0x10] sm:$0xff]
    %v1756 = vld [vmem:[%s4 + $0x18] sm:$0xff]
    %v1757 = vld [vmem:[%s4 + $0x20] sm:$0xff]
    %v1758 = vld [vmem:[%s4 + $0x28] sm:$0xff]
    %v1759 = vld [vmem:[%s4 + $0x30] sm:$0xff]
    %v1760 = vld [vmem:[%s4 + $0x38] sm:$0xff]
    %v1761 = vld [vmem:[%s5] sm:$0x1]
    %v1763 = vsel %vm83, %v1752, 0
    %1765 = vmatpush.msra.mxu0 0.0
    %1766 = vmatpush.msra.mxu0 0.0
    %1767 = vmatpush.msra.mxu0 0.0
    %1768 = vmatpush.msra.mxu0 0.0
    %1769 = vmatpush.msra.mxu0 0.0
    %1770 = vmatpush.msra.mxu0 0.0
    %1771 = vmatpush.msra.mxu0 0.0
    %1772 = vmatpush.msra.mxu0 0.0
    %1773 = vmatpush.msra.mxu0 %v1760
    %1774 = vmatpush.msra.mxu0 %v1759
    %1775 = vmatpush.msra.mxu0 %v1758
    %1776 = vmatpush.msra.mxu0 %v1757
    %1777 = vmatpush.msra.mxu0 %v1756
    %1778 = vmatpush.msra.mxu0 %v1755
    %1779 = vmatpush.msra.mxu0 %v1754
    %1780 = vmatpush.msra.mxu0 %v1753
    %1781 = vmatmul.f32.gmra.mxu0 %v1763
    %v1782 = vpop.f32.mrf.mxu0
    %v1783 = vadd.f32 %v1761, %v1782
    %1784 = vdwg.mxu0
    %v1785 = vsel %vm107, %v1783, -inf
    %1786 = vmax.xlane.f32.xlu0 %v1785
    %v1787 = vpop.xlane.xlu0 %1786
    %v1788 = vsub.f32 %v1783, %v1787
    %v1789 = vmul.f32 %v1788, 1.442695
    %v1790 = vpow.pop %v1789
    %v1791 = vsel %vm107, %v1790, 0.0
    %1792 = vadd.xlane.f32.xlu0 %v1791
    %v1793 = vpop.xlane.xlu0 %1792
    %v1794 = vrcp.pop %v1793
    %v1795 = vmul.f32 %v1793, %v1794
    %v1796 = vsub.f32 1.0, %v1795
    %v1797 = vmul.f32 %v1794, %v1796
    %v1798 = vadd.f32 %v1794, %v1797
    %vm1799 = vweird.f32 %v1793
    %vm1800 = vweird.f32 %v1794
    %vm1801 = vmor %vm1799, %vm1800
    %v1802 = vsel %vm1801, %v1794, %v1798
    %v1803 = vand.u32 2147483647, %v1793
    %vm1804 = vcmp.eq.f32.partialorder %v1803, 8.507059e+37
    %v1805 = vand.u32 %v1793, 2147483648
    %v1806 = vor.u32 1.1754944e-38, %v1805
    %v1807 = vsel %vm1804, %v1806, %v1802
    %v1808 = vmul.f32 %v1790, %v1807
    %1809 = vst.msk [vmem:[#allocation8 + $0x6] sm:$0x1] %vm107, %v1808
    %v1810 = vld [vmem:[%s2] sm:$0xff]
    %v1811 = vld [vmem:[%s2 + $0x8] sm:$0x3]
    %v1813 = vsel %vm135, %v1808, 0
    %v1816 = vsel %vm139, %v1811, 0
    %1818 = vmatpush.msra.mxu0 0.0
    %1819 = vmatpush.msra.mxu0 0.0
    %1820 = vmatpush.msra.mxu0 0.0
    %1821 = vmatpush.msra.mxu0 0.0
    %1822 = vmatpush.msra.mxu0 0.0
    %1823 = vmatpush.msra.mxu0 0.0
    %1824 = vmatpush.msra.mxu0 0.0
    %1825 = vmatpush.msra.mxu0 0.0
    %1826 = vmatpush.msra.mxu0 0.0
    %1827 = vmatpush.msra.mxu0 0.0
    %1828 = vmatpush.msra.mxu0 0.0
    %1829 = vmatpush.msra.mxu0 0.0
    %1830 = vmatpush.msra.mxu0 0.0
    %1831 = vmatpush.msra.mxu0 0.0
    %1832 = vmatpush.msra.mxu0 %v1816
    %1833 = vmatpush.msra.mxu0 %v1810
    %1834 = vmatmul.f32.gmra.mxu0 %v1813
    %v1835 = vpop.f32.mrf.mxu0
    %v1836 = vadd.f32 0.0, %v1835
    %1837 = vdwg.mxu0
    %1839 = vrot.lane.b32.xlu0 %v1836, 32
    %v1840 = vpop.permute.xlu0 %1839
    %v1842 = vsel %vm72, %v1751, %v1840
    %v1843 = vld [vmem:[%s6] sm:$0xff]
    %v1844 = vld [vmem:[%s6 + $0x8] sm:$0xff]
    %v1845 = vld [vmem:[%s6 + $0x10] sm:$0xff]
    %v1846 = vld [vmem:[%s6 + $0x18] sm:$0xff]
    %v1847 = vld [vmem:[%s6 + $0x20] sm:$0xff]
    %v1848 = vld [vmem:[%s6 + $0x28] sm:$0xff]
    %v1849 = vld [vmem:[%s6 + $0x30] sm:$0xff]
    %v1850 = vld [vmem:[%s6 + $0x38] sm:$0xff]
    %v1851 = vld [vmem:[%s7] sm:$0x1]
    %v1853 = vsel %vm83, %v1842, 0
    %1855 = vmatpush.msra.mxu0 0.0
    %1856 = vmatpush.msra.mxu0 0.0
    %1857 = vmatpush.msra.mxu0 0.0
    %1858 = vmatpush.msra.mxu0 0.0
    %1859 = vmatpush.msra.mxu0 0.0
    %1860 = vmatpush.msra.mxu0 0.0
    %1861 = vmatpush.msra.mxu0 0.0
    %1862 = vmatpush.msra.mxu0 0.0
    %1863 = vmatpush.msra.mxu0 %v1850
    %1864 = vmatpush.msra.mxu0 %v1849
    %1865 = vmatpush.msra.mxu0 %v1848
    %1866 = vmatpush.msra.mxu0 %v1847
    %1867 = vmatpush.msra.mxu0 %v1846
    %1868 = vmatpush.msra.mxu0 %v1845
    %1869 = vmatpush.msra.mxu0 %v1844
    %1870 = vmatpush.msra.mxu0 %v1843
    %1871 = vmatmul.f32.gmra.mxu0 %v1853
    %v1872 = vpop.f32.mrf.mxu0
    %v1873 = vadd.f32 %v1851, %v1872
    %1874 = vdwg.mxu0
    %v1875 = vmax.f32 %v1873, 0.0
    %v1876 = vsel %vm72, %v1875, %v1701
    %v1877 = vld [vmem:[%s8] sm:$0xff]
    %v1878 = vld [vmem:[%s8 + $0x8] sm:$0xff]
    %v1879 = vld [vmem:[%s8 + $0x10] sm:$0xff]
    %v1880 = vld [vmem:[%s8 + $0x18] sm:$0xff]
    %v1881 = vld [vmem:[%s8 + $0x20] sm:$0xff]
    %v1882 = vld [vmem:[%s8 + $0x28] sm:$0xff]
    %v1883 = vld [vmem:[%s8 + $0x30] sm:$0xff]
    %v1884 = vld [vmem:[%s8 + $0x38] sm:$0xff]
    %v1885 = vld [vmem:[%s8 + $0x40] sm:$0xff]
    %v1886 = vld [vmem:[%s8 + $0x48] sm:$0xff]
    %v1887 = vld [vmem:[%s8 + $0x50] sm:$0xff]
    %v1888 = vld [vmem:[%s8 + $0x58] sm:$0xff]
    %v1889 = vld [vmem:[%s8 + $0x60] sm:$0xff]
    %v1890 = vld [vmem:[%s8 + $0x68] sm:$0xff]
    %v1891 = vld [vmem:[%s8 + $0x70] sm:$0xff]
    %v1892 = vld [vmem:[%s8 + $0x78] sm:$0xff]
    %v1893 = vld [vmem:[%s9] sm:$0x3]
    %v1895 = vperm.slane %v1893, 0
    %v1896 = vperm.slane %v1893, 1
    %v1900 = vsel %vm83, %v1876, 0
    %1902 = vmatpush.msra.mxu0 0.0
    %1903 = vmatpush.msra.mxu0 0.0
    %1904 = vmatpush.msra.mxu0 0.0
    %1905 = vmatpush.msra.mxu0 0.0
    %1906 = vmatpush.msra.mxu0 0.0
    %1907 = vmatpush.msra.mxu0 0.0
    %1908 = vmatpush.msra.mxu0 0.0
    %1909 = vmatpush.msra.mxu0 0.0
    %1910 = vmatpush.msra.mxu0 %v1891
    %1911 = vmatpush.msra.mxu0 %v1889
    %1912 = vmatpush.msra.mxu0 %v1887
    %1913 = vmatpush.msra.mxu0 %v1885
    %1914 = vmatpush.msra.mxu0 %v1883
    %1915 = vmatpush.msra.mxu0 %v1881
    %1916 = vmatpush.msra.mxu0 %v1879
    %1917 = vmatpush.msra.mxu0 %v1877
    %1918 = vmatmul.f32.gmra.mxu0 %v1900
    %v1919 = vpop.f32.mrf.mxu0
    %v1920 = vadd.f32 %v1895, %v1919
    %1921 = vdwg.mxu0
    %1922 = vmatpush.msra.mxu0 0.0
    %1923 = vmatpush.msra.mxu0 0.0
    %1924 = vmatpush.msra.mxu0 0.0
    %1925 = vmatpush.msra.mxu0 0.0
    %1926 = vmatpush.msra.mxu0 0.0
    %1927 = vmatpush.msra.mxu0 0.0
    %1928 = vmatpush.msra.mxu0 0.0
    %1929 = vmatpush.msra.mxu0 0.0
    %1930 = vmatpush.msra.mxu0 %v1892
    %1931 = vmatpush.msra.mxu0 %v1890
    %1932 = vmatpush.msra.mxu0 %v1888
    %1933 = vmatpush.msra.mxu0 %v1886
    %1934 = vmatpush.msra.mxu0 %v1884
    %1935 = vmatpush.msra.mxu0 %v1882
    %1936 = vmatpush.msra.mxu0 %v1880
    %1937 = vmatpush.msra.mxu0 %v1878
    %1938 = vmatmul.f32.gmra.mxu0 %v1900
    %v1939 = vpop.f32.mrf.mxu0
    %v1940 = vadd.f32 %v1896, %v1939
    %1941 = vdwg.mxu0
    %v1942 = vadd.f32 %v1920, %v1940
    %v1943 = vxor.u32 %v1942, 2147483648
    %v1944 = vmul.f32 %v1943, 1.442695
    %v1945 = vpow.pop %v1944
    %v1946 = vadd.f32 %v1945, 1.0
    %v1947 = vrcp.pop %v1946
    %v1948 = vmul.f32 %v1946, %v1947
    %v1949 = vsub.f32 1.0, %v1948
    %v1950 = vmul.f32 %v1947, %v1949
    %v1951 = vadd.f32 %v1947, %v1950
    %vm1952 = vweird.f32 %v1946
    %vm1953 = vweird.f32 %v1947
    %vm1954 = vmor %vm1952, %vm1953
    %v1955 = vsel %vm1954, %v1947, %v1951
    %v1956 = vand.u32 2147483647, %v1946
    %vm1957 = vcmp.eq.f32.partialorder %v1956, 8.507059e+37
    %v1958 = vand.u32 %v1946, 2147483648
    %v1959 = vor.u32 1.1754944e-38, %v1958
    %v1960 = vsel %vm1957, %v1959, %v1955
    %v1961 = vmul.f32 1.0, %v1960
    %1963 = vrot.lane.b32.xlu0 %v1940, 64
    %v1964 = vpop.permute.xlu0 %1963
    %v1966 = vmul.f32 %v1961, %v1964
    %1968 = vrot.lane.b32.xlu0 %v1966, 64
    %v1969 = vpop.permute.xlu0 %1968
    %v1971 = vadd.f32 %v1920, %v1969
    %v1972 = vtanh.pop %v1971
    %v1973 = vsub.f32 1.0, %v1961
    %1975 = vrot.lane.b32.xlu0 %v1972, 96
    %v1976 = vpop.permute.xlu0 %1975
    %v1978 = vmul.f32 %v1973, %v1976
    %v1979 = vmul.f32 %v1961, %v1701
    %v1980 = vadd.f32 %v1978, %v1979
    %v1981 = vld [vmem:[%s10] sm:$0xff]
    %v1982 = vld [vmem:[%s10 + $0x8] sm:$0xff]
    %v1983 = vld [vmem:[%s10 + $0x10] sm:$0xff]
    %v1984 = vld [vmem:[%s10 + $0x18] sm:$0xff]
    %v1985 = vld [vmem:[%s11] sm:$0x1]
    %1987 = vrot.lane.b32.xlu0 %v1980, 96
    %v1988 = vpop.permute.xlu0 %1987
    %v1989 = vsel %vm72, %v1988, 0
    %1991 = vmatpush.msra.mxu0 0.0
    %1992 = vmatpush.msra.mxu0 0.0
    %1993 = vmatpush.msra.mxu0 0.0
    %1994 = vmatpush.msra.mxu0 0.0
    %1995 = vmatpush.msra.mxu0 0.0
    %1996 = vmatpush.msra.mxu0 0.0
    %1997 = vmatpush.msra.mxu0 0.0
    %1998 = vmatpush.msra.mxu0 0.0
    %1999 = vmatpush.msra.mxu0 0.0
    %2000 = vmatpush.msra.mxu0 0.0
    %2001 = vmatpush.msra.mxu0 0.0
    %2002 = vmatpush.msra.mxu0 0.0
    %2003 = vmatpush.msra.mxu0 %v1984
    %2004 = vmatpush.msra.mxu0 %v1983
    %2005 = vmatpush.msra.mxu0 %v1982
    %2006 = vmatpush.msra.mxu0 %v1981
    %2007 = vmatmul.f32.gmra.mxu0 %v1989
    %v2008 = vpop.f32.mrf.mxu0
    %v2009 = vadd.f32 %v1985, %v2008
    %2010 = vdwg.mxu0
    %v2011 = vsel %vm336, %v2009, -inf
    %2012 = vmax.xlane.f32.xlu0 %v2011
    %v2013 = vpop.xlane.xlu0 %2012
    %v2014 = vsub.f32 %v2009, %v2013
    %v2015 = vmul.f32 %v2014, 1.442695
    %v2016 = vpow.pop %v2015
    %v2017 = vsel %vm336, %v2016, 0.0
    %2018 = vadd.xlane.f32.xlu0 %v2017
    %v2019 = vpop.xlane.xlu0 %2018
    %v2020 = vlog2.pop %v2019
    %v2021 = vmul.f32 %v2020, 0.6931472
    %v2022 = vsub.f32 %v2014, %v2021
    %2023 = vst.msk [vmem:[#allocation5 + $0x6] sm:$0x1] %vm336, %v2022
    %s2024 = sld [smem:[#allocation2 + $0x7]]
    %p2025 = scmp.gt.s32.totalorder %s2024, 0
    %s2026 = scalar_select %p2025, %s2024, 0
    %p2027 = scmp.lt.s32.totalorder %s2026, 15
    %s2028 = scalar_select %p2027, %s2026, 15
    %s2029 = scalar_lea.vmem %s3, %s2028
    %v2030 = vld [vmem:[%s2029] sm:$0x1]
    %v2031 = vsel %vm72, %v2030, %v1980
    %v2032 = vld [vmem:[%s4] sm:$0xff]
    %v2033 = vld [vmem:[%s4 + $0x8] sm:$0xff]
    %v2034 = vld [vmem:[%s4 + $0x10] sm:$0xff]
    %v2035 = vld [vmem:[%s4 + $0x18] sm:$0xff]
    %v2036 = vld [vmem:[%s4 + $0x20] sm:$0xff]
    %v2037 = vld [vmem:[%s4 + $0x28] sm:$0xff]
    %v2038 = vld [vmem:[%s4 + $0x30] sm:$0xff]
    %v2039 = vld [vmem:[%s4 + $0x38] sm:$0xff]
    %v2040 = vld [vmem:[%s5] sm:$0x1]
    %v2042 = vsel %vm83, %v2031, 0
    %2044 = vmatpush.msra.mxu0 0.0
    %2045 = vmatpush.msra.mxu0 0.0
    %2046 = vmatpush.msra.mxu0 0.0
    %2047 = vmatpush.msra.mxu0 0.0
    %2048 = vmatpush.msra.mxu0 0.0
    %2049 = vmatpush.msra.mxu0 0.0
    %2050 = vmatpush.msra.mxu0 0.0
    %2051 = vmatpush.msra.mxu0 0.0
    %2052 = vmatpush.msra.mxu0 %v2039
    %2053 = vmatpush.msra.mxu0 %v2038
    %2054 = vmatpush.msra.mxu0 %v2037
    %2055 = vmatpush.msra.mxu0 %v2036
    %2056 = vmatpush.msra.mxu0 %v2035
    %2057 = vmatpush.msra.mxu0 %v2034
    %2058 = vmatpush.msra.mxu0 %v2033
    %2059 = vmatpush.msra.mxu0 %v2032
    %2060 = vmatmul.f32.gmra.mxu0 %v2042
    %v2061 = vpop.f32.mrf.mxu0
    %v2062 = vadd.f32 %v2040, %v2061
    %2063 = vdwg.mxu0
    %v2064 = vsel %vm107, %v2062, -inf
    %2065 = vmax.xlane.f32.xlu0 %v2064
    %v2066 = vpop.xlane.xlu0 %2065
    %v2067 = vsub.f32 %v2062, %v2066
    %v2068 = vmul.f32 %v2067, 1.442695
    %v2069 = vpow.pop %v2068
    %v2070 = vsel %vm107, %v2069, 0.0
    %2071 = vadd.xlane.f32.xlu0 %v2070
    %v2072 = vpop.xlane.xlu0 %2071
    %v2073 = vrcp.pop %v2072
    %v2074 = vmul.f32 %v2072, %v2073
    %v2075 = vsub.f32 1.0, %v2074
    %v2076 = vmul.f32 %v2073, %v2075
    %v2077 = vadd.f32 %v2073, %v2076
    %vm2078 = vweird.f32 %v2072
    %vm2079 = vweird.f32 %v2073
    %vm2080 = vmor %vm2078, %vm2079
    %v2081 = vsel %vm2080, %v2073, %v2077
    %v2082 = vand.u32 2147483647, %v2072
    %vm2083 = vcmp.eq.f32.partialorder %v2082, 8.507059e+37
    %v2084 = vand.u32 %v2072, 2147483648
    %v2085 = vor.u32 1.1754944e-38, %v2084
    %v2086 = vsel %vm2083, %v2085, %v2081
    %v2087 = vmul.f32 %v2069, %v2086
    %2088 = vst.msk [vmem:[#allocation8 + $0x7] sm:$0x1] %vm107, %v2087
    %v2089 = vld [vmem:[%s2] sm:$0xff]
    %v2090 = vld [vmem:[%s2 + $0x8] sm:$0x3]
    %v2092 = vsel %vm135, %v2087, 0
    %v2095 = vsel %vm139, %v2090, 0
    %2097 = vmatpush.msra.mxu0 0.0
    %2098 = vmatpush.msra.mxu0 0.0
    %2099 = vmatpush.msra.mxu0 0.0
    %2100 = vmatpush.msra.mxu0 0.0
    %2101 = vmatpush.msra.mxu0 0.0
    %2102 = vmatpush.msra.mxu0 0.0
    %2103 = vmatpush.msra.mxu0 0.0
    %2104 = vmatpush.msra.mxu0 0.0
    %2105 = vmatpush.msra.mxu0 0.0
    %2106 = vmatpush.msra.mxu0 0.0
    %2107 = vmatpush.msra.mxu0 0.0
    %2108 = vmatpush.msra.mxu0 0.0
    %2109 = vmatpush.msra.mxu0 0.0
    %2110 = vmatpush.msra.mxu0 0.0
    %2111 = vmatpush.msra.mxu0 %v2095
    %2112 = vmatpush.msra.mxu0 %v2089
    %2113 = vmatmul.f32.gmra.mxu0 %v2092
    %v2114 = vpop.f32.mrf.mxu0
    %v2115 = vadd.f32 0.0, %v2114
    %2116 = vdwg.mxu0
    %2118 = vrot.lane.b32.xlu0 %v2115, 32
    %v2119 = vpop.permute.xlu0 %2118
    %v2121 = vsel %vm72, %v2030, %v2119
    %v2122 = vld [vmem:[%s6] sm:$0xff]
    %v2123 = vld [vmem:[%s6 + $0x8] sm:$0xff]
    %v2124 = vld [vmem:[%s6 + $0x10] sm:$0xff]
    %v2125 = vld [vmem:[%s6 + $0x18] sm:$0xff]
    %v2126 = vld [vmem:[%s6 + $0x20] sm:$0xff]
    %v2127 = vld [vmem:[%s6 + $0x28] sm:$0xff]
    %v2128 = vld [vmem:[%s6 + $0x30] sm:$0xff]
    %v2129 = vld [vmem:[%s6 + $0x38] sm:$0xff]
    %v2130 = vld [vmem:[%s7] sm:$0x1]
    %v2132 = vsel %vm83, %v2121, 0
    %2134 = vmatpush.msra.mxu0 0.0
    %2135 = vmatpush.msra.mxu0 0.0
    %2136 = vmatpush.msra.mxu0 0.0
    %2137 = vmatpush.msra.mxu0 0.0
    %2138 = vmatpush.msra.mxu0 0.0
    %2139 = vmatpush.msra.mxu0 0.0
    %2140 = vmatpush.msra.mxu0 0.0
    %2141 = vmatpush.msra.mxu0 0.0
    %2142 = vmatpush.msra.mxu0 %v2129
    %2143 = vmatpush.msra.mxu0 %v2128
    %2144 = vmatpush.msra.mxu0 %v2127
    %2145 = vmatpush.msra.mxu0 %v2126
    %2146 = vmatpush.msra.mxu0 %v2125
    %2147 = vmatpush.msra.mxu0 %v2124
    %2148 = vmatpush.msra.mxu0 %v2123
    %2149 = vmatpush.msra.mxu0 %v2122
    %2150 = vmatmul.f32.gmra.mxu0 %v2132
    %v2151 = vpop.f32.mrf.mxu0
    %v2152 = vadd.f32 %v2130, %v2151
    %2153 = vdwg.mxu0
    %v2154 = vmax.f32 %v2152, 0.0
    %v2155 = vsel %vm72, %v2154, %v1980
    %v2156 = vld [vmem:[%s8] sm:$0xff]
    %v2157 = vld [vmem:[%s8 + $0x8] sm:$0xff]
    %v2158 = vld [vmem:[%s8 + $0x10] sm:$0xff]
    %v2159 = vld [vmem:[%s8 + $0x18] sm:$0xff]
    %v2160 = vld [vmem:[%s8 + $0x20] sm:$0xff]
    %v2161 = vld [vmem:[%s8 + $0x28] sm:$0xff]
    %v2162 = vld [vmem:[%s8 + $0x30] sm:$0xff]
    %v2163 = vld [vmem:[%s8 + $0x38] sm:$0xff]
    %v2164 = vld [vmem:[%s8 + $0x40] sm:$0xff]
    %v2165 = vld [vmem:[%s8 + $0x48] sm:$0xff]
    %v2166 = vld [vmem:[%s8 + $0x50] sm:$0xff]
    %v2167 = vld [vmem:[%s8 + $0x58] sm:$0xff]
    %v2168 = vld [vmem:[%s8 + $0x60] sm:$0xff]
    %v2169 = vld [vmem:[%s8 + $0x68] sm:$0xff]
    %v2170 = vld [vmem:[%s8 + $0x70] sm:$0xff]
    %v2171 = vld [vmem:[%s8 + $0x78] sm:$0xff]
    %v2172 = vld [vmem:[%s9] sm:$0x3]
    %v2174 = vperm.slane %v2172, 0
    %v2175 = vperm.slane %v2172, 1
    %v2179 = vsel %vm83, %v2155, 0
    %2181 = vmatpush.msra.mxu0 0.0
    %2182 = vmatpush.msra.mxu0 0.0
    %2183 = vmatpush.msra.mxu0 0.0
    %2184 = vmatpush.msra.mxu0 0.0
    %2185 = vmatpush.msra.mxu0 0.0
    %2186 = vmatpush.msra.mxu0 0.0
    %2187 = vmatpush.msra.mxu0 0.0
    %2188 = vmatpush.msra.mxu0 0.0
    %2189 = vmatpush.msra.mxu0 %v2170
    %2190 = vmatpush.msra.mxu0 %v2168
    %2191 = vmatpush.msra.mxu0 %v2166
    %2192 = vmatpush.msra.mxu0 %v2164
    %2193 = vmatpush.msra.mxu0 %v2162
    %2194 = vmatpush.msra.mxu0 %v2160
    %2195 = vmatpush.msra.mxu0 %v2158
    %2196 = vmatpush.msra.mxu0 %v2156
    %2197 = vmatmul.f32.gmra.mxu0 %v2179
    %v2198 = vpop.f32.mrf.mxu0
    %v2199 = vadd.f32 %v2174, %v2198
    %2200 = vdwg.mxu0
    %2201 = vmatpush.msra.mxu0 0.0
    %2202 = vmatpush.msra.mxu0 0.0
    %2203 = vmatpush.msra.mxu0 0.0
    %2204 = vmatpush.msra.mxu0 0.0
    %2205 = vmatpush.msra.mxu0 0.0
    %2206 = vmatpush.msra.mxu0 0.0
    %2207 = vmatpush.msra.mxu0 0.0
    %2208 = vmatpush.msra.mxu0 0.0
    %2209 = vmatpush.msra.mxu0 %v2171
    %2210 = vmatpush.msra.mxu0 %v2169
    %2211 = vmatpush.msra.mxu0 %v2167
    %2212 = vmatpush.msra.mxu0 %v2165
    %2213 = vmatpush.msra.mxu0 %v2163
    %2214 = vmatpush.msra.mxu0 %v2161
    %2215 = vmatpush.msra.mxu0 %v2159
    %2216 = vmatpush.msra.mxu0 %v2157
    %2217 = vmatmul.f32.gmra.mxu0 %v2179
    %v2218 = vpop.f32.mrf.mxu0
    %v2219 = vadd.f32 %v2175, %v2218
    %2220 = vdwg.mxu0
    %v2221 = vadd.f32 %v2199, %v2219
    %v2222 = vxor.u32 %v2221, 2147483648
    %v2223 = vmul.f32 %v2222, 1.442695
    %v2224 = vpow.pop %v2223
    %v2225 = vadd.f32 %v2224, 1.0
    %v2226 = vrcp.pop %v2225
    %v2227 = vmul.f32 %v2225, %v2226
    %v2228 = vsub.f32 1.0, %v2227
    %v2229 = vmul.f32 %v2226, %v2228
    %v2230 = vadd.f32 %v2226, %v2229
    %vm2231 = vweird.f32 %v2225
    %vm2232 = vweird.f32 %v2226
    %vm2233 = vmor %vm2231, %vm2232
    %v2234 = vsel %vm2233, %v2226, %v2230
    %v2235 = vand.u32 2147483647, %v2225
    %vm2236 = vcmp.eq.f32.partialorder %v2235, 8.507059e+37
    %v2237 = vand.u32 %v2225, 2147483648
    %v2238 = vor.u32 1.1754944e-38, %v2237
    %v2239 = vsel %vm2236, %v2238, %v2234
    %v2240 = vmul.f32 1.0, %v2239
    %2242 = vrot.lane.b32.xlu0 %v2219, 64
    %v2243 = vpop.permute.xlu0 %2242
    %v2245 = vmul.f32 %v2240, %v2243
    %2247 = vrot.lane.b32.xlu0 %v2245, 64
    %v2248 = vpop.permute.xlu0 %2247
    %v2250 = vadd.f32 %v2199, %v2248
    %v2251 = vtanh.pop %v2250
    %v2252 = vsub.f32 1.0, %v2240
    %2254 = vrot.lane.b32.xlu0 %v2251, 96
    %v2255 = vpop.permute.xlu0 %2254
    %v2257 = vmul.f32 %v2252, %v2255
    %v2258 = vmul.f32 %v2240, %v1980
    %v2259 = vadd.f32 %v2257, %v2258
    %v2260 = vld [vmem:[%s10] sm:$0xff]
    %v2261 = vld [vmem:[%s10 + $0x8] sm:$0xff]
    %v2262 = vld [vmem:[%s10 + $0x10] sm:$0xff]
    %v2263 = vld [vmem:[%s10 + $0x18] sm:$0xff]
    %v2264 = vld [vmem:[%s11] sm:$0x1]
    %2266 = vrot.lane.b32.xlu0 %v2259, 96
    %v2267 = vpop.permute.xlu0 %2266
    %v2268 = vsel %vm72, %v2267, 0
    %2270 = vmatpush.msra.mxu0 0.0
    %2271 = vmatpush.msra.mxu0 0.0
    %2272 = vmatpush.msra.mxu0 0.0
    %2273 = vmatpush.msra.mxu0 0.0
    %2274 = vmatpush.msra.mxu0 0.0
    %2275 = vmatpush.msra.mxu0 0.0
    %2276 = vmatpush.msra.mxu0 0.0
    %2277 = vmatpush.msra.mxu0 0.0
    %2278 = vmatpush.msra.mxu0 0.0
    %2279 = vmatpush.msra.mxu0 0.0
    %2280 = vmatpush.msra.mxu0 0.0
    %2281 = vmatpush.msra.mxu0 0.0
    %2282 = vmatpush.msra.mxu0 %v2263
    %2283 = vmatpush.msra.mxu0 %v2262
    %2284 = vmatpush.msra.mxu0 %v2261
    %2285 = vmatpush.msra.mxu0 %v2260
    %2286 = vmatmul.f32.gmra.mxu0 %v2268
    %v2287 = vpop.f32.mrf.mxu0
    %v2288 = vadd.f32 %v2264, %v2287
    %2289 = vdwg.mxu0
    %v2290 = vsel %vm336, %v2288, -inf
    %2291 = vmax.xlane.f32.xlu0 %v2290
    %v2292 = vpop.xlane.xlu0 %2291
    %v2293 = vsub.f32 %v2288, %v2292
    %v2294 = vmul.f32 %v2293, 1.442695
    %v2295 = vpow.pop %v2294
    %v2296 = vsel %vm336, %v2295, 0.0
    %2297 = vadd.xlane.f32.xlu0 %v2296
    %v2298 = vpop.xlane.xlu0 %2297
    %v2299 = vlog2.pop %v2298
    %v2300 = vmul.f32 %v2299, 0.6931472
    %v2301 = vsub.f32 %v2293, %v2300
    %2302 = vst.msk [vmem:[#allocation5 + $0x7] sm:$0x1] %vm336, %v2301
    %vm2304 = vcmask 253952
    %2305 = vst.msk [vmem:[#allocation6] sm:$0x1] %vm2304, %v2267
    // Predicated region
    $region54: #{_attn_decoder_decode.1} parent=1 // pred_check
      _
    $region55: #{_attn_decoder_decode.1} parent=1 // pred_check_branch
      %2307 = sbr.rel (0) target = $region57
    $region56: #{_attn_decoder_decode.1} parent=1 // pred_region
      %2309 = vsyncadd [#allocation3], 0
      %s2311 = sshll.u32 [#allocation5], 4
      %s2312 = int_to_ptr.vmem [resolvable:$true] %s2311
      %s2313 = sshll.u32 %s12, 4
      %s2314 = int_to_ptr.hbm [resolvable:$true] %s2313
      %2316 = dma.vmem_to_hbm [thread:$0]  %s2312, 128, %s2314, [#allocation3]
    $region57: #{_attn_decoder_decode.1} parent=1 // pred_fallthru
      _
    // Predicated region
    $region58: #{_attn_decoder_decode.1} parent=1 // pred_check
      _
    $region59: #{_attn_decoder_decode.1} parent=1 // pred_check_branch
      %2318 = sbr.rel (0) target = $region61
    $region60: #{_attn_decoder_decode.1} parent=1 // pred_region
      %2320 = vsyncadd [#allocation7], 0
      %s2322 = sshll.u32 [#allocation6], 4
      %s2323 = int_to_ptr.vmem [resolvable:$true] %s2322
      %s2324 = sshll.u32 %s13, 4
      %s2325 = int_to_ptr.hbm [resolvable:$true] %s2324
      %2327 = dma.vmem_to_hbm [thread:$0]  %s2323, 16, %s2325, [#allocation7]
    $region61: #{_attn_decoder_decode.1} parent=1 // pred_fallthru
      _
    // Predicated region
    $region62: #{_attn_decoder_decode.1} parent=1 // pred_check
      _
    $region63: #{_attn_decoder_decode.1} parent=1 // pred_check_branch
      %2329 = sbr.rel (0) target = $region65
    $region64: #{_attn_decoder_decode.1} parent=1 // pred_region
      %2331 = vsyncadd [#allocation7], 0
      %s2333 = sshll.u32 [#allocation8], 4
      %s2334 = int_to_ptr.vmem [resolvable:$true] %s2333
      %s2335 = sshll.u32 %s14, 4
      %s2336 = int_to_ptr.hbm [resolvable:$true] %s2335
      %2338 = dma.vmem_to_hbm [thread:$0]  %s2334, 128, %s2336, [#allocation7]
    $region65: #{_attn_decoder_decode.1} parent=1 // pred_fallthru
      _
    // Predicated region
    $region66: #{_attn_decoder_decode.1} parent=1 // pred_check
      _
    $region67: #{_attn_decoder_decode.1} parent=1 // pred_check_branch
      %2340 = sbr.rel (0) target = $region69
    $region68: #{_attn_decoder_decode.1} parent=1 // pred_region
      %2342 = dma.done [#allocation3], 128
    $region69: #{_attn_decoder_decode.1} parent=1 // pred_fallthru
      _
    // Predicated region
    $region70: #{_attn_decoder_decode.1} parent=1 // pred_check
      _
    $region71: #{_attn_decoder_decode.1} parent=1 // pred_check_branch
      %2344 = sbr.rel (0) target = $region73
    $region72: #{_attn_decoder_decode.1} parent=1 // pred_region
      %2346 = dma.done [#allocation7], 16
    $region73: #{_attn_decoder_decode.1} parent=1 // pred_fallthru
      _
    // Predicated region
    $region74: #{_attn_decoder_decode.1} parent=1 // pred_check
      _
    $region75: #{_attn_decoder_decode.1} parent=1 // pred_check_branch
      %2348 = sbr.rel (0) target = $region77
    $region76: #{_attn_decoder_decode.1} parent=1 // pred_region
      %2350 = dma.done [#allocation7], 128
    $region77: #{_attn_decoder_decode.1} parent=1 // pred_fallthru
      _
    %2351 = vsyncpa [#allocation3], 1
    %2352 = vsyncpa [#allocation7], 1
    %2353 = vsyncpa [#allocation4], 1

</llo_original>
